<compile_context>
chip_gen: v5e
topology: v5e:2x2
jax: 0.10.0
libtpu: 0.0.40
codegen_flags: <defaults>
</compile_context>

<pallas_src>
import jax
import jax.numpy as jnp
from jax import lax
from jax.experimental import pallas as pl
from jax.experimental.pallas import tpu as pltpu

HIDDEN = 16
KERNEL_SIZES = (150, 100, 50, 10)
_LANE = 128
_WIN_GROUP = _LANE // HIDDEN          # 8 conv windows per 128-lane chunk

_VMEM = pl.BlockSpec(memory_space=pltpu.MemorySpace.VMEM)


# --------------------------- fused forward kernel ---------------------------
def _ts_encoder_kernel(x_ref,
                       w0_ref, b0_ref, w1_ref, b1_ref,
                       w2_ref, b2_ref, w3_ref, b3_ref,
                       lin_w_ref, lin_b_ref,
                       z_ref):
    """4 banded-conv branches (1 matmul each) + max-pool + head + L2-normalize."""
    x_bf = x_ref[...].astype(jnp.bfloat16)                 # (B, L), bf16 MXU input
    B = x_bf.shape[0]
    C = HIDDEN
    out_dim = z_ref.shape[1]

    y = jnp.zeros((B, out_dim), jnp.float32)               # head accumulator (vregs)
    conv_refs = ((w0_ref, b0_ref), (w1_ref, b1_ref),
                 (w2_ref, b2_ref), (w3_ref, b3_ref))
    for i, (w_ref, b_ref) in enumerate(conv_refs):
        # One lane-dense MXU matmul per branch: (B, L) @ (L, T_pad*C), f32 acc.
        conv = jnp.dot(x_bf, w_ref[...], preferred_element_type=jnp.float32)
        n_lanes = conv.shape[1]                            # T_pad * C, multiple of 128

        # Global max-pool over time, stage 1: running max over 128-lane-aligned
        # chunks (each chunk = 8 windows x 16 channels).  Padding windows in the
        # wrapper replicate the last valid window, so the max is unchanged.
        best = conv[:, 0:_LANE]
        for g in range(1, n_lanes // _LANE):
            best = jnp.maximum(best, conv[:, g * _LANE:(g + 1) * _LANE])
        # Stage 2: fold the 8 interleaved window groups down to the 16 channels.
        best = jnp.maximum(best[:, :64], best[:, 64:])
        best = jnp.maximum(best[:, :32], best[:, 32:])
        pooled = jnp.maximum(best[:, :16], best[:, 16:])   # (B, C)

        # Bias + ReLU commute with the time max (bias const over t, ReLU monotone).
        branch = jnp.maximum(pooled + b_ref[...], 0.0)     # (B, C), f32

        # Head accumulated in registers: feat @ W == sum_i branch_i @ W[i*C:(i+1)*C].
        y = y + jnp.dot(branch, lin_w_ref[i * C:(i + 1) * C, :],
                        preferred_element_type=jnp.float32)

    y = y + lin_b_ref[...]
    # F.normalize(dim=1): y / max(||y||, 1e-12) == y * rsqrt(max(||y||^2, 1e-24))
    ss = jnp.sum(y * y, axis=1, keepdims=True)
    z_ref[...] = y * lax.rsqrt(jnp.maximum(ss, 1e-24))


# ------------------------- banded (Toeplitz) weights ------------------------
def _banded_conv_weight(w, L):
    """Banded weight for one conv branch.

    w: (k, C) == torch Conv1d weight (C, 1, k) squeezed + transposed.
    Returns (L, T_pad*C), column layout t*C + c, with
      W[l, t*C + c] = w[l - t, c] for 0 <= l - t < k else 0,
    and T padded to a multiple of 8 by replicating window T-1 (max-invariant),
    so (B, L) @ W gives every valid conv window output, lane-dense.
    """
    k, C = w.shape
    T = L - k + 1
    T_pad = ((T + _WIN_GROUP - 1) // _WIN_GROUP) * _WIN_GROUP
    t = jnp.minimum(jnp.arange(T_pad), T - 1)              # replicate last window
    j = jnp.arange(L)[:, None] - t[None, :]                # (L, T_pad)
    valid = (j >= 0) & (j < k)
    band = jnp.where(valid[:, :, None], w[jnp.clip(j, 0, k - 1)], 0.0)
    return band.reshape(L, T_pad * C)


def prepare_encoder_params(params, ts_dim):
    """One-time prep (outside the hot path): bf16 banded conv weights + f32 head."""
    prepared = {"convs": [],
                "lin_w": params["lin_w"].astype(jnp.float32),
                "lin_b": params["lin_b"].astype(jnp.float32)}
    for w, b in params["convs"]:
        wb = _banded_conv_weight(w, ts_dim).astype(jnp.bfloat16)
        prepared["convs"].append((wb, b.astype(jnp.float32)))
    return prepared


# --------------------------------- wrapper ----------------------------------
@jax.jit
def ts_encoder_forward(prepared, x):
    B, _ = x.shape
    assert len(prepared["convs"]) == 4, "kernel is specialized for 4 conv branches"
    output_dim = prepared["lin_w"].shape[1]

    conv_args = []
    for wb, b in prepared["convs"]:
        conv_args.extend((wb, b))
    n_in = 1 + len(conv_args) + 2

    z = pl.pallas_call(
        _ts_encoder_kernel,
        out_shape=jax.ShapeDtypeStruct((B, output_dim), jnp.float32),
        in_specs=[_VMEM] * n_in,
        out_specs=_VMEM,
    )(x, *conv_args, prepared["lin_w"], prepared["lin_b"])

    # variational=False path: z and mean are both normalize(x_encoded).
    mean = z
    # Trivial outputs kept out of the kernel (constant fill / tiny stats).
    log_var = jnp.full((B, output_dim), -100.0, jnp.float32)
    x_mean = jnp.mean(x, axis=1, keepdims=True)
    x_std = jnp.std(x, axis=1, ddof=1, keepdims=True)      # torch.std: unbiased
    return z, mean, log_var, x_mean, x_std


# ------------------------------ parameter init ------------------------------
def init_params(key, ts_dim, output_dim, kernel_sizes, hidden):
    # conv weight stored as (k, hidden) == torch Conv1d weight (hidden, 1, k)
    # squeezed and transposed; bias as (1, hidden).
    params = {"convs": []}
    for i, k in enumerate(kernel_sizes):
        kw, kb = jax.random.split(jax.random.fold_in(key, i))
        w = jax.random.normal(kw, (k, hidden), jnp.float32) * (1.0 / jnp.sqrt(k))
        b = jax.random.normal(kb, (1, hidden), jnp.float32) * 0.01
        params["convs"].append((w, b))
    kw, kb = jax.random.split(jax.random.fold_in(key, 100))
    fin = len(kernel_sizes) * hidden
    params["lin_w"] = jax.random.normal(kw, (fin, output_dim), jnp.float32) * (
        1.0 / jnp.sqrt(fin)
    )
    params["lin_b"] = jax.random.normal(kb, (1, output_dim), jnp.float32) * 0.01
    return params


if __name__ == "__main__":
    B = 2
    TS_DIM = 160          # must be >= max kernel size (150)
    OUTPUT_DIM = 32

    key = jax.random.PRNGKey(0)
    kx, kp = jax.random.split(key)
    x = jax.random.normal(kx, (B, TS_DIM), jnp.float32)
    params = init_params(kp, TS_DIM, OUTPUT_DIM, KERNEL_SIZES, HIDDEN)
    prepared = prepare_encoder_params(params, TS_DIM)

    z, mean, log_var, x_mean, x_std = ts_encoder_forward(prepared, x)
    jax.block_until_ready((z, mean, log_var, x_mean, x_std))

    assert z.shape == (B, OUTPUT_DIM)
    assert mean.shape == (B, OUTPUT_DIM)
    assert log_var.shape == (B, OUTPUT_DIM)
    assert x_mean.shape == (B, 1) and x_std.shape == (B, 1)
    assert bool(jnp.all(jnp.isfinite(z)))
    assert bool(jnp.all(jnp.isfinite(x_std)))
    print("KERNEL_OK")
</pallas_src>

<mosaic_0001>
module attributes {stable_mosaic.version = 11 : i64} {
  func.func @_ts_encoder_kernel(%arg0: memref<2x160xf32, #tpu.memory_space<vmem>>, %arg1: memref<160x256xbf16, #tpu.memory_space<vmem>>, %arg2: memref<1x16xf32, #tpu.memory_space<vmem>>, %arg3: memref<160x1024xbf16, #tpu.memory_space<vmem>>, %arg4: memref<1x16xf32, #tpu.memory_space<vmem>>, %arg5: memref<160x1792xbf16, #tpu.memory_space<vmem>>, %arg6: memref<1x16xf32, #tpu.memory_space<vmem>>, %arg7: memref<160x2432xbf16, #tpu.memory_space<vmem>>, %arg8: memref<1x16xf32, #tpu.memory_space<vmem>>, %arg9: memref<64x32xf32, #tpu.memory_space<vmem>>, %arg10: memref<1x32xf32, #tpu.memory_space<vmem>>, %arg11: memref<2x32xf32, #tpu.memory_space<vmem>>) attributes {dimension_semantics = [], scalar_prefetch = 0 : i64, scratch_operands = 0 : i64, tpu.core_type = #tpu.core_type<tc>} {
    %c0 = arith.constant 0 : index
    %c0_0 = arith.constant 0 : index
    %0 = vector.load %arg0[%c0, %c0_0] : memref<2x160xf32, #tpu.memory_space<vmem>>, vector<2x160xf32>
    %1 = arith.truncf %0 : vector<2x160xf32> to vector<2x160xbf16>
    %cst = arith.constant 0.000000e+00 : f32
    %2 = vector.broadcast %cst : f32 to vector<2x32xf32>
    %c0_1 = arith.constant 0 : index
    %c0_2 = arith.constant 0 : index
    %3 = vector.load %arg1[%c0_1, %c0_2] : memref<160x256xbf16, #tpu.memory_space<vmem>>, vector<160x256xbf16>
    %cst_3 = arith.constant dense<0.000000e+00> : vector<2x256xf32>
    %4 = tpu.matmul %1, %3, %cst_3 {dimension_numbers = #tpu.dot_dimension_numbers<[1], [0], [0], [1], [0, 0, 1, 1], [], []>} : vector<2x160xbf16>, vector<160x256xbf16>, vector<2x256xf32> -> vector<2x256xf32>
    %5 = vector.extract_strided_slice %4 {offsets = [0, 0], sizes = [2, 128], strides = [1, 1]} : vector<2x256xf32> to vector<2x128xf32>
    %6 = vector.extract_strided_slice %4 {offsets = [0, 128], sizes = [2, 128], strides = [1, 1]} : vector<2x256xf32> to vector<2x128xf32>
    %7 = arith.maximumf %5, %6 : vector<2x128xf32>
    %8 = vector.extract_strided_slice %7 {offsets = [0, 0], sizes = [2, 64], strides = [1, 1]} : vector<2x128xf32> to vector<2x64xf32>
    %9 = vector.extract_strided_slice %7 {offsets = [0, 64], sizes = [2, 64], strides = [1, 1]} : vector<2x128xf32> to vector<2x64xf32>
    %10 = arith.maximumf %8, %9 : vector<2x64xf32>
    %11 = vector.extract_strided_slice %10 {offsets = [0, 0], sizes = [2, 32], strides = [1, 1]} : vector<2x64xf32> to vector<2x32xf32>
    %12 = vector.extract_strided_slice %10 {offsets = [0, 32], sizes = [2, 32], strides = [1, 1]} : vector<2x64xf32> to vector<2x32xf32>
    %13 = arith.maximumf %11, %12 : vector<2x32xf32>
    %14 = vector.extract_strided_slice %13 {offsets = [0, 0], sizes = [2, 16], strides = [1, 1]} : vector<2x32xf32> to vector<2x16xf32>
    %15 = vector.extract_strided_slice %13 {offsets = [0, 16], sizes = [2, 16], strides = [1, 1]} : vector<2x32xf32> to vector<2x16xf32>
    %16 = arith.maximumf %14, %15 : vector<2x16xf32>
    %c0_4 = arith.constant 0 : index
    %c0_5 = arith.constant 0 : index
    %17 = vector.load %arg2[%c0_4, %c0_5] : memref<1x16xf32, #tpu.memory_space<vmem>>, vector<1x16xf32>
    %18 = vector.broadcast %17 : vector<1x16xf32> to vector<2x16xf32>
    %19 = arith.addf %16, %18 : vector<2x16xf32>
    %cst_6 = arith.constant 0.000000e+00 : f32
    %20 = vector.broadcast %cst_6 : f32 to vector<2x16xf32>
    %21 = arith.maximumf %19, %20 : vector<2x16xf32>
    %c0_7 = arith.constant 0 : index
    %c0_8 = arith.constant 0 : index
    %22 = vector.load %arg9[%c0_7, %c0_8] : memref<64x32xf32, #tpu.memory_space<vmem>>, vector<16x32xf32>
    %cst_9 = arith.constant dense<0.000000e+00> : vector<2x32xf32>
    %23 = tpu.matmul %21, %22, %cst_9 {dimension_numbers = #tpu.dot_dimension_numbers<[1], [0], [0], [1], [0, 0, 1, 1], [], []>} : vector<2x16xf32>, vector<16x32xf32>, vector<2x32xf32> -> vector<2x32xf32>
    %24 = arith.addf %2, %23 : vector<2x32xf32>
    %c0_10 = arith.constant 0 : index
    %c0_11 = arith.constant 0 : index
    %25 = vector.load %arg3[%c0_10, %c0_11] : memref<160x1024xbf16, #tpu.memory_space<vmem>>, vector<160x1024xbf16>
    %cst_12 = arith.constant dense<0.000000e+00> : vector<2x1024xf32>
    %26 = tpu.matmul %1, %25, %cst_12 {dimension_numbers = #tpu.dot_dimension_numbers<[1], [0], [0], [1], [0, 0, 1, 1], [], []>} : vector<2x160xbf16>, vector<160x1024xbf16>, vector<2x1024xf32> -> vector<2x1024xf32>
    %27 = vector.extract_strided_slice %26 {offsets = [0, 0], sizes = [2, 128], strides = [1, 1]} : vector<2x1024xf32> to vector<2x128xf32>
    %28 = vector.extract_strided_slice %26 {offsets = [0, 128], sizes = [2, 128], strides = [1, 1]} : vector<2x1024xf32> to vector<2x128xf32>
    %29 = arith.maximumf %27, %28 : vector<2x128xf32>
    %30 = vector.extract_strided_slice %26 {offsets = [0, 256], sizes = [2, 128], strides = [1, 1]} : vector<2x1024xf32> to vector<2x128xf32>
    %31 = arith.maximumf %29, %30 : vector<2x128xf32>
    %32 = vector.extract_strided_slice %26 {offsets = [0, 384], sizes = [2, 128], strides = [1, 1]} : vector<2x1024xf32> to vector<2x128xf32>
    %33 = arith.maximumf %31, %32 : vector<2x128xf32>
    %34 = vector.extract_strided_slice %26 {offsets = [0, 512], sizes = [2, 128], strides = [1, 1]} : vector<2x1024xf32> to vector<2x128xf32>
    %35 = arith.maximumf %33, %34 : vector<2x128xf32>
    %36 = vector.extract_strided_slice %26 {offsets = [0, 640], sizes = [2, 128], strides = [1, 1]} : vector<2x1024xf32> to vector<2x128xf32>
    %37 = arith.maximumf %35, %36 : vector<2x128xf32>
    %38 = vector.extract_strided_slice %26 {offsets = [0, 768], sizes = [2, 128], strides = [1, 1]} : vector<2x1024xf32> to vector<2x128xf32>
    %39 = arith.maximumf %37, %38 : vector<2x128xf32>
    %40 = vector.extract_strided_slice %26 {offsets = [0, 896], sizes = [2, 128], strides = [1, 1]} : vector<2x1024xf32> to vector<2x128xf32>
    %41 = arith.maximumf %39, %40 : vector<2x128xf32>
    %42 = vector.extract_strided_slice %41 {offsets = [0, 0], sizes = [2, 64], strides = [1, 1]} : vector<2x128xf32> to vector<2x64xf32>
    %43 = vector.extract_strided_slice %41 {offsets = [0, 64], sizes = [2, 64], strides = [1, 1]} : vector<2x128xf32> to vector<2x64xf32>
    %44 = arith.maximumf %42, %43 : vector<2x64xf32>
    %45 = vector.extract_strided_slice %44 {offsets = [0, 0], sizes = [2, 32], strides = [1, 1]} : vector<2x64xf32> to vector<2x32xf32>
    %46 = vector.extract_strided_slice %44 {offsets = [0, 32], sizes = [2, 32], strides = [1, 1]} : vector<2x64xf32> to vector<2x32xf32>
    %47 = arith.maximumf %45, %46 : vector<2x32xf32>
    %48 = vector.extract_strided_slice %47 {offsets = [0, 0], sizes = [2, 16], strides = [1, 1]} : vector<2x32xf32> to vector<2x16xf32>
    %49 = vector.extract_strided_slice %47 {offsets = [0, 16], sizes = [2, 16], strides = [1, 1]} : vector<2x32xf32> to vector<2x16xf32>
    %50 = arith.maximumf %48, %49 : vector<2x16xf32>
    %c0_13 = arith.constant 0 : index
    %c0_14 = arith.constant 0 : index
    %51 = vector.load %arg4[%c0_13, %c0_14] : memref<1x16xf32, #tpu.memory_space<vmem>>, vector<1x16xf32>
    %52 = vector.broadcast %51 : vector<1x16xf32> to vector<2x16xf32>
    %53 = arith.addf %50, %52 : vector<2x16xf32>
    %cst_15 = arith.constant 0.000000e+00 : f32
    %54 = vector.broadcast %cst_15 : f32 to vector<2x16xf32>
    %55 = arith.maximumf %53, %54 : vector<2x16xf32>
    %c16 = arith.constant 16 : index
    %c0_16 = arith.constant 0 : index
    %56 = vector.load %arg9[%c16, %c0_16] : memref<64x32xf32, #tpu.memory_space<vmem>>, vector<16x32xf32>
    %cst_17 = arith.constant dense<0.000000e+00> : vector<2x32xf32>
    %57 = tpu.matmul %55, %56, %cst_17 {dimension_numbers = #tpu.dot_dimension_numbers<[1], [0], [0], [1], [0, 0, 1, 1], [], []>} : vector<2x16xf32>, vector<16x32xf32>, vector<2x32xf32> -> vector<2x32xf32>
    %58 = arith.addf %24, %57 : vector<2x32xf32>
    %c0_18 = arith.constant 0 : index
    %c0_19 = arith.constant 0 : index
    %59 = vector.load %arg5[%c0_18, %c0_19] : memref<160x1792xbf16, #tpu.memory_space<vmem>>, vector<160x1792xbf16>
    %cst_20 = arith.constant dense<0.000000e+00> : vector<2x1792xf32>
    %60 = tpu.matmul %1, %59, %cst_20 {dimension_numbers = #tpu.dot_dimension_numbers<[1], [0], [0], [1], [0, 0, 1, 1], [], []>} : vector<2x160xbf16>, vector<160x1792xbf16>, vector<2x1792xf32> -> vector<2x1792xf32>
    %61 = vector.extract_strided_slice %60 {offsets = [0, 0], sizes = [2, 128], strides = [1, 1]} : vector<2x1792xf32> to vector<2x128xf32>
    %62 = vector.extract_strided_slice %60 {offsets = [0, 128], sizes = [2, 128], strides = [1, 1]} : vector<2x1792xf32> to vector<2x128xf32>
    %63 = arith.maximumf %61, %62 : vector<2x128xf32>
    %64 = vector.extract_strided_slice %60 {offsets = [0, 256], sizes = [2, 128], strides = [1, 1]} : vector<2x1792xf32> to vector<2x128xf32>
    %65 = arith.maximumf %63, %64 : vector<2x128xf32>
    %66 = vector.extract_strided_slice %60 {offsets = [0, 384], sizes = [2, 128], strides = [1, 1]} : vector<2x1792xf32> to vector<2x128xf32>
    %67 = arith.maximumf %65, %66 : vector<2x128xf32>
    %68 = vector.extract_strided_slice %60 {offsets = [0, 512], sizes = [2, 128], strides = [1, 1]} : vector<2x1792xf32> to vector<2x128xf32>
    %69 = arith.maximumf %67, %68 : vector<2x128xf32>
    %70 = vector.extract_strided_slice %60 {offsets = [0, 640], sizes = [2, 128], strides = [1, 1]} : vector<2x1792xf32> to vector<2x128xf32>
    %71 = arith.maximumf %69, %70 : vector<2x128xf32>
    %72 = vector.extract_strided_slice %60 {offsets = [0, 768], sizes = [2, 128], strides = [1, 1]} : vector<2x1792xf32> to vector<2x128xf32>
    %73 = arith.maximumf %71, %72 : vector<2x128xf32>
    %74 = vector.extract_strided_slice %60 {offsets = [0, 896], sizes = [2, 128], strides = [1, 1]} : vector<2x1792xf32> to vector<2x128xf32>
    %75 = arith.maximumf %73, %74 : vector<2x128xf32>
    %76 = vector.extract_strided_slice %60 {offsets = [0, 1024], sizes = [2, 128], strides = [1, 1]} : vector<2x1792xf32> to vector<2x128xf32>
    %77 = arith.maximumf %75, %76 : vector<2x128xf32>
    %78 = vector.extract_strided_slice %60 {offsets = [0, 1152], sizes = [2, 128], strides = [1, 1]} : vector<2x1792xf32> to vector<2x128xf32>
    %79 = arith.maximumf %77, %78 : vector<2x128xf32>
    %80 = vector.extract_strided_slice %60 {offsets = [0, 1280], sizes = [2, 128], strides = [1, 1]} : vector<2x1792xf32> to vector<2x128xf32>
    %81 = arith.maximumf %79, %80 : vector<2x128xf32>
    %82 = vector.extract_strided_slice %60 {offsets = [0, 1408], sizes = [2, 128], strides = [1, 1]} : vector<2x1792xf32> to vector<2x128xf32>
    %83 = arith.maximumf %81, %82 : vector<2x128xf32>
    %84 = vector.extract_strided_slice %60 {offsets = [0, 1536], sizes = [2, 128], strides = [1, 1]} : vector<2x1792xf32> to vector<2x128xf32>
    %85 = arith.maximumf %83, %84 : vector<2x128xf32>
    %86 = vector.extract_strided_slice %60 {offsets = [0, 1664], sizes = [2, 128], strides = [1, 1]} : vector<2x1792xf32> to vector<2x128xf32>
    %87 = arith.maximumf %85, %86 : vector<2x128xf32>
    %88 = vector.extract_strided_slice %87 {offsets = [0, 0], sizes = [2, 64], strides = [1, 1]} : vector<2x128xf32> to vector<2x64xf32>
    %89 = vector.extract_strided_slice %87 {offsets = [0, 64], sizes = [2, 64], strides = [1, 1]} : vector<2x128xf32> to vector<2x64xf32>
    %90 = arith.maximumf %88, %89 : vector<2x64xf32>
    %91 = vector.extract_strided_slice %90 {offsets = [0, 0], sizes = [2, 32], strides = [1, 1]} : vector<2x64xf32> to vector<2x32xf32>
    %92 = vector.extract_strided_slice %90 {offsets = [0, 32], sizes = [2, 32], strides = [1, 1]} : vector<2x64xf32> to vector<2x32xf32>
    %93 = arith.maximumf %91, %92 : vector<2x32xf32>
    %94 = vector.extract_strided_slice %93 {offsets = [0, 0], sizes = [2, 16], strides = [1, 1]} : vector<2x32xf32> to vector<2x16xf32>
    %95 = vector.extract_strided_slice %93 {offsets = [0, 16], sizes = [2, 16], strides = [1, 1]} : vector<2x32xf32> to vector<2x16xf32>
    %96 = arith.maximumf %94, %95 : vector<2x16xf32>
    %c0_21 = arith.constant 0 : index
    %c0_22 = arith.constant 0 : index
    %97 = vector.load %arg6[%c0_21, %c0_22] : memref<1x16xf32, #tpu.memory_space<vmem>>, vector<1x16xf32>
    %98 = vector.broadcast %97 : vector<1x16xf32> to vector<2x16xf32>
    %99 = arith.addf %96, %98 : vector<2x16xf32>
    %cst_23 = arith.constant 0.000000e+00 : f32
    %100 = vector.broadcast %cst_23 : f32 to vector<2x16xf32>
    %101 = arith.maximumf %99, %100 : vector<2x16xf32>
    %c32 = arith.constant 32 : index
    %c0_24 = arith.constant 0 : index
    %102 = vector.load %arg9[%c32, %c0_24] : memref<64x32xf32, #tpu.memory_space<vmem>>, vector<16x32xf32>
    %cst_25 = arith.constant dense<0.000000e+00> : vector<2x32xf32>
    %103 = tpu.matmul %101, %102, %cst_25 {dimension_numbers = #tpu.dot_dimension_numbers<[1], [0], [0], [1], [0, 0, 1, 1], [], []>} : vector<2x16xf32>, vector<16x32xf32>, vector<2x32xf32> -> vector<2x32xf32>
    %104 = arith.addf %58, %103 : vector<2x32xf32>
    %c0_26 = arith.constant 0 : index
    %c0_27 = arith.constant 0 : index
    %105 = vector.load %arg7[%c0_26, %c0_27] : memref<160x2432xbf16, #tpu.memory_space<vmem>>, vector<160x2432xbf16>
    %cst_28 = arith.constant dense<0.000000e+00> : vector<2x2432xf32>
    %106 = tpu.matmul %1, %105, %cst_28 {dimension_numbers = #tpu.dot_dimension_numbers<[1], [0], [0], [1], [0, 0, 1, 1], [], []>} : vector<2x160xbf16>, vector<160x2432xbf16>, vector<2x2432xf32> -> vector<2x2432xf32>
    %107 = vector.extract_strided_slice %106 {offsets = [0, 0], sizes = [2, 128], strides = [1, 1]} : vector<2x2432xf32> to vector<2x128xf32>
    %108 = vector.extract_strided_slice %106 {offsets = [0, 128], sizes = [2, 128], strides = [1, 1]} : vector<2x2432xf32> to vector<2x128xf32>
    %109 = arith.maximumf %107, %108 : vector<2x128xf32>
    %110 = vector.extract_strided_slice %106 {offsets = [0, 256], sizes = [2, 128], strides = [1, 1]} : vector<2x2432xf32> to vector<2x128xf32>
    %111 = arith.maximumf %109, %110 : vector<2x128xf32>
    %112 = vector.extract_strided_slice %106 {offsets = [0, 384], sizes = [2, 128], strides = [1, 1]} : vector<2x2432xf32> to vector<2x128xf32>
    %113 = arith.maximumf %111, %112 : vector<2x128xf32>
    %114 = vector.extract_strided_slice %106 {offsets = [0, 512], sizes = [2, 128], strides = [1, 1]} : vector<2x2432xf32> to vector<2x128xf32>
    %115 = arith.maximumf %113, %114 : vector<2x128xf32>
    %116 = vector.extract_strided_slice %106 {offsets = [0, 640], sizes = [2, 128], strides = [1, 1]} : vector<2x2432xf32> to vector<2x128xf32>
    %117 = arith.maximumf %115, %116 : vector<2x128xf32>
    %118 = vector.extract_strided_slice %106 {offsets = [0, 768], sizes = [2, 128], strides = [1, 1]} : vector<2x2432xf32> to vector<2x128xf32>
    %119 = arith.maximumf %117, %118 : vector<2x128xf32>
    %120 = vector.extract_strided_slice %106 {offsets = [0, 896], sizes = [2, 128], strides = [1, 1]} : vector<2x2432xf32> to vector<2x128xf32>
    %121 = arith.maximumf %119, %120 : vector<2x128xf32>
    %122 = vector.extract_strided_slice %106 {offsets = [0, 1024], sizes = [2, 128], strides = [1, 1]} : vector<2x2432xf32> to vector<2x128xf32>
    %123 = arith.maximumf %121, %122 : vector<2x128xf32>
    %124 = vector.extract_strided_slice %106 {offsets = [0, 1152], sizes = [2, 128], strides = [1, 1]} : vector<2x2432xf32> to vector<2x128xf32>
    %125 = arith.maximumf %123, %124 : vector<2x128xf32>
    %126 = vector.extract_strided_slice %106 {offsets = [0, 1280], sizes = [2, 128], strides = [1, 1]} : vector<2x2432xf32> to vector<2x128xf32>
    %127 = arith.maximumf %125, %126 : vector<2x128xf32>
    %128 = vector.extract_strided_slice %106 {offsets = [0, 1408], sizes = [2, 128], strides = [1, 1]} : vector<2x2432xf32> to vector<2x128xf32>
    %129 = arith.maximumf %127, %128 : vector<2x128xf32>
    %130 = vector.extract_strided_slice %106 {offsets = [0, 1536], sizes = [2, 128], strides = [1, 1]} : vector<2x2432xf32> to vector<2x128xf32>
    %131 = arith.maximumf %129, %130 : vector<2x128xf32>
    %132 = vector.extract_strided_slice %106 {offsets = [0, 1664], sizes = [2, 128], strides = [1, 1]} : vector<2x2432xf32> to vector<2x128xf32>
    %133 = arith.maximumf %131, %132 : vector<2x128xf32>
    %134 = vector.extract_strided_slice %106 {offsets = [0, 1792], sizes = [2, 128], strides = [1, 1]} : vector<2x2432xf32> to vector<2x128xf32>
    %135 = arith.maximumf %133, %134 : vector<2x128xf32>
    %136 = vector.extract_strided_slice %106 {offsets = [0, 1920], sizes = [2, 128], strides = [1, 1]} : vector<2x2432xf32> to vector<2x128xf32>
    %137 = arith.maximumf %135, %136 : vector<2x128xf32>
    %138 = vector.extract_strided_slice %106 {offsets = [0, 2048], sizes = [2, 128], strides = [1, 1]} : vector<2x2432xf32> to vector<2x128xf32>
    %139 = arith.maximumf %137, %138 : vector<2x128xf32>
    %140 = vector.extract_strided_slice %106 {offsets = [0, 2176], sizes = [2, 128], strides = [1, 1]} : vector<2x2432xf32> to vector<2x128xf32>
    %141 = arith.maximumf %139, %140 : vector<2x128xf32>
    %142 = vector.extract_strided_slice %106 {offsets = [0, 2304], sizes = [2, 128], strides = [1, 1]} : vector<2x2432xf32> to vector<2x128xf32>
    %143 = arith.maximumf %141, %142 : vector<2x128xf32>
    %144 = vector.extract_strided_slice %143 {offsets = [0, 0], sizes = [2, 64], strides = [1, 1]} : vector<2x128xf32> to vector<2x64xf32>
    %145 = vector.extract_strided_slice %143 {offsets = [0, 64], sizes = [2, 64], strides = [1, 1]} : vector<2x128xf32> to vector<2x64xf32>
    %146 = arith.maximumf %144, %145 : vector<2x64xf32>
    %147 = vector.extract_strided_slice %146 {offsets = [0, 0], sizes = [2, 32], strides = [1, 1]} : vector<2x64xf32> to vector<2x32xf32>
    %148 = vector.extract_strided_slice %146 {offsets = [0, 32], sizes = [2, 32], strides = [1, 1]} : vector<2x64xf32> to vector<2x32xf32>
    %149 = arith.maximumf %147, %148 : vector<2x32xf32>
    %150 = vector.extract_strided_slice %149 {offsets = [0, 0], sizes = [2, 16], strides = [1, 1]} : vector<2x32xf32> to vector<2x16xf32>
    %151 = vector.extract_strided_slice %149 {offsets = [0, 16], sizes = [2, 16], strides = [1, 1]} : vector<2x32xf32> to vector<2x16xf32>
    %152 = arith.maximumf %150, %151 : vector<2x16xf32>
    %c0_29 = arith.constant 0 : index
    %c0_30 = arith.constant 0 : index
    %153 = vector.load %arg8[%c0_29, %c0_30] : memref<1x16xf32, #tpu.memory_space<vmem>>, vector<1x16xf32>
    %154 = vector.broadcast %153 : vector<1x16xf32> to vector<2x16xf32>
    %155 = arith.addf %152, %154 : vector<2x16xf32>
    %cst_31 = arith.constant 0.000000e+00 : f32
    %156 = vector.broadcast %cst_31 : f32 to vector<2x16xf32>
    %157 = arith.maximumf %155, %156 : vector<2x16xf32>
    %c48 = arith.constant 48 : index
    %c0_32 = arith.constant 0 : index
    %158 = vector.load %arg9[%c48, %c0_32] : memref<64x32xf32, #tpu.memory_space<vmem>>, vector<16x32xf32>
    %cst_33 = arith.constant dense<0.000000e+00> : vector<2x32xf32>
    %159 = tpu.matmul %157, %158, %cst_33 {dimension_numbers = #tpu.dot_dimension_numbers<[1], [0], [0], [1], [0, 0, 1, 1], [], []>} : vector<2x16xf32>, vector<16x32xf32>, vector<2x32xf32> -> vector<2x32xf32>
    %160 = arith.addf %104, %159 : vector<2x32xf32>
    %c0_34 = arith.constant 0 : index
    %c0_35 = arith.constant 0 : index
    %161 = vector.load %arg10[%c0_34, %c0_35] : memref<1x32xf32, #tpu.memory_space<vmem>>, vector<1x32xf32>
    %162 = vector.broadcast %161 : vector<1x32xf32> to vector<2x32xf32>
    %163 = arith.addf %160, %162 : vector<2x32xf32>
    %164 = arith.mulf %163, %163 : vector<2x32xf32>
    %cst_36 = arith.constant dense<0.000000e+00> : vector<2xf32>
    %165 = vector.multi_reduction <add>, %164, %cst_36 [1] : vector<2x32xf32> to vector<2xf32>
    %166 = vector.shape_cast %165 : vector<2xf32> to vector<2x1xf32>
    %cst_37 = arith.constant 1.000000e-24 : f32
    %167 = vector.broadcast %cst_37 : f32 to vector<2x1xf32>
    %168 = arith.maximumf %166, %167 : vector<2x1xf32>
    %169 = math.rsqrt %168 : vector<2x1xf32>
    %170 = vector.broadcast %169 : vector<2x1xf32> to vector<2x32xf32>
    %171 = arith.mulf %163, %170 : vector<2x32xf32>
    %c0_38 = arith.constant 0 : index
    %c0_39 = arith.constant 0 : index
    %172 = vector.load %arg11[%c0_38, %c0_39] : memref<2x32xf32, #tpu.memory_space<vmem>>, vector<2x32xf32>
    tpu.vector_store %arg11[%c0_38, %c0_39], %171 {strides = array<i32>} : memref<2x32xf32, #tpu.memory_space<vmem>>, vector<2x32xf32>,
    return
  }
}

</mosaic_0001>

<llo_original>
// kernel: ts_encoder_forward.1
$region0: #{ts_encoder_forward.1}
  #allocation0 [shape = 'u32[]', space=smem, size = 0x4, offset = 0x4, fixed_abs, tag = 'smem constant byte address 0x4 - core index']
  #allocation1 [shape = 'u32[72,128]{1,0:T(1,128)}', space=vmem, size = 0x9000, scoped, tag = 'internal scratch']
  %s0 = inlined_call_operand.vmem [shape: f32[2,160], index: 0, kind: input, shape index: {}]
  %s1 = inlined_call_operand.hbm [shape: bf16[160,256], index: 1, kind: input, shape index: {}]
  %s2 = inlined_call_operand.vmem [shape: f32[1,16], index: 2, kind: input, shape index: {}]
  %s3 = inlined_call_operand.hbm [shape: bf16[160,1024], index: 3, kind: input, shape index: {}]
  %s4 = inlined_call_operand.vmem [shape: f32[1,16], index: 4, kind: input, shape index: {}]
  %s5 = inlined_call_operand.hbm [shape: bf16[160,1792], index: 5, kind: input, shape index: {}]
  %s6 = inlined_call_operand.vmem [shape: f32[1,16], index: 6, kind: input, shape index: {}]
  %s7 = inlined_call_operand.hbm [shape: bf16[160,2432], index: 7, kind: input, shape index: {}]
  %s8 = inlined_call_operand.vmem [shape: f32[1,16], index: 8, kind: input, shape index: {}]
  %s9 = inlined_call_operand.vmem [shape: f32[64,32], index: 9, kind: input, shape index: {}]
  %s10 = inlined_call_operand.vmem [shape: f32[1,32], index: 10, kind: input, shape index: {}]
  %s11 = inlined_call_operand.vmem [shape: f32[2,32], index: 11, kind: output, shape index: {}]
  %s12 = sld [smem:[#allocation0]]
  $region70: #{ts_encoder_forward.1} parent=0
    _
  %s14 = ssub.s32 1, %s12
  %s15 = scalar_select 0, %s14, %s12
  $region1: #{ts_encoder_forward.1} parent=0
    #allocation2 [shape = 'u8[81920]{0}', space=vmem, size = 0x14000, scoped, tag = 'input window, operand 1, single buffered']
    #allocation3 [shape = 's32[1]{0}', space=sflag, size = 0x4, scoped, tag = 'scoped memory for ts_encoder_forward.1']
    #allocation4 [shape = 'u8[327680]{0}', space=vmem, size = 0x50000, scoped, tag = 'input window, operand 3, single buffered']
    #allocation5 [shape = 's32[1]{0}', space=sflag, size = 0x4, scoped, tag = 'scoped memory for ts_encoder_forward.1']
    #allocation6 [shape = 'u8[573440]{0}', space=vmem, size = 0x8c000, scoped, tag = 'input window, operand 5, single buffered']
    #allocation7 [shape = 'u8[778240]{0}', space=vmem, size = 0xbe000, scoped, tag = 'input window, operand 7, single buffered']
    #allocation8 [shape = 's32[1]{0}', space=sflag, size = 0x4, scoped, tag = 'scoped memory for ts_encoder_forward.1']
    %16 = vsyncpa [#allocation3], 0
    %17 = vsyncpa [#allocation5], 0
    %18 = vsyncpa [#allocation8], 0
    // Predicated region
    $region2: #{ts_encoder_forward.1} parent=1 // pred_check
      _
    $region3: #{ts_encoder_forward.1} parent=1 // pred_check_branch
      %20 = sbr.rel (0) target = $region5
    $region4: #{ts_encoder_forward.1} parent=1 // pred_region
      _
    $region5: #{ts_encoder_forward.1} parent=1 // pred_fallthru
      _
    // Predicated region
    $region6: #{ts_encoder_forward.1} parent=1 // pred_check
      _
    $region7: #{ts_encoder_forward.1} parent=1 // pred_check_branch
      %22 = sbr.rel (0) target = $region9
    $region8: #{ts_encoder_forward.1} parent=1 // pred_region
      %24 = vsyncadd [#allocation3], 0
      %s25 = sshll.u32 %s1, 4
      %s26 = int_to_ptr.hbm [resolvable:$true] %s25
      %s27 = sshll.u32 [#allocation2], 4
      %s28 = int_to_ptr.vmem [resolvable:$true] %s27
      %33 = dma.hbm_to_vmem [thread:$0]  %s26, 2560, %s28, [#allocation3], 128, 128, 8
    $region9: #{ts_encoder_forward.1} parent=1 // pred_fallthru
      _
    // Predicated region
    $region10: #{ts_encoder_forward.1} parent=1 // pred_check
      _
    $region11: #{ts_encoder_forward.1} parent=1 // pred_check_branch
      %35 = sbr.rel (0) target = $region13
    $region12: #{ts_encoder_forward.1} parent=1 // pred_region
      _
    $region13: #{ts_encoder_forward.1} parent=1 // pred_fallthru
      _
    // Predicated region
    $region14: #{ts_encoder_forward.1} parent=1 // pred_check
      _
    $region15: #{ts_encoder_forward.1} parent=1 // pred_check_branch
      %37 = sbr.rel (0) target = $region17
    $region16: #{ts_encoder_forward.1} parent=1 // pred_region
      %39 = vsyncadd [#allocation5], 0
      %s40 = sshll.u32 %s3, 4
      %s41 = int_to_ptr.hbm [resolvable:$true] %s40
      %s42 = sshll.u32 [#allocation4], 4
      %s43 = int_to_ptr.vmem [resolvable:$true] %s42
      %48 = dma.hbm_to_vmem [thread:$0]  %s41, 10240, %s43, [#allocation5], 512, 512, 32
    $region17: #{ts_encoder_forward.1} parent=1 // pred_fallthru
      _
    // Predicated region
    $region18: #{ts_encoder_forward.1} parent=1 // pred_check
      _
    $region19: #{ts_encoder_forward.1} parent=1 // pred_check_branch
      %50 = sbr.rel (0) target = $region21
    $region20: #{ts_encoder_forward.1} parent=1 // pred_region
      _
    $region21: #{ts_encoder_forward.1} parent=1 // pred_fallthru
      _
    // Predicated region
    $region22: #{ts_encoder_forward.1} parent=1 // pred_check
      _
    $region23: #{ts_encoder_forward.1} parent=1 // pred_check_branch
      %52 = sbr.rel (0) target = $region25
    $region24: #{ts_encoder_forward.1} parent=1 // pred_region
      %54 = vsyncadd [#allocation5], 0
      %s55 = sshll.u32 %s5, 4
      %s56 = int_to_ptr.hbm [resolvable:$true] %s55
      %s57 = sshll.u32 [#allocation6], 4
      %s58 = int_to_ptr.vmem [resolvable:$true] %s57
      %63 = dma.hbm_to_vmem [thread:$0]  %s56, 17920, %s58, [#allocation5], 896, 896, 56
    $region25: #{ts_encoder_forward.1} parent=1 // pred_fallthru
      _
    // Predicated region
    $region26: #{ts_encoder_forward.1} parent=1 // pred_check
      _
    $region27: #{ts_encoder_forward.1} parent=1 // pred_check_branch
      %65 = sbr.rel (0) target = $region29
    $region28: #{ts_encoder_forward.1} parent=1 // pred_region
      _
    $region29: #{ts_encoder_forward.1} parent=1 // pred_fallthru
      _
    // Predicated region
    $region30: #{ts_encoder_forward.1} parent=1 // pred_check
      _
    $region31: #{ts_encoder_forward.1} parent=1 // pred_check_branch
      %67 = sbr.rel (0) target = $region33
    $region32: #{ts_encoder_forward.1} parent=1 // pred_region
      %69 = vsyncadd [#allocation8], 0
      %s70 = sshll.u32 %s7, 4
      %s71 = int_to_ptr.hbm [resolvable:$true] %s70
      %s72 = sshll.u32 [#allocation7], 4
      %s73 = int_to_ptr.vmem [resolvable:$true] %s72
      %78 = dma.hbm_to_vmem [thread:$0]  %s71, 24320, %s73, [#allocation8], 1216, 1216, 76
    $region33: #{ts_encoder_forward.1} parent=1 // pred_fallthru
      _
    // Predicated region
    $region34: #{ts_encoder_forward.1} parent=1 // pred_check
      _
    $region35: #{ts_encoder_forward.1} parent=1 // pred_check_branch
      %80 = sbr.rel (0) target = $region37
    $region36: #{ts_encoder_forward.1} parent=1 // pred_region
      _
    $region37: #{ts_encoder_forward.1} parent=1 // pred_fallthru
      _
    // Predicated region
    $region38: #{ts_encoder_forward.1} parent=1 // pred_check
      _
    $region39: #{ts_encoder_forward.1} parent=1 // pred_check_branch
      %82 = sbr.rel (0) target = $region41
    $region40: #{ts_encoder_forward.1} parent=1 // pred_region
      _
    $region41: #{ts_encoder_forward.1} parent=1 // pred_fallthru
      _
    // Predicated region
    $region42: #{ts_encoder_forward.1} parent=1 // pred_check
      _
    $region43: #{ts_encoder_forward.1} parent=1 // pred_check_branch
      %84 = sbr.rel (0) target = $region45
    $region44: #{ts_encoder_forward.1} parent=1 // pred_region
      _
    $region45: #{ts_encoder_forward.1} parent=1 // pred_fallthru
      _
    // Predicated region
    $region46: #{ts_encoder_forward.1} parent=1 // pred_check
      _
    $region47: #{ts_encoder_forward.1} parent=1 // pred_check_branch
      %86 = sbr.rel (0) target = $region49
    $region48: #{ts_encoder_forward.1} parent=1 // pred_region
      %88 = dma.done [#allocation3], 2560
    $region49: #{ts_encoder_forward.1} parent=1 // pred_fallthru
      _
    // Predicated region
    $region50: #{ts_encoder_forward.1} parent=1 // pred_check
      _
    $region51: #{ts_encoder_forward.1} parent=1 // pred_check_branch
      %90 = sbr.rel (0) target = $region53
    $region52: #{ts_encoder_forward.1} parent=1 // pred_region
      %92 = dma.done [#allocation5], 10240
    $region53: #{ts_encoder_forward.1} parent=1 // pred_fallthru
      _
    // Predicated region
    $region54: #{ts_encoder_forward.1} parent=1 // pred_check
      _
    $region55: #{ts_encoder_forward.1} parent=1 // pred_check_branch
      %94 = sbr.rel (0) target = $region57
    $region56: #{ts_encoder_forward.1} parent=1 // pred_region
      %96 = dma.done [#allocation5], 17920
    $region57: #{ts_encoder_forward.1} parent=1 // pred_fallthru
      _
    // Predicated region
    $region58: #{ts_encoder_forward.1} parent=1 // pred_check
      _
    $region59: #{ts_encoder_forward.1} parent=1 // pred_check_branch
      %98 = sbr.rel (0) target = $region61
    $region60: #{ts_encoder_forward.1} parent=1 // pred_region
      %100 = dma.done [#allocation8], 24320
    $region61: #{ts_encoder_forward.1} parent=1 // pred_fallthru
      _
    %v102 = vld [vmem:[%s0] sm:$0xf]
    %104 = vst [vmem:[#allocation1] ss:$4 sm:$0xff] %v102
    %v105 = vld.sshfl [vmem:[#allocation1] sm:$0xff pattern:$0x73625140]
    %v106 = vld.sshfl [vmem:[#allocation1 + $0x8] sm:$0xff pattern:$0x73625140]
    %v109 = vpack.c.bf16 %v105, %v105
    %v110 = vpack.c.bf16 %v106, %v106
    %v111 = vld [vmem:[#allocation2] sm:$0xff]
    %v112 = vld [vmem:[#allocation2 + $0x8] sm:$0xff]
    %v113 = vld [vmem:[#allocation2 + $0x10] sm:$0xff]
    %v114 = vld [vmem:[#allocation2 + $0x18] sm:$0xff]
    %v115 = vld [vmem:[#allocation2 + $0x20] sm:$0xff]
    %v116 = vld [vmem:[#allocation2 + $0x28] sm:$0xff]
    %v117 = vld [vmem:[#allocation2 + $0x30] sm:$0xff]
    %v118 = vld [vmem:[#allocation2 + $0x38] sm:$0xff]
    %v119 = vld [vmem:[#allocation2 + $0x40] sm:$0xff]
    %v120 = vld [vmem:[#allocation2 + $0x48] sm:$0xff]
    %v121 = vld [vmem:[#allocation2 + $0x50] sm:$0xff]
    %v122 = vld [vmem:[#allocation2 + $0x58] sm:$0xff]
    %v123 = vld [vmem:[#allocation2 + $0x60] sm:$0xff]
    %v124 = vld [vmem:[#allocation2 + $0x68] sm:$0xff]
    %v125 = vld [vmem:[#allocation2 + $0x70] sm:$0xff]
    %v126 = vld [vmem:[#allocation2 + $0x78] sm:$0xff]
    %v127 = vld [vmem:[#allocation2 + $0x80] sm:$0xff]
    %v128 = vld [vmem:[#allocation2 + $0x88] sm:$0xff]
    %v129 = vld [vmem:[#allocation2 + $0x90] sm:$0xff]
    %v130 = vld [vmem:[#allocation2 + $0x98] sm:$0xff]
    %v151 = vunpack.c.l.b16 %v111
    %v152 = vunpack.c.h.b16 %v111
    %v153 = vunpack.c.l.b16 %v112
    %v154 = vunpack.c.h.b16 %v112
    %v155 = vunpack.c.l.b16 %v113
    %v156 = vunpack.c.h.b16 %v113
    %v157 = vunpack.c.l.b16 %v114
    %v158 = vunpack.c.h.b16 %v114
    %v159 = vunpack.c.l.b16 %v115
    %v160 = vunpack.c.h.b16 %v115
    %v161 = vunpack.c.l.b16 %v116
    %v162 = vunpack.c.h.b16 %v116
    %v163 = vunpack.c.l.b16 %v117
    %v164 = vunpack.c.h.b16 %v117
    %v165 = vunpack.c.l.b16 %v118
    %v166 = vunpack.c.h.b16 %v118
    %v167 = vunpack.c.l.b16 %v119
    %v168 = vunpack.c.h.b16 %v119
    %v169 = vunpack.c.l.b16 %v120
    %v170 = vunpack.c.h.b16 %v120
    %v171 = vunpack.c.l.b16 %v121
    %v172 = vunpack.c.h.b16 %v121
    %v173 = vunpack.c.l.b16 %v122
    %v174 = vunpack.c.h.b16 %v122
    %v175 = vunpack.c.l.b16 %v123
    %v176 = vunpack.c.h.b16 %v123
    %v177 = vunpack.c.l.b16 %v124
    %v178 = vunpack.c.h.b16 %v124
    %v179 = vunpack.c.l.b16 %v125
    %v180 = vunpack.c.h.b16 %v125
    %v181 = vunpack.c.l.b16 %v126
    %v182 = vunpack.c.h.b16 %v126
    %v183 = vunpack.c.l.b16 %v127
    %v184 = vunpack.c.h.b16 %v127
    %v185 = vunpack.c.l.b16 %v128
    %v186 = vunpack.c.h.b16 %v128
    %v187 = vunpack.c.l.b16 %v129
    %v188 = vunpack.c.h.b16 %v129
    %v189 = vunpack.c.l.b16 %v130
    %v190 = vunpack.c.h.b16 %v130
    %v191 = vpack.c.b16 %v153, %v151
    %v192 = vpack.c.b16 %v154, %v152
    %v193 = vpack.c.b16 %v157, %v155
    %v194 = vpack.c.b16 %v158, %v156
    %v195 = vpack.c.b16 %v161, %v159
    %v196 = vpack.c.b16 %v162, %v160
    %v197 = vpack.c.b16 %v165, %v163
    %v198 = vpack.c.b16 %v166, %v164
    %v199 = vpack.c.b16 %v169, %v167
    %v200 = vpack.c.b16 %v170, %v168
    %v201 = vpack.c.b16 %v173, %v171
    %v202 = vpack.c.b16 %v174, %v172
    %v203 = vpack.c.b16 %v177, %v175
    %v204 = vpack.c.b16 %v178, %v176
    %v205 = vpack.c.b16 %v181, %v179
    %v206 = vpack.c.b16 %v182, %v180
    %v207 = vpack.c.b16 %v185, %v183
    %v208 = vpack.c.b16 %v186, %v184
    %v209 = vpack.c.b16 %v189, %v187
    %v210 = vpack.c.b16 %v190, %v188
    %vm231 = vcmask 261120
    %v233 = vsel %vm231, %v110, 0
    %235 = vmatpush.bf16.msra.mxu0 %v205
    %236 = vmatpush.bf16.msra.mxu0 %v203
    %237 = vmatpush.bf16.msra.mxu0 %v201
    %238 = vmatpush.bf16.msra.mxu0 %v199
    %239 = vmatpush.bf16.msra.mxu0 %v197
    %240 = vmatpush.bf16.msra.mxu0 %v195
    %241 = vmatpush.bf16.msra.mxu0 %v193
    %242 = vmatpush.bf16.msra.mxu0 %v191
    %243 = vmatmul.bf16.gmra.mxu0 %v109
    %v244 = vpop.f32.mrf.mxu0
    %v245 = vadd.f32 0.0, %v244
    %v246 = vpop.f32.mrf.mxu0
    %247 = vdwg.mxu0
    %248 = vmatpush.bf16.msra.mxu0 0
    %249 = vmatpush.bf16.msra.mxu0 0
    %250 = vmatpush.bf16.msra.mxu0 0
    %251 = vmatpush.bf16.msra.mxu0 0
    %252 = vmatpush.bf16.msra.mxu0 0
    %253 = vmatpush.bf16.msra.mxu0 0
    %254 = vmatpush.bf16.msra.mxu0 %v209
    %255 = vmatpush.bf16.msra.mxu0 %v207
    %256 = vmatmul.bf16.gmra.mxu0 %v233
    %v257 = vpop.f32.mrf.mxu0
    %v258 = vadd.f32 %v245, %v257
    %v259 = vpop.f32.mrf.mxu0
    %260 = vdwg.mxu0
    %261 = vmatpush.bf16.msra.mxu0 %v206
    %262 = vmatpush.bf16.msra.mxu0 %v204
    %263 = vmatpush.bf16.msra.mxu0 %v202
    %264 = vmatpush.bf16.msra.mxu0 %v200
    %265 = vmatpush.bf16.msra.mxu0 %v198
    %266 = vmatpush.bf16.msra.mxu0 %v196
    %267 = vmatpush.bf16.msra.mxu0 %v194
    %268 = vmatpush.bf16.msra.mxu0 %v192
    %269 = vmatmul.bf16.gmra.mxu0 %v109
    %v270 = vpop.f32.mrf.mxu0
    %v271 = vadd.f32 0.0, %v270
    %v272 = vpop.f32.mrf.mxu0
    %273 = vdwg.mxu0
    %274 = vmatpush.bf16.msra.mxu0 0
    %275 = vmatpush.bf16.msra.mxu0 0
    %276 = vmatpush.bf16.msra.mxu0 0
    %277 = vmatpush.bf16.msra.mxu0 0
    %278 = vmatpush.bf16.msra.mxu0 0
    %279 = vmatpush.bf16.msra.mxu0 0
    %280 = vmatpush.bf16.msra.mxu0 %v210
    %281 = vmatpush.bf16.msra.mxu0 %v208
    %282 = vmatmul.bf16.gmra.mxu0 %v233
    %v283 = vpop.f32.mrf.mxu0
    %v284 = vadd.f32 %v271, %v283
    %v285 = vpop.f32.mrf.mxu0
    %286 = vdwg.mxu0
    %v287 = vmax.f32 %v258, %v284
    %289 = vrot.lane.b32.xlu0 %v287, 64
    %v290 = vpop.permute.xlu0 %289
    %v292 = vmax.f32 %v287, %v290
    %294 = vrot.lane.b32.xlu0 %v292, 96
    %v295 = vpop.permute.xlu0 %294
    %v297 = vmax.f32 %v292, %v295
    %299 = vrot.lane.b32.xlu0 %v297, 112
    %v300 = vpop.permute.xlu0 %299
    %v302 = vmax.f32 %v297, %v300
    %v303 = vld [vmem:[%s2] sm:$0x1]
    %v305 = vperm.slane %v303, 0
    %v307 = vadd.f32 %v302, %v305
    %v308 = vmax.f32 %v307, 0.0
    %v309 = vld [vmem:[%s9] sm:$0xff]
    %v310 = vld [vmem:[%s9 + $0x8] sm:$0xff]
    %v311 = vld [vmem:[#allocation4] sm:$0xff]
    %v312 = vld [vmem:[#allocation4 + $0x8] sm:$0xff]
    %v313 = vld [vmem:[#allocation4 + $0x10] sm:$0xff]
    %v314 = vld [vmem:[#allocation4 + $0x18] sm:$0xff]
    %v315 = vld [vmem:[#allocation4 + $0x20] sm:$0xff]
    %v316 = vld [vmem:[#allocation4 + $0x28] sm:$0xff]
    %v317 = vld [vmem:[#allocation4 + $0x30] sm:$0xff]
    %v318 = vld [vmem:[#allocation4 + $0x38] sm:$0xff]
    %v319 = vld [vmem:[#allocation4 + $0x40] sm:$0xff]
    %v320 = vld [vmem:[#allocation4 + $0x48] sm:$0xff]
    %v321 = vld [vmem:[#allocation4 + $0x50] sm:$0xff]
    %v322 = vld [vmem:[#allocation4 + $0x58] sm:$0xff]
    %v323 = vld [vmem:[#allocation4 + $0x60] sm:$0xff]
    %v324 = vld [vmem:[#allocation4 + $0x68] sm:$0xff]
    %v325 = vld [vmem:[#allocation4 + $0x70] sm:$0xff]
    %v326 = vld [vmem:[#allocation4 + $0x78] sm:$0xff]
    %v327 = vld [vmem:[#allocation4 + $0x80] sm:$0xff]
    %v328 = vld [vmem:[#allocation4 + $0x88] sm:$0xff]
    %v329 = vld [vmem:[#allocation4 + $0x90] sm:$0xff]
    %v330 = vld [vmem:[#allocation4 + $0x98] sm:$0xff]
    %v331 = vld [vmem:[#allocation4 + $0xa0] sm:$0xff]
    %v332 = vld [vmem:[#allocation4 + $0xa8] sm:$0xff]
    %v333 = vld [vmem:[#allocation4 + $0xb0] sm:$0xff]
    %v334 = vld [vmem:[#allocation4 + $0xb8] sm:$0xff]
    %v335 = vld [vmem:[#allocation4 + $0xc0] sm:$0xff]
    %v336 = vld [vmem:[#allocation4 + $0xc8] sm:$0xff]
    %v337 = vld [vmem:[#allocation4 + $0xd0] sm:$0xff]
    %v338 = vld [vmem:[#allocation4 + $0xd8] sm:$0xff]
    %v339 = vld [vmem:[#allocation4 + $0xe0] sm:$0xff]
    %v340 = vld [vmem:[#allocation4 + $0xe8] sm:$0xff]
    %v341 = vld [vmem:[#allocation4 + $0xf0] sm:$0xff]
    %v342 = vld [vmem:[#allocation4 + $0xf8] sm:$0xff]
    %v343 = vld [vmem:[#allocation4 + $0x100] sm:$0xff]
    %v344 = vld [vmem:[#allocation4 + $0x108] sm:$0xff]
    %v345 = vld [vmem:[#allocation4 + $0x110] sm:$0xff]
    %v346 = vld [vmem:[#allocation4 + $0x118] sm:$0xff]
    %v347 = vld [vmem:[#allocation4 + $0x120] sm:$0xff]
    %v348 = vld [vmem:[#allocation4 + $0x128] sm:$0xff]
    %v349 = vld [vmem:[#allocation4 + $0x130] sm:$0xff]
    %v350 = vld [vmem:[#allocation4 + $0x138] sm:$0xff]
    %v351 = vld [vmem:[#allocation4 + $0x140] sm:$0xff]
    %v352 = vld [vmem:[#allocation4 + $0x148] sm:$0xff]
    %v353 = vld [vmem:[#allocation4 + $0x150] sm:$0xff]
    %v354 = vld [vmem:[#allocation4 + $0x158] sm:$0xff]
    %v355 = vld [vmem:[#allocation4 + $0x160] sm:$0xff]
    %v356 = vld [vmem:[#allocation4 + $0x168] sm:$0xff]
    %v357 = vld [vmem:[#allocation4 + $0x170] sm:$0xff]
    %v358 = vld [vmem:[#allocation4 + $0x178] sm:$0xff]
    %v359 = vld [vmem:[#allocation4 + $0x180] sm:$0xff]
    %v360 = vld [vmem:[#allocation4 + $0x188] sm:$0xff]
    %v361 = vld [vmem:[#allocation4 + $0x190] sm:$0xff]
    %v362 = vld [vmem:[#allocation4 + $0x198] sm:$0xff]
    %v363 = vld [vmem:[#allocation4 + $0x1a0] sm:$0xff]
    %v364 = vld [vmem:[#allocation4 + $0x1a8] sm:$0xff]
    %v365 = vld [vmem:[#allocation4 + $0x1b0] sm:$0xff]
    %v366 = vld [vmem:[#allocation4 + $0x1b8] sm:$0xff]
    %v367 = vld [vmem:[#allocation4 + $0x1c0] sm:$0xff]
    %v368 = vld [vmem:[#allocation4 + $0x1c8] sm:$0xff]
    %v369 = vld [vmem:[#allocation4 + $0x1d0] sm:$0xff]
    %v370 = vld [vmem:[#allocation4 + $0x1d8] sm:$0xff]
    %v371 = vld [vmem:[#allocation4 + $0x1e0] sm:$0xff]
    %v372 = vld [vmem:[#allocation4 + $0x1e8] sm:$0xff]
    %v373 = vld [vmem:[#allocation4 + $0x1f0] sm:$0xff]
    %v374 = vld [vmem:[#allocation4 + $0x1f8] sm:$0xff]
    %v375 = vld [vmem:[#allocation4 + $0x200] sm:$0xff]
    %v376 = vld [vmem:[#allocation4 + $0x208] sm:$0xff]
    %v377 = vld [vmem:[#allocation4 + $0x210] sm:$0xff]
    %v378 = vld [vmem:[#allocation4 + $0x218] sm:$0xff]
    %v379 = vld [vmem:[#allocation4 + $0x220] sm:$0xff]
    %v380 = vld [vmem:[#allocation4 + $0x228] sm:$0xff]
    %v381 = vld [vmem:[#allocation4 + $0x230] sm:$0xff]
    %v382 = vld [vmem:[#allocation4 + $0x238] sm:$0xff]
    %v383 = vld [vmem:[#allocation4 + $0x240] sm:$0xff]
    %v384 = vld [vmem:[#allocation4 + $0x248] sm:$0xff]
    %v385 = vld [vmem:[#allocation4 + $0x250] sm:$0xff]
    %v386 = vld [vmem:[#allocation4 + $0x258] sm:$0xff]
    %v387 = vld [vmem:[#allocation4 + $0x260] sm:$0xff]
    %v388 = vld [vmem:[#allocation4 + $0x268] sm:$0xff]
    %v389 = vld [vmem:[#allocation4 + $0x270] sm:$0xff]
    %v390 = vld [vmem:[#allocation4 + $0x278] sm:$0xff]
    %v471 = vunpack.c.l.b16 %v311
    %v472 = vunpack.c.h.b16 %v311
    %v473 = vunpack.c.l.b16 %v312
    %v474 = vunpack.c.h.b16 %v312
    %v475 = vunpack.c.l.b16 %v313
    %v476 = vunpack.c.h.b16 %v313
    %v477 = vunpack.c.l.b16 %v314
    %v478 = vunpack.c.h.b16 %v314
    %v479 = vunpack.c.l.b16 %v315
    %v480 = vunpack.c.h.b16 %v315
    %v481 = vunpack.c.l.b16 %v316
    %v482 = vunpack.c.h.b16 %v316
    %v483 = vunpack.c.l.b16 %v317
    %v484 = vunpack.c.h.b16 %v317
    %v485 = vunpack.c.l.b16 %v318
    %v486 = vunpack.c.h.b16 %v318
    %v487 = vunpack.c.l.b16 %v319
    %v488 = vunpack.c.h.b16 %v319
    %v489 = vunpack.c.l.b16 %v320
    %v490 = vunpack.c.h.b16 %v320
    %v491 = vunpack.c.l.b16 %v321
    %v492 = vunpack.c.h.b16 %v321
    %v493 = vunpack.c.l.b16 %v322
    %v494 = vunpack.c.h.b16 %v322
    %v495 = vunpack.c.l.b16 %v323
    %v496 = vunpack.c.h.b16 %v323
    %v497 = vunpack.c.l.b16 %v324
    %v498 = vunpack.c.h.b16 %v324
    %v499 = vunpack.c.l.b16 %v325
    %v500 = vunpack.c.h.b16 %v325
    %v501 = vunpack.c.l.b16 %v326
    %v502 = vunpack.c.h.b16 %v326
    %v503 = vunpack.c.l.b16 %v327
    %v504 = vunpack.c.h.b16 %v327
    %v505 = vunpack.c.l.b16 %v328
    %v506 = vunpack.c.h.b16 %v328
    %v507 = vunpack.c.l.b16 %v329
    %v508 = vunpack.c.h.b16 %v329
    %v509 = vunpack.c.l.b16 %v330
    %v510 = vunpack.c.h.b16 %v330
    %v511 = vunpack.c.l.b16 %v331
    %v512 = vunpack.c.h.b16 %v331
    %v513 = vunpack.c.l.b16 %v332
    %v514 = vunpack.c.h.b16 %v332
    %v515 = vunpack.c.l.b16 %v333
    %v516 = vunpack.c.h.b16 %v333
    %v517 = vunpack.c.l.b16 %v334
    %v518 = vunpack.c.h.b16 %v334
    %v519 = vunpack.c.l.b16 %v335
    %v520 = vunpack.c.h.b16 %v335
    %v521 = vunpack.c.l.b16 %v336
    %v522 = vunpack.c.h.b16 %v336
    %v523 = vunpack.c.l.b16 %v337
    %v524 = vunpack.c.h.b16 %v337
    %v525 = vunpack.c.l.b16 %v338
    %v526 = vunpack.c.h.b16 %v338
    %v527 = vunpack.c.l.b16 %v339
    %v528 = vunpack.c.h.b16 %v339
    %v529 = vunpack.c.l.b16 %v340
    %v530 = vunpack.c.h.b16 %v340
    %v531 = vunpack.c.l.b16 %v341
    %v532 = vunpack.c.h.b16 %v341
    %v533 = vunpack.c.l.b16 %v342
    %v534 = vunpack.c.h.b16 %v342
    %v535 = vunpack.c.l.b16 %v343
    %v536 = vunpack.c.h.b16 %v343
    %v537 = vunpack.c.l.b16 %v344
    %v538 = vunpack.c.h.b16 %v344
    %v539 = vunpack.c.l.b16 %v345
    %v540 = vunpack.c.h.b16 %v345
    %v541 = vunpack.c.l.b16 %v346
    %v542 = vunpack.c.h.b16 %v346
    %v543 = vunpack.c.l.b16 %v347
    %v544 = vunpack.c.h.b16 %v347
    %v545 = vunpack.c.l.b16 %v348
    %v546 = vunpack.c.h.b16 %v348
    %v547 = vunpack.c.l.b16 %v349
    %v548 = vunpack.c.h.b16 %v349
    %v549 = vunpack.c.l.b16 %v350
    %v550 = vunpack.c.h.b16 %v350
    %v551 = vunpack.c.l.b16 %v351
    %v552 = vunpack.c.h.b16 %v351
    %v553 = vunpack.c.l.b16 %v352
    %v554 = vunpack.c.h.b16 %v352
    %v555 = vunpack.c.l.b16 %v353
    %v556 = vunpack.c.h.b16 %v353
    %v557 = vunpack.c.l.b16 %v354
    %v558 = vunpack.c.h.b16 %v354
    %v559 = vunpack.c.l.b16 %v355
    %v560 = vunpack.c.h.b16 %v355
    %v561 = vunpack.c.l.b16 %v356
    %v562 = vunpack.c.h.b16 %v356
    %v563 = vunpack.c.l.b16 %v357
    %v564 = vunpack.c.h.b16 %v357
    %v565 = vunpack.c.l.b16 %v358
    %v566 = vunpack.c.h.b16 %v358
    %v567 = vunpack.c.l.b16 %v359
    %v568 = vunpack.c.h.b16 %v359
    %v569 = vunpack.c.l.b16 %v360
    %v570 = vunpack.c.h.b16 %v360
    %v571 = vunpack.c.l.b16 %v361
    %v572 = vunpack.c.h.b16 %v361
    %v573 = vunpack.c.l.b16 %v362
    %v574 = vunpack.c.h.b16 %v362
    %v575 = vunpack.c.l.b16 %v363
    %v576 = vunpack.c.h.b16 %v363
    %v577 = vunpack.c.l.b16 %v364
    %v578 = vunpack.c.h.b16 %v364
    %v579 = vunpack.c.l.b16 %v365
    %v580 = vunpack.c.h.b16 %v365
    %v581 = vunpack.c.l.b16 %v366
    %v582 = vunpack.c.h.b16 %v366
    %v583 = vunpack.c.l.b16 %v367
    %v584 = vunpack.c.h.b16 %v367
    %v585 = vunpack.c.l.b16 %v368
    %v586 = vunpack.c.h.b16 %v368
    %v587 = vunpack.c.l.b16 %v369
    %v588 = vunpack.c.h.b16 %v369
    %v589 = vunpack.c.l.b16 %v370
    %v590 = vunpack.c.h.b16 %v370
    %v591 = vunpack.c.l.b16 %v371
    %v592 = vunpack.c.h.b16 %v371
    %v593 = vunpack.c.l.b16 %v372
    %v594 = vunpack.c.h.b16 %v372
    %v595 = vunpack.c.l.b16 %v373
    %v596 = vunpack.c.h.b16 %v373
    %v597 = vunpack.c.l.b16 %v374
    %v598 = vunpack.c.h.b16 %v374
    %v599 = vunpack.c.l.b16 %v375
    %v600 = vunpack.c.h.b16 %v375
    %v601 = vunpack.c.l.b16 %v376
    %v602 = vunpack.c.h.b16 %v376
    %v603 = vunpack.c.l.b16 %v377
    %v604 = vunpack.c.h.b16 %v377
    %v605 = vunpack.c.l.b16 %v378
    %v606 = vunpack.c.h.b16 %v378
    %v607 = vunpack.c.l.b16 %v379
    %v608 = vunpack.c.h.b16 %v379
    %v609 = vunpack.c.l.b16 %v380
    %v610 = vunpack.c.h.b16 %v380
    %v611 = vunpack.c.l.b16 %v381
    %v612 = vunpack.c.h.b16 %v381
    %v613 = vunpack.c.l.b16 %v382
    %v614 = vunpack.c.h.b16 %v382
    %v615 = vunpack.c.l.b16 %v383
    %v616 = vunpack.c.h.b16 %v383
    %v617 = vunpack.c.l.b16 %v384
    %v618 = vunpack.c.h.b16 %v384
    %v619 = vunpack.c.l.b16 %v385
    %v620 = vunpack.c.h.b16 %v385
    %v621 = vunpack.c.l.b16 %v386
    %v622 = vunpack.c.h.b16 %v386
    %v623 = vunpack.c.l.b16 %v387
    %v624 = vunpack.c.h.b16 %v387
    %v625 = vunpack.c.l.b16 %v388
    %v626 = vunpack.c.h.b16 %v388
    %v627 = vunpack.c.l.b16 %v389
    %v628 = vunpack.c.h.b16 %v389
    %v629 = vunpack.c.l.b16 %v390
    %v630 = vunpack.c.h.b16 %v390
    %v631 = vpack.c.b16 %v479, %v471
    %v632 = vpack.c.b16 %v480, %v472
    %v633 = vpack.c.b16 %v481, %v473
    %v634 = vpack.c.b16 %v482, %v474
    %v635 = vpack.c.b16 %v483, %v475
    %v636 = vpack.c.b16 %v484, %v476
    %v637 = vpack.c.b16 %v485, %v477
    %v638 = vpack.c.b16 %v486, %v478
    %v639 = vpack.c.b16 %v495, %v487
    %v640 = vpack.c.b16 %v496, %v488
    %v641 = vpack.c.b16 %v497, %v489
    %v642 = vpack.c.b16 %v498, %v490
    %v643 = vpack.c.b16 %v499, %v491
    %v644 = vpack.c.b16 %v500, %v492
    %v645 = vpack.c.b16 %v501, %v493
    %v646 = vpack.c.b16 %v502, %v494
    %v647 = vpack.c.b16 %v511, %v503
    %v648 = vpack.c.b16 %v512, %v504
    %v649 = vpack.c.b16 %v513, %v505
    %v650 = vpack.c.b16 %v514, %v506
    %v651 = vpack.c.b16 %v515, %v507
    %v652 = vpack.c.b16 %v516, %v508
    %v653 = vpack.c.b16 %v517, %v509
    %v654 = vpack.c.b16 %v518, %v510
    %v655 = vpack.c.b16 %v527, %v519
    %v656 = vpack.c.b16 %v528, %v520
    %v657 = vpack.c.b16 %v529, %v521
    %v658 = vpack.c.b16 %v530, %v522
    %v659 = vpack.c.b16 %v531, %v523
    %v660 = vpack.c.b16 %v532, %v524
    %v661 = vpack.c.b16 %v533, %v525
    %v662 = vpack.c.b16 %v534, %v526
    %v663 = vpack.c.b16 %v543, %v535
    %v664 = vpack.c.b16 %v544, %v536
    %v665 = vpack.c.b16 %v545, %v537
    %v666 = vpack.c.b16 %v546, %v538
    %v667 = vpack.c.b16 %v547, %v539
    %v668 = vpack.c.b16 %v548, %v540
    %v669 = vpack.c.b16 %v549, %v541
    %v670 = vpack.c.b16 %v550, %v542
    %v671 = vpack.c.b16 %v559, %v551
    %v672 = vpack.c.b16 %v560, %v552
    %v673 = vpack.c.b16 %v561, %v553
    %v674 = vpack.c.b16 %v562, %v554
    %v675 = vpack.c.b16 %v563, %v555
    %v676 = vpack.c.b16 %v564, %v556
    %v677 = vpack.c.b16 %v565, %v557
    %v678 = vpack.c.b16 %v566, %v558
    %v679 = vpack.c.b16 %v575, %v567
    %v680 = vpack.c.b16 %v576, %v568
    %v681 = vpack.c.b16 %v577, %v569
    %v682 = vpack.c.b16 %v578, %v570
    %v683 = vpack.c.b16 %v579, %v571
    %v684 = vpack.c.b16 %v580, %v572
    %v685 = vpack.c.b16 %v581, %v573
    %v686 = vpack.c.b16 %v582, %v574
    %v687 = vpack.c.b16 %v591, %v583
    %v688 = vpack.c.b16 %v592, %v584
    %v689 = vpack.c.b16 %v593, %v585
    %v690 = vpack.c.b16 %v594, %v586
    %v691 = vpack.c.b16 %v595, %v587
    %v692 = vpack.c.b16 %v596, %v588
    %v693 = vpack.c.b16 %v597, %v589
    %v694 = vpack.c.b16 %v598, %v590
    %v695 = vpack.c.b16 %v607, %v599
    %v696 = vpack.c.b16 %v608, %v600
    %v697 = vpack.c.b16 %v609, %v601
    %v698 = vpack.c.b16 %v610, %v602
    %v699 = vpack.c.b16 %v611, %v603
    %v700 = vpack.c.b16 %v612, %v604
    %v701 = vpack.c.b16 %v613, %v605
    %v702 = vpack.c.b16 %v614, %v606
    %v703 = vpack.c.b16 %v623, %v615
    %v704 = vpack.c.b16 %v624, %v616
    %v705 = vpack.c.b16 %v625, %v617
    %v706 = vpack.c.b16 %v626, %v618
    %v707 = vpack.c.b16 %v627, %v619
    %v708 = vpack.c.b16 %v628, %v620
    %v709 = vpack.c.b16 %v629, %v621
    %v710 = vpack.c.b16 %v630, %v622
    %791 = vmatpush.bf16.msra.mxu0 %v687
    %792 = vmatpush.bf16.msra.mxu0 %v679
    %793 = vmatpush.bf16.msra.mxu0 %v671
    %794 = vmatpush.bf16.msra.mxu0 %v663
    %795 = vmatpush.bf16.msra.mxu0 %v655
    %796 = vmatpush.bf16.msra.mxu0 %v647
    %797 = vmatpush.bf16.msra.mxu0 %v639
    %798 = vmatpush.bf16.msra.mxu0 %v631
    %799 = vmatmul.bf16.gmra.mxu0 %v109
    %v800 = vpop.f32.mrf.mxu0
    %v801 = vadd.f32 0.0, %v800
    %v802 = vpop.f32.mrf.mxu0
    %803 = vdwg.mxu0
    %804 = vmatpush.bf16.msra.mxu0 0
    %805 = vmatpush.bf16.msra.mxu0 0
    %806 = vmatpush.bf16.msra.mxu0 0
    %807 = vmatpush.bf16.msra.mxu0 0
    %808 = vmatpush.bf16.msra.mxu0 0
    %809 = vmatpush.bf16.msra.mxu0 0
    %810 = vmatpush.bf16.msra.mxu0 %v703
    %811 = vmatpush.bf16.msra.mxu0 %v695
    %812 = vmatmul.bf16.gmra.mxu0 %v233
    %v813 = vpop.f32.mrf.mxu0
    %v814 = vadd.f32 %v801, %v813
    %v815 = vpop.f32.mrf.mxu0
    %816 = vdwg.mxu0
    %817 = vmatpush.bf16.msra.mxu0 %v688
    %818 = vmatpush.bf16.msra.mxu0 %v680
    %819 = vmatpush.bf16.msra.mxu0 %v672
    %820 = vmatpush.bf16.msra.mxu0 %v664
    %821 = vmatpush.bf16.msra.mxu0 %v656
    %822 = vmatpush.bf16.msra.mxu0 %v648
    %823 = vmatpush.bf16.msra.mxu0 %v640
    %824 = vmatpush.bf16.msra.mxu0 %v632
    %825 = vmatmul.bf16.gmra.mxu0 %v109
    %v826 = vpop.f32.mrf.mxu0
    %v827 = vadd.f32 0.0, %v826
    %v828 = vpop.f32.mrf.mxu0
    %829 = vdwg.mxu0
    %830 = vmatpush.bf16.msra.mxu0 0
    %831 = vmatpush.bf16.msra.mxu0 0
    %832 = vmatpush.bf16.msra.mxu0 0
    %833 = vmatpush.bf16.msra.mxu0 0
    %834 = vmatpush.bf16.msra.mxu0 0
    %835 = vmatpush.bf16.msra.mxu0 0
    %836 = vmatpush.bf16.msra.mxu0 %v704
    %837 = vmatpush.bf16.msra.mxu0 %v696
    %838 = vmatmul.bf16.gmra.mxu0 %v233
    %v839 = vpop.f32.mrf.mxu0
    %v840 = vadd.f32 %v827, %v839
    %v841 = vpop.f32.mrf.mxu0
    %842 = vdwg.mxu0
    %843 = vmatpush.bf16.msra.mxu0 %v689
    %844 = vmatpush.bf16.msra.mxu0 %v681
    %845 = vmatpush.bf16.msra.mxu0 %v673
    %846 = vmatpush.bf16.msra.mxu0 %v665
    %847 = vmatpush.bf16.msra.mxu0 %v657
    %848 = vmatpush.bf16.msra.mxu0 %v649
    %849 = vmatpush.bf16.msra.mxu0 %v641
    %850 = vmatpush.bf16.msra.mxu0 %v633
    %851 = vmatmul.bf16.gmra.mxu0 %v109
    %v852 = vpop.f32.mrf.mxu0
    %v853 = vadd.f32 0.0, %v852
    %v854 = vpop.f32.mrf.mxu0
    %855 = vdwg.mxu0
    %856 = vmatpush.bf16.msra.mxu0 0
    %857 = vmatpush.bf16.msra.mxu0 0
    %858 = vmatpush.bf16.msra.mxu0 0
    %859 = vmatpush.bf16.msra.mxu0 0
    %860 = vmatpush.bf16.msra.mxu0 0
    %861 = vmatpush.bf16.msra.mxu0 0
    %862 = vmatpush.bf16.msra.mxu0 %v705
    %863 = vmatpush.bf16.msra.mxu0 %v697
    %864 = vmatmul.bf16.gmra.mxu0 %v233
    %v865 = vpop.f32.mrf.mxu0
    %v866 = vadd.f32 %v853, %v865
    %v867 = vpop.f32.mrf.mxu0
    %868 = vdwg.mxu0
    %869 = vmatpush.bf16.msra.mxu0 %v690
    %870 = vmatpush.bf16.msra.mxu0 %v682
    %871 = vmatpush.bf16.msra.mxu0 %v674
    %872 = vmatpush.bf16.msra.mxu0 %v666
    %873 = vmatpush.bf16.msra.mxu0 %v658
    %874 = vmatpush.bf16.msra.mxu0 %v650
    %875 = vmatpush.bf16.msra.mxu0 %v642
    %876 = vmatpush.bf16.msra.mxu0 %v634
    %877 = vmatmul.bf16.gmra.mxu0 %v109
    %v878 = vpop.f32.mrf.mxu0
    %v879 = vadd.f32 0.0, %v878
    %v880 = vpop.f32.mrf.mxu0
    %881 = vdwg.mxu0
    %882 = vmatpush.bf16.msra.mxu0 0
    %883 = vmatpush.bf16.msra.mxu0 0
    %884 = vmatpush.bf16.msra.mxu0 0
    %885 = vmatpush.bf16.msra.mxu0 0
    %886 = vmatpush.bf16.msra.mxu0 0
    %887 = vmatpush.bf16.msra.mxu0 0
    %888 = vmatpush.bf16.msra.mxu0 %v706
    %889 = vmatpush.bf16.msra.mxu0 %v698
    %890 = vmatmul.bf16.gmra.mxu0 %v233
    %v891 = vpop.f32.mrf.mxu0
    %v892 = vadd.f32 %v879, %v891
    %v893 = vpop.f32.mrf.mxu0
    %894 = vdwg.mxu0
    %895 = vmatpush.bf16.msra.mxu0 %v691
    %896 = vmatpush.bf16.msra.mxu0 %v683
    %897 = vmatpush.bf16.msra.mxu0 %v675
    %898 = vmatpush.bf16.msra.mxu0 %v667
    %899 = vmatpush.bf16.msra.mxu0 %v659
    %900 = vmatpush.bf16.msra.mxu0 %v651
    %901 = vmatpush.bf16.msra.mxu0 %v643
    %902 = vmatpush.bf16.msra.mxu0 %v635
    %903 = vmatmul.bf16.gmra.mxu0 %v109
    %v904 = vpop.f32.mrf.mxu0
    %v905 = vadd.f32 0.0, %v904
    %v906 = vpop.f32.mrf.mxu0
    %907 = vdwg.mxu0
    %908 = vmatpush.bf16.msra.mxu0 0
    %909 = vmatpush.bf16.msra.mxu0 0
    %910 = vmatpush.bf16.msra.mxu0 0
    %911 = vmatpush.bf16.msra.mxu0 0
    %912 = vmatpush.bf16.msra.mxu0 0
    %913 = vmatpush.bf16.msra.mxu0 0
    %914 = vmatpush.bf16.msra.mxu0 %v707
    %915 = vmatpush.bf16.msra.mxu0 %v699
    %916 = vmatmul.bf16.gmra.mxu0 %v233
    %v917 = vpop.f32.mrf.mxu0
    %v918 = vadd.f32 %v905, %v917
    %v919 = vpop.f32.mrf.mxu0
    %920 = vdwg.mxu0
    %921 = vmatpush.bf16.msra.mxu0 %v692
    %922 = vmatpush.bf16.msra.mxu0 %v684
    %923 = vmatpush.bf16.msra.mxu0 %v676
    %924 = vmatpush.bf16.msra.mxu0 %v668
    %925 = vmatpush.bf16.msra.mxu0 %v660
    %926 = vmatpush.bf16.msra.mxu0 %v652
    %927 = vmatpush.bf16.msra.mxu0 %v644
    %928 = vmatpush.bf16.msra.mxu0 %v636
    %929 = vmatmul.bf16.gmra.mxu0 %v109
    %v930 = vpop.f32.mrf.mxu0
    %v931 = vadd.f32 0.0, %v930
    %v932 = vpop.f32.mrf.mxu0
    %933 = vdwg.mxu0
    %934 = vmatpush.bf16.msra.mxu0 0
    %935 = vmatpush.bf16.msra.mxu0 0
    %936 = vmatpush.bf16.msra.mxu0 0
    %937 = vmatpush.bf16.msra.mxu0 0
    %938 = vmatpush.bf16.msra.mxu0 0
    %939 = vmatpush.bf16.msra.mxu0 0
    %940 = vmatpush.bf16.msra.mxu0 %v708
    %941 = vmatpush.bf16.msra.mxu0 %v700
    %942 = vmatmul.bf16.gmra.mxu0 %v233
    %v943 = vpop.f32.mrf.mxu0
    %v944 = vadd.f32 %v931, %v943
    %v945 = vpop.f32.mrf.mxu0
    %946 = vdwg.mxu0
    %947 = vmatpush.bf16.msra.mxu0 %v693
    %948 = vmatpush.bf16.msra.mxu0 %v685
    %949 = vmatpush.bf16.msra.mxu0 %v677
    %950 = vmatpush.bf16.msra.mxu0 %v669
    %951 = vmatpush.bf16.msra.mxu0 %v661
    %952 = vmatpush.bf16.msra.mxu0 %v653
    %953 = vmatpush.bf16.msra.mxu0 %v645
    %954 = vmatpush.bf16.msra.mxu0 %v637
    %955 = vmatmul.bf16.gmra.mxu0 %v109
    %v956 = vpop.f32.mrf.mxu0
    %v957 = vadd.f32 0.0, %v956
    %v958 = vpop.f32.mrf.mxu0
    %959 = vdwg.mxu0
    %960 = vmatpush.bf16.msra.mxu0 0
    %961 = vmatpush.bf16.msra.mxu0 0
    %962 = vmatpush.bf16.msra.mxu0 0
    %963 = vmatpush.bf16.msra.mxu0 0
    %964 = vmatpush.bf16.msra.mxu0 0
    %965 = vmatpush.bf16.msra.mxu0 0
    %966 = vmatpush.bf16.msra.mxu0 %v709
    %967 = vmatpush.bf16.msra.mxu0 %v701
    %968 = vmatmul.bf16.gmra.mxu0 %v233
    %v969 = vpop.f32.mrf.mxu0
    %v970 = vadd.f32 %v957, %v969
    %v971 = vpop.f32.mrf.mxu0
    %972 = vdwg.mxu0
    %973 = vmatpush.bf16.msra.mxu0 %v694
    %974 = vmatpush.bf16.msra.mxu0 %v686
    %975 = vmatpush.bf16.msra.mxu0 %v678
    %976 = vmatpush.bf16.msra.mxu0 %v670
    %977 = vmatpush.bf16.msra.mxu0 %v662
    %978 = vmatpush.bf16.msra.mxu0 %v654
    %979 = vmatpush.bf16.msra.mxu0 %v646
    %980 = vmatpush.bf16.msra.mxu0 %v638
    %981 = vmatmul.bf16.gmra.mxu0 %v109
    %v982 = vpop.f32.mrf.mxu0
    %v983 = vadd.f32 0.0, %v982
    %v984 = vpop.f32.mrf.mxu0
    %985 = vdwg.mxu0
    %986 = vmatpush.bf16.msra.mxu0 0
    %987 = vmatpush.bf16.msra.mxu0 0
    %988 = vmatpush.bf16.msra.mxu0 0
    %989 = vmatpush.bf16.msra.mxu0 0
    %990 = vmatpush.bf16.msra.mxu0 0
    %991 = vmatpush.bf16.msra.mxu0 0
    %992 = vmatpush.bf16.msra.mxu0 %v710
    %993 = vmatpush.bf16.msra.mxu0 %v702
    %994 = vmatmul.bf16.gmra.mxu0 %v233
    %v995 = vpop.f32.mrf.mxu0
    %v996 = vadd.f32 %v983, %v995
    %v997 = vpop.f32.mrf.mxu0
    %998 = vdwg.mxu0
    %v999 = vmax.f32 %v814, %v840
    %v1000 = vmax.f32 %v999, %v866
    %v1001 = vmax.f32 %v1000, %v892
    %v1002 = vmax.f32 %v1001, %v918
    %v1003 = vmax.f32 %v1002, %v944
    %v1004 = vmax.f32 %v1003, %v970
    %v1005 = vmax.f32 %v1004, %v996
    %1007 = vrot.lane.b32.xlu0 %v1005, 64
    %v1008 = vpop.permute.xlu0 %1007
    %v1010 = vmax.f32 %v1005, %v1008
    %1012 = vrot.lane.b32.xlu0 %v1010, 96
    %v1013 = vpop.permute.xlu0 %1012
    %v1015 = vmax.f32 %v1010, %v1013
    %1017 = vrot.lane.b32.xlu0 %v1015, 112
    %v1018 = vpop.permute.xlu0 %1017
    %v1020 = vmax.f32 %v1015, %v1018
    %v1021 = vld [vmem:[%s4] sm:$0x1]
    %v1023 = vperm.slane %v1021, 0
    %v1025 = vadd.f32 %v1020, %v1023
    %v1026 = vmax.f32 %v1025, 0.0
    %v1027 = vld [vmem:[%s9 + $0x10] sm:$0xff]
    %v1028 = vld [vmem:[%s9 + $0x18] sm:$0xff]
    %vm1029 = vcmask 130048
    %v1031 = vsel %vm1029, %v1026, 0
    %1033 = vmatpush.msra.mxu0 0.0
    %1034 = vmatpush.msra.mxu0 0.0
    %1035 = vmatpush.msra.mxu0 0.0
    %1036 = vmatpush.msra.mxu0 0.0
    %1037 = vmatpush.msra.mxu0 0.0
    %1038 = vmatpush.msra.mxu0 0.0
    %1039 = vmatpush.msra.mxu0 0.0
    %1040 = vmatpush.msra.mxu0 0.0
    %1041 = vmatpush.msra.mxu0 0.0
    %1042 = vmatpush.msra.mxu0 0.0
    %1043 = vmatpush.msra.mxu0 0.0
    %1044 = vmatpush.msra.mxu0 0.0
    %1045 = vmatpush.msra.mxu0 0.0
    %1046 = vmatpush.msra.mxu0 0.0
    %1047 = vmatpush.msra.mxu0 %v1028
    %1048 = vmatpush.msra.mxu0 %v1027
    %1049 = vmatmul.f32.gmra.mxu0 %v1031
    %v1050 = vpop.f32.mrf.mxu0
    %v1051 = vadd.f32 0.0, %v1050
    %1052 = vdwg.mxu0
    %v1054 = vsel %vm1029, %v308, 0
    %1056 = vmatpush.msra.mxu0 0.0
    %1057 = vmatpush.msra.mxu0 0.0
    %1058 = vmatpush.msra.mxu0 0.0
    %1059 = vmatpush.msra.mxu0 0.0
    %1060 = vmatpush.msra.mxu0 0.0
    %1061 = vmatpush.msra.mxu0 0.0
    %1062 = vmatpush.msra.mxu0 0.0
    %1063 = vmatpush.msra.mxu0 0.0
    %1064 = vmatpush.msra.mxu0 0.0
    %1065 = vmatpush.msra.mxu0 0.0
    %1066 = vmatpush.msra.mxu0 0.0
    %1067 = vmatpush.msra.mxu0 0.0
    %1068 = vmatpush.msra.mxu0 0.0
    %1069 = vmatpush.msra.mxu0 0.0
    %1070 = vmatpush.msra.mxu0 %v310
    %1071 = vmatpush.msra.mxu0 %v309
    %1072 = vmatmul.f32.gmra.mxu0 %v1054
    %v1073 = vpop.f32.mrf.mxu0
    %v1074 = vadd.f32 %v1051, %v1073
    %1075 = vdwg.mxu0
    %v1076 = vld [vmem:[#allocation6] sm:$0xff]
    %v1077 = vld [vmem:[#allocation6 + $0x8] sm:$0xff]
    %v1078 = vld [vmem:[#allocation6 + $0x10] sm:$0xff]
    %v1079 = vld [vmem:[#allocation6 + $0x18] sm:$0xff]
    %v1080 = vld [vmem:[#allocation6 + $0x20] sm:$0xff]
    %v1081 = vld [vmem:[#allocation6 + $0x28] sm:$0xff]
    %v1082 = vld [vmem:[#allocation6 + $0x30] sm:$0xff]
    %v1083 = vld [vmem:[#allocation6 + $0x38] sm:$0xff]
    %v1084 = vld [vmem:[#allocation6 + $0x40] sm:$0xff]
    %v1085 = vld [vmem:[#allocation6 + $0x48] sm:$0xff]
    %v1086 = vld [vmem:[#allocation6 + $0x50] sm:$0xff]
    %v1087 = vld [vmem:[#allocation6 + $0x58] sm:$0xff]
    %v1088 = vld [vmem:[#allocation6 + $0x60] sm:$0xff]
    %v1089 = vld [vmem:[#allocation6 + $0x68] sm:$0xff]
    %v1090 = vld [vmem:[#allocation6 + $0x70] sm:$0xff]
    %v1091 = vld [vmem:[#allocation6 + $0x78] sm:$0xff]
    %v1092 = vld [vmem:[#allocation6 + $0x80] sm:$0xff]
    %v1093 = vld [vmem:[#allocation6 + $0x88] sm:$0xff]
    %v1094 = vld [vmem:[#allocation6 + $0x90] sm:$0xff]
    %v1095 = vld [vmem:[#allocation6 + $0x98] sm:$0xff]
    %v1096 = vld [vmem:[#allocation6 + $0xa0] sm:$0xff]
    %v1097 = vld [vmem:[#allocation6 + $0xa8] sm:$0xff]
    %v1098 = vld [vmem:[#allocation6 + $0xb0] sm:$0xff]
    %v1099 = vld [vmem:[#allocation6 + $0xb8] sm:$0xff]
    %v1100 = vld [vmem:[#allocation6 + $0xc0] sm:$0xff]
    %v1101 = vld [vmem:[#allocation6 + $0xc8] sm:$0xff]
    %v1102 = vld [vmem:[#allocation6 + $0xd0] sm:$0xff]
    %v1103 = vld [vmem:[#allocation6 + $0xd8] sm:$0xff]
    %v1104 = vld [vmem:[#allocation6 + $0xe0] sm:$0xff]
    %v1105 = vld [vmem:[#allocation6 + $0xe8] sm:$0xff]
    %v1106 = vld [vmem:[#allocation6 + $0xf0] sm:$0xff]
    %v1107 = vld [vmem:[#allocation6 + $0xf8] sm:$0xff]
    %v1108 = vld [vmem:[#allocation6 + $0x100] sm:$0xff]
    %v1109 = vld [vmem:[#allocation6 + $0x108] sm:$0xff]
    %v1110 = vld [vmem:[#allocation6 + $0x110] sm:$0xff]
    %v1111 = vld [vmem:[#allocation6 + $0x118] sm:$0xff]
    %v1112 = vld [vmem:[#allocation6 + $0x120] sm:$0xff]
    %v1113 = vld [vmem:[#allocation6 + $0x128] sm:$0xff]
    %v1114 = vld [vmem:[#allocation6 + $0x130] sm:$0xff]
    %v1115 = vld [vmem:[#allocation6 + $0x138] sm:$0xff]
    %v1116 = vld [vmem:[#allocation6 + $0x140] sm:$0xff]
    %v1117 = vld [vmem:[#allocation6 + $0x148] sm:$0xff]
    %v1118 = vld [vmem:[#allocation6 + $0x150] sm:$0xff]
    %v1119 = vld [vmem:[#allocation6 + $0x158] sm:$0xff]
    %v1120 = vld [vmem:[#allocation6 + $0x160] sm:$0xff]
    %v1121 = vld [vmem:[#allocation6 + $0x168] sm:$0xff]
    %v1122 = vld [vmem:[#allocation6 + $0x170] sm:$0xff]
    %v1123 = vld [vmem:[#allocation6 + $0x178] sm:$0xff]
    %v1124 = vld [vmem:[#allocation6 + $0x180] sm:$0xff]
    %v1125 = vld [vmem:[#allocation6 + $0x188] sm:$0xff]
    %v1126 = vld [vmem:[#allocation6 + $0x190] sm:$0xff]
    %v1127 = vld [vmem:[#allocation6 + $0x198] sm:$0xff]
    %v1128 = vld [vmem:[#allocation6 + $0x1a0] sm:$0xff]
    %v1129 = vld [vmem:[#allocation6 + $0x1a8] sm:$0xff]
    %v1130 = vld [vmem:[#allocation6 + $0x1b0] sm:$0xff]
    %v1131 = vld [vmem:[#allocation6 + $0x1b8] sm:$0xff]
    %v1132 = vld [vmem:[#allocation6 + $0x1c0] sm:$0xff]
    %v1133 = vld [vmem:[#allocation6 + $0x1c8] sm:$0xff]
    %v1134 = vld [vmem:[#allocation6 + $0x1d0] sm:$0xff]
    %v1135 = vld [vmem:[#allocation6 + $0x1d8] sm:$0xff]
    %v1136 = vld [vmem:[#allocation6 + $0x1e0] sm:$0xff]
    %v1137 = vld [vmem:[#allocation6 + $0x1e8] sm:$0xff]
    %v1138 = vld [vmem:[#allocation6 + $0x1f0] sm:$0xff]
    %v1139 = vld [vmem:[#allocation6 + $0x1f8] sm:$0xff]
    %v1140 = vld [vmem:[#allocation6 + $0x200] sm:$0xff]
    %v1141 = vld [vmem:[#allocation6 + $0x208] sm:$0xff]
    %v1142 = vld [vmem:[#allocation6 + $0x210] sm:$0xff]
    %v1143 = vld [vmem:[#allocation6 + $0x218] sm:$0xff]
    %v1144 = vld [vmem:[#allocation6 + $0x220] sm:$0xff]
    %v1145 = vld [vmem:[#allocation6 + $0x228] sm:$0xff]
    %v1146 = vld [vmem:[#allocation6 + $0x230] sm:$0xff]
    %v1147 = vld [vmem:[#allocation6 + $0x238] sm:$0xff]
    %v1148 = vld [vmem:[#allocation6 + $0x240] sm:$0xff]
    %v1149 = vld [vmem:[#allocation6 + $0x248] sm:$0xff]
    %v1150 = vld [vmem:[#allocation6 + $0x250] sm:$0xff]
    %v1151 = vld [vmem:[#allocation6 + $0x258] sm:$0xff]
    %v1152 = vld [vmem:[#allocation6 + $0x260] sm:$0xff]
    %v1153 = vld [vmem:[#allocation6 + $0x268] sm:$0xff]
    %v1154 = vld [vmem:[#allocation6 + $0x270] sm:$0xff]
    %v1155 = vld [vmem:[#allocation6 + $0x278] sm:$0xff]
    %v1156 = vld [vmem:[#allocation6 + $0x280] sm:$0xff]
    %v1157 = vld [vmem:[#allocation6 + $0x288] sm:$0xff]
    %v1158 = vld [vmem:[#allocation6 + $0x290] sm:$0xff]
    %v1159 = vld [vmem:[#allocation6 + $0x298] sm:$0xff]
    %v1160 = vld [vmem:[#allocation6 + $0x2a0] sm:$0xff]
    %v1161 = vld [vmem:[#allocation6 + $0x2a8] sm:$0xff]
    %v1162 = vld [vmem:[#allocation6 + $0x2b0] sm:$0xff]
    %v1163 = vld [vmem:[#allocation6 + $0x2b8] sm:$0xff]
    %v1164 = vld [vmem:[#allocation6 + $0x2c0] sm:$0xff]
    %v1165 = vld [vmem:[#allocation6 + $0x2c8] sm:$0xff]
    %v1166 = vld [vmem:[#allocation6 + $0x2d0] sm:$0xff]
    %v1167 = vld [vmem:[#allocation6 + $0x2d8] sm:$0xff]
    %v1168 = vld [vmem:[#allocation6 + $0x2e0] sm:$0xff]
    %v1169 = vld [vmem:[#allocation6 + $0x2e8] sm:$0xff]
    %v1170 = vld [vmem:[#allocation6 + $0x2f0] sm:$0xff]
    %v1171 = vld [vmem:[#allocation6 + $0x2f8] sm:$0xff]
    %v1172 = vld [vmem:[#allocation6 + $0x300] sm:$0xff]
    %v1173 = vld [vmem:[#allocation6 + $0x308] sm:$0xff]
    %v1174 = vld [vmem:[#allocation6 + $0x310] sm:$0xff]
    %v1175 = vld [vmem:[#allocation6 + $0x318] sm:$0xff]
    %v1176 = vld [vmem:[#allocation6 + $0x320] sm:$0xff]
    %v1177 = vld [vmem:[#allocation6 + $0x328] sm:$0xff]
    %v1178 = vld [vmem:[#allocation6 + $0x330] sm:$0xff]
    %v1179 = vld [vmem:[#allocation6 + $0x338] sm:$0xff]
    %v1180 = vld [vmem:[#allocation6 + $0x340] sm:$0xff]
    %v1181 = vld [vmem:[#allocation6 + $0x348] sm:$0xff]
    %v1182 = vld [vmem:[#allocation6 + $0x350] sm:$0xff]
    %v1183 = vld [vmem:[#allocation6 + $0x358] sm:$0xff]
    %v1184 = vld [vmem:[#allocation6 + $0x360] sm:$0xff]
    %v1185 = vld [vmem:[#allocation6 + $0x368] sm:$0xff]
    %v1186 = vld [vmem:[#allocation6 + $0x370] sm:$0xff]
    %v1187 = vld [vmem:[#allocation6 + $0x378] sm:$0xff]
    %v1188 = vld [vmem:[#allocation6 + $0x380] sm:$0xff]
    %v1189 = vld [vmem:[#allocation6 + $0x388] sm:$0xff]
    %v1190 = vld [vmem:[#allocation6 + $0x390] sm:$0xff]
    %v1191 = vld [vmem:[#allocation6 + $0x398] sm:$0xff]
    %v1192 = vld [vmem:[#allocation6 + $0x3a0] sm:$0xff]
    %v1193 = vld [vmem:[#allocation6 + $0x3a8] sm:$0xff]
    %v1194 = vld [vmem:[#allocation6 + $0x3b0] sm:$0xff]
    %v1195 = vld [vmem:[#allocation6 + $0x3b8] sm:$0xff]
    %v1196 = vld [vmem:[#allocation6 + $0x3c0] sm:$0xff]
    %v1197 = vld [vmem:[#allocation6 + $0x3c8] sm:$0xff]
    %v1198 = vld [vmem:[#allocation6 + $0x3d0] sm:$0xff]
    %v1199 = vld [vmem:[#allocation6 + $0x3d8] sm:$0xff]
    %v1200 = vld [vmem:[#allocation6 + $0x3e0] sm:$0xff]
    %v1201 = vld [vmem:[#allocation6 + $0x3e8] sm:$0xff]
    %v1202 = vld [vmem:[#allocation6 + $0x3f0] sm:$0xff]
    %v1203 = vld [vmem:[#allocation6 + $0x3f8] sm:$0xff]
    %v1204 = vld [vmem:[#allocation6 + $0x400] sm:$0xff]
    %v1205 = vld [vmem:[#allocation6 + $0x408] sm:$0xff]
    %v1206 = vld [vmem:[#allocation6 + $0x410] sm:$0xff]
    %v1207 = vld [vmem:[#allocation6 + $0x418] sm:$0xff]
    %v1208 = vld [vmem:[#allocation6 + $0x420] sm:$0xff]
    %v1209 = vld [vmem:[#allocation6 + $0x428] sm:$0xff]
    %v1210 = vld [vmem:[#allocation6 + $0x430] sm:$0xff]
    %v1211 = vld [vmem:[#allocation6 + $0x438] sm:$0xff]
    %v1212 = vld [vmem:[#allocation6 + $0x440] sm:$0xff]
    %v1213 = vld [vmem:[#allocation6 + $0x448] sm:$0xff]
    %v1214 = vld [vmem:[#allocation6 + $0x450] sm:$0xff]
    %v1215 = vld [vmem:[#allocation6 + $0x458] sm:$0xff]
    %v1356 = vunpack.c.l.b16 %v1076
    %v1357 = vunpack.c.h.b16 %v1076
    %v1358 = vunpack.c.l.b16 %v1077
    %v1359 = vunpack.c.h.b16 %v1077
    %v1360 = vunpack.c.l.b16 %v1078
    %v1361 = vunpack.c.h.b16 %v1078
    %v1362 = vunpack.c.l.b16 %v1079
    %v1363 = vunpack.c.h.b16 %v1079
    %v1364 = vunpack.c.l.b16 %v1080
    %v1365 = vunpack.c.h.b16 %v1080
    %v1366 = vunpack.c.l.b16 %v1081
    %v1367 = vunpack.c.h.b16 %v1081
    %v1368 = vunpack.c.l.b16 %v1082
    %v1369 = vunpack.c.h.b16 %v1082
    %v1370 = vunpack.c.l.b16 %v1083
    %v1371 = vunpack.c.h.b16 %v1083
    %v1372 = vunpack.c.l.b16 %v1084
    %v1373 = vunpack.c.h.b16 %v1084
    %v1374 = vunpack.c.l.b16 %v1085
    %v1375 = vunpack.c.h.b16 %v1085
    %v1376 = vunpack.c.l.b16 %v1086
    %v1377 = vunpack.c.h.b16 %v1086
    %v1378 = vunpack.c.l.b16 %v1087
    %v1379 = vunpack.c.h.b16 %v1087
    %v1380 = vunpack.c.l.b16 %v1088
    %v1381 = vunpack.c.h.b16 %v1088
    %v1382 = vunpack.c.l.b16 %v1089
    %v1383 = vunpack.c.h.b16 %v1089
    %v1384 = vunpack.c.l.b16 %v1090
    %v1385 = vunpack.c.h.b16 %v1090
    %v1386 = vunpack.c.l.b16 %v1091
    %v1387 = vunpack.c.h.b16 %v1091
    %v1388 = vunpack.c.l.b16 %v1092
    %v1389 = vunpack.c.h.b16 %v1092
    %v1390 = vunpack.c.l.b16 %v1093
    %v1391 = vunpack.c.h.b16 %v1093
    %v1392 = vunpack.c.l.b16 %v1094
    %v1393 = vunpack.c.h.b16 %v1094
    %v1394 = vunpack.c.l.b16 %v1095
    %v1395 = vunpack.c.h.b16 %v1095
    %v1396 = vunpack.c.l.b16 %v1096
    %v1397 = vunpack.c.h.b16 %v1096
    %v1398 = vunpack.c.l.b16 %v1097
    %v1399 = vunpack.c.h.b16 %v1097
    %v1400 = vunpack.c.l.b16 %v1098
    %v1401 = vunpack.c.h.b16 %v1098
    %v1402 = vunpack.c.l.b16 %v1099
    %v1403 = vunpack.c.h.b16 %v1099
    %v1404 = vunpack.c.l.b16 %v1100
    %v1405 = vunpack.c.h.b16 %v1100
    %v1406 = vunpack.c.l.b16 %v1101
    %v1407 = vunpack.c.h.b16 %v1101
    %v1408 = vunpack.c.l.b16 %v1102
    %v1409 = vunpack.c.h.b16 %v1102
    %v1410 = vunpack.c.l.b16 %v1103
    %v1411 = vunpack.c.h.b16 %v1103
    %v1412 = vunpack.c.l.b16 %v1104
    %v1413 = vunpack.c.h.b16 %v1104
    %v1414 = vunpack.c.l.b16 %v1105
    %v1415 = vunpack.c.h.b16 %v1105
    %v1416 = vunpack.c.l.b16 %v1106
    %v1417 = vunpack.c.h.b16 %v1106
    %v1418 = vunpack.c.l.b16 %v1107
    %v1419 = vunpack.c.h.b16 %v1107
    %v1420 = vunpack.c.l.b16 %v1108
    %v1421 = vunpack.c.h.b16 %v1108
    %v1422 = vunpack.c.l.b16 %v1109
    %v1423 = vunpack.c.h.b16 %v1109
    %v1424 = vunpack.c.l.b16 %v1110
    %v1425 = vunpack.c.h.b16 %v1110
    %v1426 = vunpack.c.l.b16 %v1111
    %v1427 = vunpack.c.h.b16 %v1111
    %v1428 = vunpack.c.l.b16 %v1112
    %v1429 = vunpack.c.h.b16 %v1112
    %v1430 = vunpack.c.l.b16 %v1113
    %v1431 = vunpack.c.h.b16 %v1113
    %v1432 = vunpack.c.l.b16 %v1114
    %v1433 = vunpack.c.h.b16 %v1114
    %v1434 = vunpack.c.l.b16 %v1115
    %v1435 = vunpack.c.h.b16 %v1115
    %v1436 = vunpack.c.l.b16 %v1116
    %v1437 = vunpack.c.h.b16 %v1116
    %v1438 = vunpack.c.l.b16 %v1117
    %v1439 = vunpack.c.h.b16 %v1117
    %v1440 = vunpack.c.l.b16 %v1118
    %v1441 = vunpack.c.h.b16 %v1118
    %v1442 = vunpack.c.l.b16 %v1119
    %v1443 = vunpack.c.h.b16 %v1119
    %v1444 = vunpack.c.l.b16 %v1120
    %v1445 = vunpack.c.h.b16 %v1120
    %v1446 = vunpack.c.l.b16 %v1121
    %v1447 = vunpack.c.h.b16 %v1121
    %v1448 = vunpack.c.l.b16 %v1122
    %v1449 = vunpack.c.h.b16 %v1122
    %v1450 = vunpack.c.l.b16 %v1123
    %v1451 = vunpack.c.h.b16 %v1123
    %v1452 = vunpack.c.l.b16 %v1124
    %v1453 = vunpack.c.h.b16 %v1124
    %v1454 = vunpack.c.l.b16 %v1125
    %v1455 = vunpack.c.h.b16 %v1125
    %v1456 = vunpack.c.l.b16 %v1126
    %v1457 = vunpack.c.h.b16 %v1126
    %v1458 = vunpack.c.l.b16 %v1127
    %v1459 = vunpack.c.h.b16 %v1127
    %v1460 = vunpack.c.l.b16 %v1128
    %v1461 = vunpack.c.h.b16 %v1128
    %v1462 = vunpack.c.l.b16 %v1129
    %v1463 = vunpack.c.h.b16 %v1129
    %v1464 = vunpack.c.l.b16 %v1130
    %v1465 = vunpack.c.h.b16 %v1130
    %v1466 = vunpack.c.l.b16 %v1131
    %v1467 = vunpack.c.h.b16 %v1131
    %v1468 = vunpack.c.l.b16 %v1132
    %v1469 = vunpack.c.h.b16 %v1132
    %v1470 = vunpack.c.l.b16 %v1133
    %v1471 = vunpack.c.h.b16 %v1133
    %v1472 = vunpack.c.l.b16 %v1134
    %v1473 = vunpack.c.h.b16 %v1134
    %v1474 = vunpack.c.l.b16 %v1135
    %v1475 = vunpack.c.h.b16 %v1135
    %v1476 = vunpack.c.l.b16 %v1136
    %v1477 = vunpack.c.h.b16 %v1136
    %v1478 = vunpack.c.l.b16 %v1137
    %v1479 = vunpack.c.h.b16 %v1137
    %v1480 = vunpack.c.l.b16 %v1138
    %v1481 = vunpack.c.h.b16 %v1138
    %v1482 = vunpack.c.l.b16 %v1139
    %v1483 = vunpack.c.h.b16 %v1139
    %v1484 = vunpack.c.l.b16 %v1140
    %v1485 = vunpack.c.h.b16 %v1140
    %v1486 = vunpack.c.l.b16 %v1141
    %v1487 = vunpack.c.h.b16 %v1141
    %v1488 = vunpack.c.l.b16 %v1142
    %v1489 = vunpack.c.h.b16 %v1142
    %v1490 = vunpack.c.l.b16 %v1143
    %v1491 = vunpack.c.h.b16 %v1143
    %v1492 = vunpack.c.l.b16 %v1144
    %v1493 = vunpack.c.h.b16 %v1144
    %v1494 = vunpack.c.l.b16 %v1145
    %v1495 = vunpack.c.h.b16 %v1145
    %v1496 = vunpack.c.l.b16 %v1146
    %v1497 = vunpack.c.h.b16 %v1146
    %v1498 = vunpack.c.l.b16 %v1147
    %v1499 = vunpack.c.h.b16 %v1147
    %v1500 = vunpack.c.l.b16 %v1148
    %v1501 = vunpack.c.h.b16 %v1148
    %v1502 = vunpack.c.l.b16 %v1149
    %v1503 = vunpack.c.h.b16 %v1149
    %v1504 = vunpack.c.l.b16 %v1150
    %v1505 = vunpack.c.h.b16 %v1150
    %v1506 = vunpack.c.l.b16 %v1151
    %v1507 = vunpack.c.h.b16 %v1151
    %v1508 = vunpack.c.l.b16 %v1152
    %v1509 = vunpack.c.h.b16 %v1152
    %v1510 = vunpack.c.l.b16 %v1153
    %v1511 = vunpack.c.h.b16 %v1153
    %v1512 = vunpack.c.l.b16 %v1154
    %v1513 = vunpack.c.h.b16 %v1154
    %v1514 = vunpack.c.l.b16 %v1155
    %v1515 = vunpack.c.h.b16 %v1155
    %v1516 = vunpack.c.l.b16 %v1156
    %v1517 = vunpack.c.h.b16 %v1156
    %v1518 = vunpack.c.l.b16 %v1157
    %v1519 = vunpack.c.h.b16 %v1157
    %v1520 = vunpack.c.l.b16 %v1158
    %v1521 = vunpack.c.h.b16 %v1158
    %v1522 = vunpack.c.l.b16 %v1159
    %v1523 = vunpack.c.h.b16 %v1159
    %v1524 = vunpack.c.l.b16 %v1160
    %v1525 = vunpack.c.h.b16 %v1160
    %v1526 = vunpack.c.l.b16 %v1161
    %v1527 = vunpack.c.h.b16 %v1161
    %v1528 = vunpack.c.l.b16 %v1162
    %v1529 = vunpack.c.h.b16 %v1162
    %v1530 = vunpack.c.l.b16 %v1163
    %v1531 = vunpack.c.h.b16 %v1163
    %v1532 = vunpack.c.l.b16 %v1164
    %v1533 = vunpack.c.h.b16 %v1164
    %v1534 = vunpack.c.l.b16 %v1165
    %v1535 = vunpack.c.h.b16 %v1165
    %v1536 = vunpack.c.l.b16 %v1166
    %v1537 = vunpack.c.h.b16 %v1166
    %v1538 = vunpack.c.l.b16 %v1167
    %v1539 = vunpack.c.h.b16 %v1167
    %v1540 = vunpack.c.l.b16 %v1168
    %v1541 = vunpack.c.h.b16 %v1168
    %v1542 = vunpack.c.l.b16 %v1169
    %v1543 = vunpack.c.h.b16 %v1169
    %v1544 = vunpack.c.l.b16 %v1170
    %v1545 = vunpack.c.h.b16 %v1170
    %v1546 = vunpack.c.l.b16 %v1171
    %v1547 = vunpack.c.h.b16 %v1171
    %v1548 = vunpack.c.l.b16 %v1172
    %v1549 = vunpack.c.h.b16 %v1172
    %v1550 = vunpack.c.l.b16 %v1173
    %v1551 = vunpack.c.h.b16 %v1173
    %v1552 = vunpack.c.l.b16 %v1174
    %v1553 = vunpack.c.h.b16 %v1174
    %v1554 = vunpack.c.l.b16 %v1175
    %v1555 = vunpack.c.h.b16 %v1175
    %v1556 = vunpack.c.l.b16 %v1176
    %v1557 = vunpack.c.h.b16 %v1176
    %v1558 = vunpack.c.l.b16 %v1177
    %v1559 = vunpack.c.h.b16 %v1177
    %v1560 = vunpack.c.l.b16 %v1178
    %v1561 = vunpack.c.h.b16 %v1178
    %v1562 = vunpack.c.l.b16 %v1179
    %v1563 = vunpack.c.h.b16 %v1179
    %v1564 = vunpack.c.l.b16 %v1180
    %v1565 = vunpack.c.h.b16 %v1180
    %v1566 = vunpack.c.l.b16 %v1181
    %v1567 = vunpack.c.h.b16 %v1181
    %v1568 = vunpack.c.l.b16 %v1182
    %v1569 = vunpack.c.h.b16 %v1182
    %v1570 = vunpack.c.l.b16 %v1183
    %v1571 = vunpack.c.h.b16 %v1183
    %v1572 = vunpack.c.l.b16 %v1184
    %v1573 = vunpack.c.h.b16 %v1184
    %v1574 = vunpack.c.l.b16 %v1185
    %v1575 = vunpack.c.h.b16 %v1185
    %v1576 = vunpack.c.l.b16 %v1186
    %v1577 = vunpack.c.h.b16 %v1186
    %v1578 = vunpack.c.l.b16 %v1187
    %v1579 = vunpack.c.h.b16 %v1187
    %v1580 = vunpack.c.l.b16 %v1188
    %v1581 = vunpack.c.h.b16 %v1188
    %v1582 = vunpack.c.l.b16 %v1189
    %v1583 = vunpack.c.h.b16 %v1189
    %v1584 = vunpack.c.l.b16 %v1190
    %v1585 = vunpack.c.h.b16 %v1190
    %v1586 = vunpack.c.l.b16 %v1191
    %v1587 = vunpack.c.h.b16 %v1191
    %v1588 = vunpack.c.l.b16 %v1192
    %v1589 = vunpack.c.h.b16 %v1192
    %v1590 = vunpack.c.l.b16 %v1193
    %v1591 = vunpack.c.h.b16 %v1193
    %v1592 = vunpack.c.l.b16 %v1194
    %v1593 = vunpack.c.h.b16 %v1194
    %v1594 = vunpack.c.l.b16 %v1195
    %v1595 = vunpack.c.h.b16 %v1195
    %v1596 = vunpack.c.l.b16 %v1196
    %v1597 = vunpack.c.h.b16 %v1196
    %v1598 = vunpack.c.l.b16 %v1197
    %v1599 = vunpack.c.h.b16 %v1197
    %v1600 = vunpack.c.l.b16 %v1198
    %v1601 = vunpack.c.h.b16 %v1198
    %v1602 = vunpack.c.l.b16 %v1199
    %v1603 = vunpack.c.h.b16 %v1199
    %v1604 = vunpack.c.l.b16 %v1200
    %v1605 = vunpack.c.h.b16 %v1200
    %v1606 = vunpack.c.l.b16 %v1201
    %v1607 = vunpack.c.h.b16 %v1201
    %v1608 = vunpack.c.l.b16 %v1202
    %v1609 = vunpack.c.h.b16 %v1202
    %v1610 = vunpack.c.l.b16 %v1203
    %v1611 = vunpack.c.h.b16 %v1203
    %v1612 = vunpack.c.l.b16 %v1204
    %v1613 = vunpack.c.h.b16 %v1204
    %v1614 = vunpack.c.l.b16 %v1205
    %v1615 = vunpack.c.h.b16 %v1205
    %v1616 = vunpack.c.l.b16 %v1206
    %v1617 = vunpack.c.h.b16 %v1206
    %v1618 = vunpack.c.l.b16 %v1207
    %v1619 = vunpack.c.h.b16 %v1207
    %v1620 = vunpack.c.l.b16 %v1208
    %v1621 = vunpack.c.h.b16 %v1208
    %v1622 = vunpack.c.l.b16 %v1209
    %v1623 = vunpack.c.h.b16 %v1209
    %v1624 = vunpack.c.l.b16 %v1210
    %v1625 = vunpack.c.h.b16 %v1210
    %v1626 = vunpack.c.l.b16 %v1211
    %v1627 = vunpack.c.h.b16 %v1211
    %v1628 = vunpack.c.l.b16 %v1212
    %v1629 = vunpack.c.h.b16 %v1212
    %v1630 = vunpack.c.l.b16 %v1213
    %v1631 = vunpack.c.h.b16 %v1213
    %v1632 = vunpack.c.l.b16 %v1214
    %v1633 = vunpack.c.h.b16 %v1214
    %v1634 = vunpack.c.l.b16 %v1215
    %v1635 = vunpack.c.h.b16 %v1215
    %v1636 = vpack.c.b16 %v1370, %v1356
    %v1637 = vpack.c.b16 %v1371, %v1357
    %v1638 = vpack.c.b16 %v1372, %v1358
    %v1639 = vpack.c.b16 %v1373, %v1359
    %v1640 = vpack.c.b16 %v1374, %v1360
    %v1641 = vpack.c.b16 %v1375, %v1361
    %v1642 = vpack.c.b16 %v1376, %v1362
    %v1643 = vpack.c.b16 %v1377, %v1363
    %v1644 = vpack.c.b16 %v1378, %v1364
    %v1645 = vpack.c.b16 %v1379, %v1365
    %v1646 = vpack.c.b16 %v1380, %v1366
    %v1647 = vpack.c.b16 %v1381, %v1367
    %v1648 = vpack.c.b16 %v1382, %v1368
    %v1649 = vpack.c.b16 %v1383, %v1369
    %v1650 = vpack.c.b16 %v1398, %v1384
    %v1651 = vpack.c.b16 %v1399, %v1385
    %v1652 = vpack.c.b16 %v1400, %v1386
    %v1653 = vpack.c.b16 %v1401, %v1387
    %v1654 = vpack.c.b16 %v1402, %v1388
    %v1655 = vpack.c.b16 %v1403, %v1389
    %v1656 = vpack.c.b16 %v1404, %v1390
    %v1657 = vpack.c.b16 %v1405, %v1391
    %v1658 = vpack.c.b16 %v1406, %v1392
    %v1659 = vpack.c.b16 %v1407, %v1393
    %v1660 = vpack.c.b16 %v1408, %v1394
    %v1661 = vpack.c.b16 %v1409, %v1395
    %v1662 = vpack.c.b16 %v1410, %v1396
    %v1663 = vpack.c.b16 %v1411, %v1397
    %v1664 = vpack.c.b16 %v1426, %v1412
    %v1665 = vpack.c.b16 %v1427, %v1413
    %v1666 = vpack.c.b16 %v1428, %v1414
    %v1667 = vpack.c.b16 %v1429, %v1415
    %v1668 = vpack.c.b16 %v1430, %v1416
    %v1669 = vpack.c.b16 %v1431, %v1417
    %v1670 = vpack.c.b16 %v1432, %v1418
    %v1671 = vpack.c.b16 %v1433, %v1419
    %v1672 = vpack.c.b16 %v1434, %v1420
    %v1673 = vpack.c.b16 %v1435, %v1421
    %v1674 = vpack.c.b16 %v1436, %v1422
    %v1675 = vpack.c.b16 %v1437, %v1423
    %v1676 = vpack.c.b16 %v1438, %v1424
    %v1677 = vpack.c.b16 %v1439, %v1425
    %v1678 = vpack.c.b16 %v1454, %v1440
    %v1679 = vpack.c.b16 %v1455, %v1441
    %v1680 = vpack.c.b16 %v1456, %v1442
    %v1681 = vpack.c.b16 %v1457, %v1443
    %v1682 = vpack.c.b16 %v1458, %v1444
    %v1683 = vpack.c.b16 %v1459, %v1445
    %v1684 = vpack.c.b16 %v1460, %v1446
    %v1685 = vpack.c.b16 %v1461, %v1447
    %v1686 = vpack.c.b16 %v1462, %v1448
    %v1687 = vpack.c.b16 %v1463, %v1449
    %v1688 = vpack.c.b16 %v1464, %v1450
    %v1689 = vpack.c.b16 %v1465, %v1451
    %v1690 = vpack.c.b16 %v1466, %v1452
    %v1691 = vpack.c.b16 %v1467, %v1453
    %v1692 = vpack.c.b16 %v1482, %v1468
    %v1693 = vpack.c.b16 %v1483, %v1469
    %v1694 = vpack.c.b16 %v1484, %v1470
    %v1695 = vpack.c.b16 %v1485, %v1471
    %v1696 = vpack.c.b16 %v1486, %v1472
    %v1697 = vpack.c.b16 %v1487, %v1473
    %v1698 = vpack.c.b16 %v1488, %v1474
    %v1699 = vpack.c.b16 %v1489, %v1475
    %v1700 = vpack.c.b16 %v1490, %v1476
    %v1701 = vpack.c.b16 %v1491, %v1477
    %v1702 = vpack.c.b16 %v1492, %v1478
    %v1703 = vpack.c.b16 %v1493, %v1479
    %v1704 = vpack.c.b16 %v1494, %v1480
    %v1705 = vpack.c.b16 %v1495, %v1481
    %v1706 = vpack.c.b16 %v1510, %v1496
    %v1707 = vpack.c.b16 %v1511, %v1497
    %v1708 = vpack.c.b16 %v1512, %v1498
    %v1709 = vpack.c.b16 %v1513, %v1499
    %v1710 = vpack.c.b16 %v1514, %v1500
    %v1711 = vpack.c.b16 %v1515, %v1501
    %v1712 = vpack.c.b16 %v1516, %v1502
    %v1713 = vpack.c.b16 %v1517, %v1503
    %v1714 = vpack.c.b16 %v1518, %v1504
    %v1715 = vpack.c.b16 %v1519, %v1505
    %v1716 = vpack.c.b16 %v1520, %v1506
    %v1717 = vpack.c.b16 %v1521, %v1507
    %v1718 = vpack.c.b16 %v1522, %v1508
    %v1719 = vpack.c.b16 %v1523, %v1509
    %v1720 = vpack.c.b16 %v1538, %v1524
    %v1721 = vpack.c.b16 %v1539, %v1525
    %v1722 = vpack.c.b16 %v1540, %v1526
    %v1723 = vpack.c.b16 %v1541, %v1527
    %v1724 = vpack.c.b16 %v1542, %v1528
    %v1725 = vpack.c.b16 %v1543, %v1529
    %v1726 = vpack.c.b16 %v1544, %v1530
    %v1727 = vpack.c.b16 %v1545, %v1531
    %v1728 = vpack.c.b16 %v1546, %v1532
    %v1729 = vpack.c.b16 %v1547, %v1533
    %v1730 = vpack.c.b16 %v1548, %v1534
    %v1731 = vpack.c.b16 %v1549, %v1535
    %v1732 = vpack.c.b16 %v1550, %v1536
    %v1733 = vpack.c.b16 %v1551, %v1537
    %v1734 = vpack.c.b16 %v1566, %v1552
    %v1735 = vpack.c.b16 %v1567, %v1553
    %v1736 = vpack.c.b16 %v1568, %v1554
    %v1737 = vpack.c.b16 %v1569, %v1555
    %v1738 = vpack.c.b16 %v1570, %v1556
    %v1739 = vpack.c.b16 %v1571, %v1557
    %v1740 = vpack.c.b16 %v1572, %v1558
    %v1741 = vpack.c.b16 %v1573, %v1559
    %v1742 = vpack.c.b16 %v1574, %v1560
    %v1743 = vpack.c.b16 %v1575, %v1561
    %v1744 = vpack.c.b16 %v1576, %v1562
    %v1745 = vpack.c.b16 %v1577, %v1563
    %v1746 = vpack.c.b16 %v1578, %v1564
    %v1747 = vpack.c.b16 %v1579, %v1565
    %v1748 = vpack.c.b16 %v1594, %v1580
    %v1749 = vpack.c.b16 %v1595, %v1581
    %v1750 = vpack.c.b16 %v1596, %v1582
    %v1751 = vpack.c.b16 %v1597, %v1583
    %v1752 = vpack.c.b16 %v1598, %v1584
    %v1753 = vpack.c.b16 %v1599, %v1585
    %v1754 = vpack.c.b16 %v1600, %v1586
    %v1755 = vpack.c.b16 %v1601, %v1587
    %v1756 = vpack.c.b16 %v1602, %v1588
    %v1757 = vpack.c.b16 %v1603, %v1589
    %v1758 = vpack.c.b16 %v1604, %v1590
    %v1759 = vpack.c.b16 %v1605, %v1591
    %v1760 = vpack.c.b16 %v1606, %v1592
    %v1761 = vpack.c.b16 %v1607, %v1593
    %v1762 = vpack.c.b16 %v1622, %v1608
    %v1763 = vpack.c.b16 %v1623, %v1609
    %v1764 = vpack.c.b16 %v1624, %v1610
    %v1765 = vpack.c.b16 %v1625, %v1611
    %v1766 = vpack.c.b16 %v1626, %v1612
    %v1767 = vpack.c.b16 %v1627, %v1613
    %v1768 = vpack.c.b16 %v1628, %v1614
    %v1769 = vpack.c.b16 %v1629, %v1615
    %v1770 = vpack.c.b16 %v1630, %v1616
    %v1771 = vpack.c.b16 %v1631, %v1617
    %v1772 = vpack.c.b16 %v1632, %v1618
    %v1773 = vpack.c.b16 %v1633, %v1619
    %v1774 = vpack.c.b16 %v1634, %v1620
    %v1775 = vpack.c.b16 %v1635, %v1621
    %1916 = vmatpush.bf16.msra.mxu0 %v1734
    %1917 = vmatpush.bf16.msra.mxu0 %v1720
    %1918 = vmatpush.bf16.msra.mxu0 %v1706
    %1919 = vmatpush.bf16.msra.mxu0 %v1692
    %1920 = vmatpush.bf16.msra.mxu0 %v1678
    %1921 = vmatpush.bf16.msra.mxu0 %v1664
    %1922 = vmatpush.bf16.msra.mxu0 %v1650
    %1923 = vmatpush.bf16.msra.mxu0 %v1636
    %1924 = vmatmul.bf16.gmra.mxu0 %v109
    %v1925 = vpop.f32.mrf.mxu0
    %v1926 = vadd.f32 0.0, %v1925
    %v1927 = vpop.f32.mrf.mxu0
    %1928 = vdwg.mxu0
    %1929 = vmatpush.bf16.msra.mxu0 0
    %1930 = vmatpush.bf16.msra.mxu0 0
    %1931 = vmatpush.bf16.msra.mxu0 0
    %1932 = vmatpush.bf16.msra.mxu0 0
    %1933 = vmatpush.bf16.msra.mxu0 0
    %1934 = vmatpush.bf16.msra.mxu0 0
    %1935 = vmatpush.bf16.msra.mxu0 %v1762
    %1936 = vmatpush.bf16.msra.mxu0 %v1748
    %1937 = vmatmul.bf16.gmra.mxu0 %v233
    %v1938 = vpop.f32.mrf.mxu0
    %v1939 = vadd.f32 %v1926, %v1938
    %v1940 = vpop.f32.mrf.mxu0
    %1941 = vdwg.mxu0
    %1942 = vmatpush.bf16.msra.mxu0 %v1735
    %1943 = vmatpush.bf16.msra.mxu0 %v1721
    %1944 = vmatpush.bf16.msra.mxu0 %v1707
    %1945 = vmatpush.bf16.msra.mxu0 %v1693
    %1946 = vmatpush.bf16.msra.mxu0 %v1679
    %1947 = vmatpush.bf16.msra.mxu0 %v1665
    %1948 = vmatpush.bf16.msra.mxu0 %v1651
    %1949 = vmatpush.bf16.msra.mxu0 %v1637
    %1950 = vmatmul.bf16.gmra.mxu0 %v109
    %v1951 = vpop.f32.mrf.mxu0
    %v1952 = vadd.f32 0.0, %v1951
    %v1953 = vpop.f32.mrf.mxu0
    %1954 = vdwg.mxu0
    %1955 = vmatpush.bf16.msra.mxu0 0
    %1956 = vmatpush.bf16.msra.mxu0 0
    %1957 = vmatpush.bf16.msra.mxu0 0
    %1958 = vmatpush.bf16.msra.mxu0 0
    %1959 = vmatpush.bf16.msra.mxu0 0
    %1960 = vmatpush.bf16.msra.mxu0 0
    %1961 = vmatpush.bf16.msra.mxu0 %v1763
    %1962 = vmatpush.bf16.msra.mxu0 %v1749
    %1963 = vmatmul.bf16.gmra.mxu0 %v233
    %v1964 = vpop.f32.mrf.mxu0
    %v1965 = vadd.f32 %v1952, %v1964
    %v1966 = vpop.f32.mrf.mxu0
    %1967 = vdwg.mxu0
    %1968 = vmatpush.bf16.msra.mxu0 %v1736
    %1969 = vmatpush.bf16.msra.mxu0 %v1722
    %1970 = vmatpush.bf16.msra.mxu0 %v1708
    %1971 = vmatpush.bf16.msra.mxu0 %v1694
    %1972 = vmatpush.bf16.msra.mxu0 %v1680
    %1973 = vmatpush.bf16.msra.mxu0 %v1666
    %1974 = vmatpush.bf16.msra.mxu0 %v1652
    %1975 = vmatpush.bf16.msra.mxu0 %v1638
    %1976 = vmatmul.bf16.gmra.mxu0 %v109
    %v1977 = vpop.f32.mrf.mxu0
    %v1978 = vadd.f32 0.0, %v1977
    %v1979 = vpop.f32.mrf.mxu0
    %1980 = vdwg.mxu0
    %1981 = vmatpush.bf16.msra.mxu0 0
    %1982 = vmatpush.bf16.msra.mxu0 0
    %1983 = vmatpush.bf16.msra.mxu0 0
    %1984 = vmatpush.bf16.msra.mxu0 0
    %1985 = vmatpush.bf16.msra.mxu0 0
    %1986 = vmatpush.bf16.msra.mxu0 0
    %1987 = vmatpush.bf16.msra.mxu0 %v1764
    %1988 = vmatpush.bf16.msra.mxu0 %v1750
    %1989 = vmatmul.bf16.gmra.mxu0 %v233
    %v1990 = vpop.f32.mrf.mxu0
    %v1991 = vadd.f32 %v1978, %v1990
    %v1992 = vpop.f32.mrf.mxu0
    %1993 = vdwg.mxu0
    %1994 = vmatpush.bf16.msra.mxu0 %v1737
    %1995 = vmatpush.bf16.msra.mxu0 %v1723
    %1996 = vmatpush.bf16.msra.mxu0 %v1709
    %1997 = vmatpush.bf16.msra.mxu0 %v1695
    %1998 = vmatpush.bf16.msra.mxu0 %v1681
    %1999 = vmatpush.bf16.msra.mxu0 %v1667
    %2000 = vmatpush.bf16.msra.mxu0 %v1653
    %2001 = vmatpush.bf16.msra.mxu0 %v1639
    %2002 = vmatmul.bf16.gmra.mxu0 %v109
    %v2003 = vpop.f32.mrf.mxu0
    %v2004 = vadd.f32 0.0, %v2003
    %v2005 = vpop.f32.mrf.mxu0
    %2006 = vdwg.mxu0
    %2007 = vmatpush.bf16.msra.mxu0 0
    %2008 = vmatpush.bf16.msra.mxu0 0
    %2009 = vmatpush.bf16.msra.mxu0 0
    %2010 = vmatpush.bf16.msra.mxu0 0
    %2011 = vmatpush.bf16.msra.mxu0 0
    %2012 = vmatpush.bf16.msra.mxu0 0
    %2013 = vmatpush.bf16.msra.mxu0 %v1765
    %2014 = vmatpush.bf16.msra.mxu0 %v1751
    %2015 = vmatmul.bf16.gmra.mxu0 %v233
    %v2016 = vpop.f32.mrf.mxu0
    %v2017 = vadd.f32 %v2004, %v2016
    %v2018 = vpop.f32.mrf.mxu0
    %2019 = vdwg.mxu0
    %2020 = vmatpush.bf16.msra.mxu0 %v1738
    %2021 = vmatpush.bf16.msra.mxu0 %v1724
    %2022 = vmatpush.bf16.msra.mxu0 %v1710
    %2023 = vmatpush.bf16.msra.mxu0 %v1696
    %2024 = vmatpush.bf16.msra.mxu0 %v1682
    %2025 = vmatpush.bf16.msra.mxu0 %v1668
    %2026 = vmatpush.bf16.msra.mxu0 %v1654
    %2027 = vmatpush.bf16.msra.mxu0 %v1640
    %2028 = vmatmul.bf16.gmra.mxu0 %v109
    %v2029 = vpop.f32.mrf.mxu0
    %v2030 = vadd.f32 0.0, %v2029
    %v2031 = vpop.f32.mrf.mxu0
    %2032 = vdwg.mxu0
    %2033 = vmatpush.bf16.msra.mxu0 0
    %2034 = vmatpush.bf16.msra.mxu0 0
    %2035 = vmatpush.bf16.msra.mxu0 0
    %2036 = vmatpush.bf16.msra.mxu0 0
    %2037 = vmatpush.bf16.msra.mxu0 0
    %2038 = vmatpush.bf16.msra.mxu0 0
    %2039 = vmatpush.bf16.msra.mxu0 %v1766
    %2040 = vmatpush.bf16.msra.mxu0 %v1752
    %2041 = vmatmul.bf16.gmra.mxu0 %v233
    %v2042 = vpop.f32.mrf.mxu0
    %v2043 = vadd.f32 %v2030, %v2042
    %v2044 = vpop.f32.mrf.mxu0
    %2045 = vdwg.mxu0
    %2046 = vmatpush.bf16.msra.mxu0 %v1739
    %2047 = vmatpush.bf16.msra.mxu0 %v1725
    %2048 = vmatpush.bf16.msra.mxu0 %v1711
    %2049 = vmatpush.bf16.msra.mxu0 %v1697
    %2050 = vmatpush.bf16.msra.mxu0 %v1683
    %2051 = vmatpush.bf16.msra.mxu0 %v1669
    %2052 = vmatpush.bf16.msra.mxu0 %v1655
    %2053 = vmatpush.bf16.msra.mxu0 %v1641
    %2054 = vmatmul.bf16.gmra.mxu0 %v109
    %v2055 = vpop.f32.mrf.mxu0
    %v2056 = vadd.f32 0.0, %v2055
    %v2057 = vpop.f32.mrf.mxu0
    %2058 = vdwg.mxu0
    %2059 = vmatpush.bf16.msra.mxu0 0
    %2060 = vmatpush.bf16.msra.mxu0 0
    %2061 = vmatpush.bf16.msra.mxu0 0
    %2062 = vmatpush.bf16.msra.mxu0 0
    %2063 = vmatpush.bf16.msra.mxu0 0
    %2064 = vmatpush.bf16.msra.mxu0 0
    %2065 = vmatpush.bf16.msra.mxu0 %v1767
    %2066 = vmatpush.bf16.msra.mxu0 %v1753
    %2067 = vmatmul.bf16.gmra.mxu0 %v233
    %v2068 = vpop.f32.mrf.mxu0
    %v2069 = vadd.f32 %v2056, %v2068
    %v2070 = vpop.f32.mrf.mxu0
    %2071 = vdwg.mxu0
    %2072 = vmatpush.bf16.msra.mxu0 %v1740
    %2073 = vmatpush.bf16.msra.mxu0 %v1726
    %2074 = vmatpush.bf16.msra.mxu0 %v1712
    %2075 = vmatpush.bf16.msra.mxu0 %v1698
    %2076 = vmatpush.bf16.msra.mxu0 %v1684
    %2077 = vmatpush.bf16.msra.mxu0 %v1670
    %2078 = vmatpush.bf16.msra.mxu0 %v1656
    %2079 = vmatpush.bf16.msra.mxu0 %v1642
    %2080 = vmatmul.bf16.gmra.mxu0 %v109
    %v2081 = vpop.f32.mrf.mxu0
    %v2082 = vadd.f32 0.0, %v2081
    %v2083 = vpop.f32.mrf.mxu0
    %2084 = vdwg.mxu0
    %2085 = vmatpush.bf16.msra.mxu0 0
    %2086 = vmatpush.bf16.msra.mxu0 0
    %2087 = vmatpush.bf16.msra.mxu0 0
    %2088 = vmatpush.bf16.msra.mxu0 0
    %2089 = vmatpush.bf16.msra.mxu0 0
    %2090 = vmatpush.bf16.msra.mxu0 0
    %2091 = vmatpush.bf16.msra.mxu0 %v1768
    %2092 = vmatpush.bf16.msra.mxu0 %v1754
    %2093 = vmatmul.bf16.gmra.mxu0 %v233
    %v2094 = vpop.f32.mrf.mxu0
    %v2095 = vadd.f32 %v2082, %v2094
    %v2096 = vpop.f32.mrf.mxu0
    %2097 = vdwg.mxu0
    %2098 = vmatpush.bf16.msra.mxu0 %v1741
    %2099 = vmatpush.bf16.msra.mxu0 %v1727
    %2100 = vmatpush.bf16.msra.mxu0 %v1713
    %2101 = vmatpush.bf16.msra.mxu0 %v1699
    %2102 = vmatpush.bf16.msra.mxu0 %v1685
    %2103 = vmatpush.bf16.msra.mxu0 %v1671
    %2104 = vmatpush.bf16.msra.mxu0 %v1657
    %2105 = vmatpush.bf16.msra.mxu0 %v1643
    %2106 = vmatmul.bf16.gmra.mxu0 %v109
    %v2107 = vpop.f32.mrf.mxu0
    %v2108 = vadd.f32 0.0, %v2107
    %v2109 = vpop.f32.mrf.mxu0
    %2110 = vdwg.mxu0
    %2111 = vmatpush.bf16.msra.mxu0 0
    %2112 = vmatpush.bf16.msra.mxu0 0
    %2113 = vmatpush.bf16.msra.mxu0 0
    %2114 = vmatpush.bf16.msra.mxu0 0
    %2115 = vmatpush.bf16.msra.mxu0 0
    %2116 = vmatpush.bf16.msra.mxu0 0
    %2117 = vmatpush.bf16.msra.mxu0 %v1769
    %2118 = vmatpush.bf16.msra.mxu0 %v1755
    %2119 = vmatmul.bf16.gmra.mxu0 %v233
    %v2120 = vpop.f32.mrf.mxu0
    %v2121 = vadd.f32 %v2108, %v2120
    %v2122 = vpop.f32.mrf.mxu0
    %2123 = vdwg.mxu0
    %2124 = vmatpush.bf16.msra.mxu0 %v1742
    %2125 = vmatpush.bf16.msra.mxu0 %v1728
    %2126 = vmatpush.bf16.msra.mxu0 %v1714
    %2127 = vmatpush.bf16.msra.mxu0 %v1700
    %2128 = vmatpush.bf16.msra.mxu0 %v1686
    %2129 = vmatpush.bf16.msra.mxu0 %v1672
    %2130 = vmatpush.bf16.msra.mxu0 %v1658
    %2131 = vmatpush.bf16.msra.mxu0 %v1644
    %2132 = vmatmul.bf16.gmra.mxu0 %v109
    %v2133 = vpop.f32.mrf.mxu0
    %v2134 = vadd.f32 0.0, %v2133
    %v2135 = vpop.f32.mrf.mxu0
    %2136 = vdwg.mxu0
    %2137 = vmatpush.bf16.msra.mxu0 0
    %2138 = vmatpush.bf16.msra.mxu0 0
    %2139 = vmatpush.bf16.msra.mxu0 0
    %2140 = vmatpush.bf16.msra.mxu0 0
    %2141 = vmatpush.bf16.msra.mxu0 0
    %2142 = vmatpush.bf16.msra.mxu0 0
    %2143 = vmatpush.bf16.msra.mxu0 %v1770
    %2144 = vmatpush.bf16.msra.mxu0 %v1756
    %2145 = vmatmul.bf16.gmra.mxu0 %v233
    %v2146 = vpop.f32.mrf.mxu0
    %v2147 = vadd.f32 %v2134, %v2146
    %v2148 = vpop.f32.mrf.mxu0
    %2149 = vdwg.mxu0
    %2150 = vmatpush.bf16.msra.mxu0 %v1743
    %2151 = vmatpush.bf16.msra.mxu0 %v1729
    %2152 = vmatpush.bf16.msra.mxu0 %v1715
    %2153 = vmatpush.bf16.msra.mxu0 %v1701
    %2154 = vmatpush.bf16.msra.mxu0 %v1687
    %2155 = vmatpush.bf16.msra.mxu0 %v1673
    %2156 = vmatpush.bf16.msra.mxu0 %v1659
    %2157 = vmatpush.bf16.msra.mxu0 %v1645
    %2158 = vmatmul.bf16.gmra.mxu0 %v109
    %v2159 = vpop.f32.mrf.mxu0
    %v2160 = vadd.f32 0.0, %v2159
    %v2161 = vpop.f32.mrf.mxu0
    %2162 = vdwg.mxu0
    %2163 = vmatpush.bf16.msra.mxu0 0
    %2164 = vmatpush.bf16.msra.mxu0 0
    %2165 = vmatpush.bf16.msra.mxu0 0
    %2166 = vmatpush.bf16.msra.mxu0 0
    %2167 = vmatpush.bf16.msra.mxu0 0
    %2168 = vmatpush.bf16.msra.mxu0 0
    %2169 = vmatpush.bf16.msra.mxu0 %v1771
    %2170 = vmatpush.bf16.msra.mxu0 %v1757
    %2171 = vmatmul.bf16.gmra.mxu0 %v233
    %v2172 = vpop.f32.mrf.mxu0
    %v2173 = vadd.f32 %v2160, %v2172
    %v2174 = vpop.f32.mrf.mxu0
    %2175 = vdwg.mxu0
    %2176 = vmatpush.bf16.msra.mxu0 %v1744
    %2177 = vmatpush.bf16.msra.mxu0 %v1730
    %2178 = vmatpush.bf16.msra.mxu0 %v1716
    %2179 = vmatpush.bf16.msra.mxu0 %v1702
    %2180 = vmatpush.bf16.msra.mxu0 %v1688
    %2181 = vmatpush.bf16.msra.mxu0 %v1674
    %2182 = vmatpush.bf16.msra.mxu0 %v1660
    %2183 = vmatpush.bf16.msra.mxu0 %v1646
    %2184 = vmatmul.bf16.gmra.mxu0 %v109
    %v2185 = vpop.f32.mrf.mxu0
    %v2186 = vadd.f32 0.0, %v2185
    %v2187 = vpop.f32.mrf.mxu0
    %2188 = vdwg.mxu0
    %2189 = vmatpush.bf16.msra.mxu0 0
    %2190 = vmatpush.bf16.msra.mxu0 0
    %2191 = vmatpush.bf16.msra.mxu0 0
    %2192 = vmatpush.bf16.msra.mxu0 0
    %2193 = vmatpush.bf16.msra.mxu0 0
    %2194 = vmatpush.bf16.msra.mxu0 0
    %2195 = vmatpush.bf16.msra.mxu0 %v1772
    %2196 = vmatpush.bf16.msra.mxu0 %v1758
    %2197 = vmatmul.bf16.gmra.mxu0 %v233
    %v2198 = vpop.f32.mrf.mxu0
    %v2199 = vadd.f32 %v2186, %v2198
    %v2200 = vpop.f32.mrf.mxu0
    %2201 = vdwg.mxu0
    %2202 = vmatpush.bf16.msra.mxu0 %v1745
    %2203 = vmatpush.bf16.msra.mxu0 %v1731
    %2204 = vmatpush.bf16.msra.mxu0 %v1717
    %2205 = vmatpush.bf16.msra.mxu0 %v1703
    %2206 = vmatpush.bf16.msra.mxu0 %v1689
    %2207 = vmatpush.bf16.msra.mxu0 %v1675
    %2208 = vmatpush.bf16.msra.mxu0 %v1661
    %2209 = vmatpush.bf16.msra.mxu0 %v1647
    %2210 = vmatmul.bf16.gmra.mxu0 %v109
    %v2211 = vpop.f32.mrf.mxu0
    %v2212 = vadd.f32 0.0, %v2211
    %v2213 = vpop.f32.mrf.mxu0
    %2214 = vdwg.mxu0
    %2215 = vmatpush.bf16.msra.mxu0 0
    %2216 = vmatpush.bf16.msra.mxu0 0
    %2217 = vmatpush.bf16.msra.mxu0 0
    %2218 = vmatpush.bf16.msra.mxu0 0
    %2219 = vmatpush.bf16.msra.mxu0 0
    %2220 = vmatpush.bf16.msra.mxu0 0
    %2221 = vmatpush.bf16.msra.mxu0 %v1773
    %2222 = vmatpush.bf16.msra.mxu0 %v1759
    %2223 = vmatmul.bf16.gmra.mxu0 %v233
    %v2224 = vpop.f32.mrf.mxu0
    %v2225 = vadd.f32 %v2212, %v2224
    %v2226 = vpop.f32.mrf.mxu0
    %2227 = vdwg.mxu0
    %2228 = vmatpush.bf16.msra.mxu0 %v1746
    %2229 = vmatpush.bf16.msra.mxu0 %v1732
    %2230 = vmatpush.bf16.msra.mxu0 %v1718
    %2231 = vmatpush.bf16.msra.mxu0 %v1704
    %2232 = vmatpush.bf16.msra.mxu0 %v1690
    %2233 = vmatpush.bf16.msra.mxu0 %v1676
    %2234 = vmatpush.bf16.msra.mxu0 %v1662
    %2235 = vmatpush.bf16.msra.mxu0 %v1648
    %2236 = vmatmul.bf16.gmra.mxu0 %v109
    %v2237 = vpop.f32.mrf.mxu0
    %v2238 = vadd.f32 0.0, %v2237
    %v2239 = vpop.f32.mrf.mxu0
    %2240 = vdwg.mxu0
    %2241 = vmatpush.bf16.msra.mxu0 0
    %2242 = vmatpush.bf16.msra.mxu0 0
    %2243 = vmatpush.bf16.msra.mxu0 0
    %2244 = vmatpush.bf16.msra.mxu0 0
    %2245 = vmatpush.bf16.msra.mxu0 0
    %2246 = vmatpush.bf16.msra.mxu0 0
    %2247 = vmatpush.bf16.msra.mxu0 %v1774
    %2248 = vmatpush.bf16.msra.mxu0 %v1760
    %2249 = vmatmul.bf16.gmra.mxu0 %v233
    %v2250 = vpop.f32.mrf.mxu0
    %v2251 = vadd.f32 %v2238, %v2250
    %v2252 = vpop.f32.mrf.mxu0
    %2253 = vdwg.mxu0
    %2254 = vmatpush.bf16.msra.mxu0 %v1747
    %2255 = vmatpush.bf16.msra.mxu0 %v1733
    %2256 = vmatpush.bf16.msra.mxu0 %v1719
    %2257 = vmatpush.bf16.msra.mxu0 %v1705
    %2258 = vmatpush.bf16.msra.mxu0 %v1691
    %2259 = vmatpush.bf16.msra.mxu0 %v1677
    %2260 = vmatpush.bf16.msra.mxu0 %v1663
    %2261 = vmatpush.bf16.msra.mxu0 %v1649
    %2262 = vmatmul.bf16.gmra.mxu0 %v109
    %v2263 = vpop.f32.mrf.mxu0
    %v2264 = vadd.f32 0.0, %v2263
    %v2265 = vpop.f32.mrf.mxu0
    %2266 = vdwg.mxu0
    %2267 = vmatpush.bf16.msra.mxu0 0
    %2268 = vmatpush.bf16.msra.mxu0 0
    %2269 = vmatpush.bf16.msra.mxu0 0
    %2270 = vmatpush.bf16.msra.mxu0 0
    %2271 = vmatpush.bf16.msra.mxu0 0
    %2272 = vmatpush.bf16.msra.mxu0 0
    %2273 = vmatpush.bf16.msra.mxu0 %v1775
    %2274 = vmatpush.bf16.msra.mxu0 %v1761
    %2275 = vmatmul.bf16.gmra.mxu0 %v233
    %v2276 = vpop.f32.mrf.mxu0
    %v2277 = vadd.f32 %v2264, %v2276
    %v2278 = vpop.f32.mrf.mxu0
    %2279 = vdwg.mxu0
    %v2280 = vmax.f32 %v1939, %v1965
    %v2281 = vmax.f32 %v2280, %v1991
    %v2282 = vmax.f32 %v2281, %v2017
    %v2283 = vmax.f32 %v2282, %v2043
    %v2284 = vmax.f32 %v2283, %v2069
    %v2285 = vmax.f32 %v2284, %v2095
    %v2286 = vmax.f32 %v2285, %v2121
    %v2287 = vmax.f32 %v2286, %v2147
    %v2288 = vmax.f32 %v2287, %v2173
    %v2289 = vmax.f32 %v2288, %v2199
    %v2290 = vmax.f32 %v2289, %v2225
    %v2291 = vmax.f32 %v2290, %v2251
    %v2292 = vmax.f32 %v2291, %v2277
    %2294 = vrot.lane.b32.xlu0 %v2292, 64
    %v2295 = vpop.permute.xlu0 %2294
    %v2297 = vmax.f32 %v2292, %v2295
    %2299 = vrot.lane.b32.xlu0 %v2297, 96
    %v2300 = vpop.permute.xlu0 %2299
    %v2302 = vmax.f32 %v2297, %v2300
    %2304 = vrot.lane.b32.xlu0 %v2302, 112
    %v2305 = vpop.permute.xlu0 %2304
    %v2307 = vmax.f32 %v2302, %v2305
    %v2308 = vld [vmem:[%s6] sm:$0x1]
    %v2310 = vperm.slane %v2308, 0
    %v2312 = vadd.f32 %v2307, %v2310
    %v2313 = vmax.f32 %v2312, 0.0
    %v2314 = vld [vmem:[%s9 + $0x20] sm:$0xff]
    %v2315 = vld [vmem:[%s9 + $0x28] sm:$0xff]
    %v2317 = vsel %vm1029, %v2313, 0
    %2319 = vmatpush.msra.mxu0 0.0
    %2320 = vmatpush.msra.mxu0 0.0
    %2321 = vmatpush.msra.mxu0 0.0
    %2322 = vmatpush.msra.mxu0 0.0
    %2323 = vmatpush.msra.mxu0 0.0
    %2324 = vmatpush.msra.mxu0 0.0
    %2325 = vmatpush.msra.mxu0 0.0
    %2326 = vmatpush.msra.mxu0 0.0
    %2327 = vmatpush.msra.mxu0 0.0
    %2328 = vmatpush.msra.mxu0 0.0
    %2329 = vmatpush.msra.mxu0 0.0
    %2330 = vmatpush.msra.mxu0 0.0
    %2331 = vmatpush.msra.mxu0 0.0
    %2332 = vmatpush.msra.mxu0 0.0
    %2333 = vmatpush.msra.mxu0 %v2315
    %2334 = vmatpush.msra.mxu0 %v2314
    %2335 = vmatmul.f32.gmra.mxu0 %v2317
    %v2336 = vpop.f32.mrf.mxu0
    %v2337 = vadd.f32 0.0, %v2336
    %2338 = vdwg.mxu0
    %v2339 = vadd.f32 %v1074, %v2337
    %v2340 = vld [vmem:[#allocation7] sm:$0xff]
    %v2341 = vld [vmem:[#allocation7 + $0x8] sm:$0xff]
    %v2342 = vld [vmem:[#allocation7 + $0x10] sm:$0xff]
    %v2343 = vld [vmem:[#allocation7 + $0x18] sm:$0xff]
    %v2344 = vld [vmem:[#allocation7 + $0x20] sm:$0xff]
    %v2345 = vld [vmem:[#allocation7 + $0x28] sm:$0xff]
    %v2346 = vld [vmem:[#allocation7 + $0x30] sm:$0xff]
    %v2347 = vld [vmem:[#allocation7 + $0x38] sm:$0xff]
    %v2348 = vld [vmem:[#allocation7 + $0x40] sm:$0xff]
    %v2349 = vld [vmem:[#allocation7 + $0x48] sm:$0xf]
    %v2350 = vld [vmem:[#allocation7 + $0x4c] sm:$0xff]
    %v2351 = vld [vmem:[#allocation7 + $0x54] sm:$0xff]
    %v2352 = vld [vmem:[#allocation7 + $0x5c] sm:$0xff]
    %v2353 = vld [vmem:[#allocation7 + $0x64] sm:$0xff]
    %v2354 = vld [vmem:[#allocation7 + $0x6c] sm:$0xff]
    %v2355 = vld [vmem:[#allocation7 + $0x74] sm:$0xff]
    %v2356 = vld [vmem:[#allocation7 + $0x7c] sm:$0xff]
    %v2357 = vld [vmem:[#allocation7 + $0x84] sm:$0xff]
    %v2358 = vld [vmem:[#allocation7 + $0x8c] sm:$0xff]
    %v2359 = vld [vmem:[#allocation7 + $0x94] sm:$0xf]
    %v2360 = vld [vmem:[#allocation7 + $0x98] sm:$0xff]
    %v2361 = vld [vmem:[#allocation7 + $0xa0] sm:$0xff]
    %v2362 = vld [vmem:[#allocation7 + $0xa8] sm:$0xff]
    %v2363 = vld [vmem:[#allocation7 + $0xb0] sm:$0xff]
    %v2364 = vld [vmem:[#allocation7 + $0xb8] sm:$0xff]
    %v2365 = vld [vmem:[#allocation7 + $0xc0] sm:$0xff]
    %v2366 = vld [vmem:[#allocation7 + $0xc8] sm:$0xff]
    %v2367 = vld [vmem:[#allocation7 + $0xd0] sm:$0xff]
    %v2368 = vld [vmem:[#allocation7 + $0xd8] sm:$0xff]
    %v2369 = vld [vmem:[#allocation7 + $0xe0] sm:$0xf]
    %v2370 = vld [vmem:[#allocation7 + $0xe4] sm:$0xff]
    %v2371 = vld [vmem:[#allocation7 + $0xec] sm:$0xff]
    %v2372 = vld [vmem:[#allocation7 + $0xf4] sm:$0xff]
    %v2373 = vld [vmem:[#allocation7 + $0xfc] sm:$0xff]
    %v2374 = vld [vmem:[#allocation7 + $0x104] sm:$0xff]
    %v2375 = vld [vmem:[#allocation7 + $0x10c] sm:$0xff]
    %v2376 = vld [vmem:[#allocation7 + $0x114] sm:$0xff]
    %v2377 = vld [vmem:[#allocation7 + $0x11c] sm:$0xff]
    %v2378 = vld [vmem:[#allocation7 + $0x124] sm:$0xff]
    %v2379 = vld [vmem:[#allocation7 + $0x12c] sm:$0xf]
    %v2380 = vld [vmem:[#allocation7 + $0x130] sm:$0xff]
    %v2381 = vld [vmem:[#allocation7 + $0x138] sm:$0xff]
    %v2382 = vld [vmem:[#allocation7 + $0x140] sm:$0xff]
    %v2383 = vld [vmem:[#allocation7 + $0x148] sm:$0xff]
    %v2384 = vld [vmem:[#allocation7 + $0x150] sm:$0xff]
    %v2385 = vld [vmem:[#allocation7 + $0x158] sm:$0xff]
    %v2386 = vld [vmem:[#allocation7 + $0x160] sm:$0xff]
    %v2387 = vld [vmem:[#allocation7 + $0x168] sm:$0xff]
    %v2388 = vld [vmem:[#allocation7 + $0x170] sm:$0xff]
    %v2389 = vld [vmem:[#allocation7 + $0x178] sm:$0xf]
    %v2390 = vld [vmem:[#allocation7 + $0x17c] sm:$0xff]
    %v2391 = vld [vmem:[#allocation7 + $0x184] sm:$0xff]
    %v2392 = vld [vmem:[#allocation7 + $0x18c] sm:$0xff]
    %v2393 = vld [vmem:[#allocation7 + $0x194] sm:$0xff]
    %v2394 = vld [vmem:[#allocation7 + $0x19c] sm:$0xff]
    %v2395 = vld [vmem:[#allocation7 + $0x1a4] sm:$0xff]
    %v2396 = vld [vmem:[#allocation7 + $0x1ac] sm:$0xff]
    %v2397 = vld [vmem:[#allocation7 + $0x1b4] sm:$0xff]
    %v2398 = vld [vmem:[#allocation7 + $0x1bc] sm:$0xff]
    %v2399 = vld [vmem:[#allocation7 + $0x1c4] sm:$0xf]
    %v2400 = vld [vmem:[#allocation7 + $0x1c8] sm:$0xff]
    %v2401 = vld [vmem:[#allocation7 + $0x1d0] sm:$0xff]
    %v2402 = vld [vmem:[#allocation7 + $0x1d8] sm:$0xff]
    %v2403 = vld [vmem:[#allocation7 + $0x1e0] sm:$0xff]
    %v2404 = vld [vmem:[#allocation7 + $0x1e8] sm:$0xff]
    %v2405 = vld [vmem:[#allocation7 + $0x1f0] sm:$0xff]
    %v2406 = vld [vmem:[#allocation7 + $0x1f8] sm:$0xff]
    %v2407 = vld [vmem:[#allocation7 + $0x200] sm:$0xff]
    %v2408 = vld [vmem:[#allocation7 + $0x208] sm:$0xff]
    %v2409 = vld [vmem:[#allocation7 + $0x210] sm:$0xf]
    %v2410 = vld [vmem:[#allocation7 + $0x214] sm:$0xff]
    %v2411 = vld [vmem:[#allocation7 + $0x21c] sm:$0xff]
    %v2412 = vld [vmem:[#allocation7 + $0x224] sm:$0xff]
    %v2413 = vld [vmem:[#allocation7 + $0x22c] sm:$0xff]
    %v2414 = vld [vmem:[#allocation7 + $0x234] sm:$0xff]
    %v2415 = vld [vmem:[#allocation7 + $0x23c] sm:$0xff]
    %v2416 = vld [vmem:[#allocation7 + $0x244] sm:$0xff]
    %v2417 = vld [vmem:[#allocation7 + $0x24c] sm:$0xff]
    %v2418 = vld [vmem:[#allocation7 + $0x254] sm:$0xff]
    %v2419 = vld [vmem:[#allocation7 + $0x25c] sm:$0xf]
    %v2420 = vld [vmem:[#allocation7 + $0x260] sm:$0xff]
    %v2421 = vld [vmem:[#allocation7 + $0x268] sm:$0xff]
    %v2422 = vld [vmem:[#allocation7 + $0x270] sm:$0xff]
    %v2423 = vld [vmem:[#allocation7 + $0x278] sm:$0xff]
    %v2424 = vld [vmem:[#allocation7 + $0x280] sm:$0xff]
    %v2425 = vld [vmem:[#allocation7 + $0x288] sm:$0xff]
    %v2426 = vld [vmem:[#allocation7 + $0x290] sm:$0xff]
    %v2427 = vld [vmem:[#allocation7 + $0x298] sm:$0xff]
    %v2428 = vld [vmem:[#allocation7 + $0x2a0] sm:$0xff]
    %v2429 = vld [vmem:[#allocation7 + $0x2a8] sm:$0xf]
    %v2430 = vld [vmem:[#allocation7 + $0x2ac] sm:$0xff]
    %v2431 = vld [vmem:[#allocation7 + $0x2b4] sm:$0xff]
    %v2432 = vld [vmem:[#allocation7 + $0x2bc] sm:$0xff]
    %v2433 = vld [vmem:[#allocation7 + $0x2c4] sm:$0xff]
    %v2434 = vld [vmem:[#allocation7 + $0x2cc] sm:$0xff]
    %v2435 = vld [vmem:[#allocation7 + $0x2d4] sm:$0xff]
    %v2436 = vld [vmem:[#allocation7 + $0x2dc] sm:$0xff]
    %v2437 = vld [vmem:[#allocation7 + $0x2e4] sm:$0xff]
    %v2438 = vld [vmem:[#allocation7 + $0x2ec] sm:$0xff]
    %v2439 = vld [vmem:[#allocation7 + $0x2f4] sm:$0xf]
    %v2440 = vld [vmem:[#allocation7 + $0x2f8] sm:$0xff]
    %v2441 = vld [vmem:[#allocation7 + $0x300] sm:$0xff]
    %v2442 = vld [vmem:[#allocation7 + $0x308] sm:$0xff]
    %v2443 = vld [vmem:[#allocation7 + $0x310] sm:$0xff]
    %v2444 = vld [vmem:[#allocation7 + $0x318] sm:$0xff]
    %v2445 = vld [vmem:[#allocation7 + $0x320] sm:$0xff]
    %v2446 = vld [vmem:[#allocation7 + $0x328] sm:$0xff]
    %v2447 = vld [vmem:[#allocation7 + $0x330] sm:$0xff]
    %v2448 = vld [vmem:[#allocation7 + $0x338] sm:$0xff]
    %v2449 = vld [vmem:[#allocation7 + $0x340] sm:$0xf]
    %v2450 = vld [vmem:[#allocation7 + $0x344] sm:$0xff]
    %v2451 = vld [vmem:[#allocation7 + $0x34c] sm:$0xff]
    %v2452 = vld [vmem:[#allocation7 + $0x354] sm:$0xff]
    %v2453 = vld [vmem:[#allocation7 + $0x35c] sm:$0xff]
    %v2454 = vld [vmem:[#allocation7 + $0x364] sm:$0xff]
    %v2455 = vld [vmem:[#allocation7 + $0x36c] sm:$0xff]
    %v2456 = vld [vmem:[#allocation7 + $0x374] sm:$0xff]
    %v2457 = vld [vmem:[#allocation7 + $0x37c] sm:$0xff]
    %v2458 = vld [vmem:[#allocation7 + $0x384] sm:$0xff]
    %v2459 = vld [vmem:[#allocation7 + $0x38c] sm:$0xf]
    %v2460 = vld [vmem:[#allocation7 + $0x390] sm:$0xff]
    %v2461 = vld [vmem:[#allocation7 + $0x398] sm:$0xff]
    %v2462 = vld [vmem:[#allocation7 + $0x3a0] sm:$0xff]
    %v2463 = vld [vmem:[#allocation7 + $0x3a8] sm:$0xff]
    %v2464 = vld [vmem:[#allocation7 + $0x3b0] sm:$0xff]
    %v2465 = vld [vmem:[#allocation7 + $0x3b8] sm:$0xff]
    %v2466 = vld [vmem:[#allocation7 + $0x3c0] sm:$0xff]
    %v2467 = vld [vmem:[#allocation7 + $0x3c8] sm:$0xff]
    %v2468 = vld [vmem:[#allocation7 + $0x3d0] sm:$0xff]
    %v2469 = vld [vmem:[#allocation7 + $0x3d8] sm:$0xf]
    %v2470 = vld [vmem:[#allocation7 + $0x3dc] sm:$0xff]
    %v2471 = vld [vmem:[#allocation7 + $0x3e4] sm:$0xff]
    %v2472 = vld [vmem:[#allocation7 + $0x3ec] sm:$0xff]
    %v2473 = vld [vmem:[#allocation7 + $0x3f4] sm:$0xff]
    %v2474 = vld [vmem:[#allocation7 + $0x3fc] sm:$0xff]
    %v2475 = vld [vmem:[#allocation7 + $0x404] sm:$0xff]
    %v2476 = vld [vmem:[#allocation7 + $0x40c] sm:$0xff]
    %v2477 = vld [vmem:[#allocation7 + $0x414] sm:$0xff]
    %v2478 = vld [vmem:[#allocation7 + $0x41c] sm:$0xff]
    %v2479 = vld [vmem:[#allocation7 + $0x424] sm:$0xf]
    %v2480 = vld [vmem:[#allocation7 + $0x428] sm:$0xff]
    %v2481 = vld [vmem:[#allocation7 + $0x430] sm:$0xff]
    %v2482 = vld [vmem:[#allocation7 + $0x438] sm:$0xff]
    %v2483 = vld [vmem:[#allocation7 + $0x440] sm:$0xff]
    %v2484 = vld [vmem:[#allocation7 + $0x448] sm:$0xff]
    %v2485 = vld [vmem:[#allocation7 + $0x450] sm:$0xff]
    %v2486 = vld [vmem:[#allocation7 + $0x458] sm:$0xff]
    %v2487 = vld [vmem:[#allocation7 + $0x460] sm:$0xff]
    %v2488 = vld [vmem:[#allocation7 + $0x468] sm:$0xff]
    %v2489 = vld [vmem:[#allocation7 + $0x470] sm:$0xf]
    %v2490 = vld [vmem:[#allocation7 + $0x474] sm:$0xff]
    %v2491 = vld [vmem:[#allocation7 + $0x47c] sm:$0xff]
    %v2492 = vld [vmem:[#allocation7 + $0x484] sm:$0xff]
    %v2493 = vld [vmem:[#allocation7 + $0x48c] sm:$0xff]
    %v2494 = vld [vmem:[#allocation7 + $0x494] sm:$0xff]
    %v2495 = vld [vmem:[#allocation7 + $0x49c] sm:$0xff]
    %v2496 = vld [vmem:[#allocation7 + $0x4a4] sm:$0xff]
    %v2497 = vld [vmem:[#allocation7 + $0x4ac] sm:$0xff]
    %v2498 = vld [vmem:[#allocation7 + $0x4b4] sm:$0xff]
    %v2499 = vld [vmem:[#allocation7 + $0x4bc] sm:$0xf]
    %v2500 = vld [vmem:[#allocation7 + $0x4c0] sm:$0xff]
    %v2501 = vld [vmem:[#allocation7 + $0x4c8] sm:$0xff]
    %v2502 = vld [vmem:[#allocation7 + $0x4d0] sm:$0xff]
    %v2503 = vld [vmem:[#allocation7 + $0x4d8] sm:$0xff]
    %v2504 = vld [vmem:[#allocation7 + $0x4e0] sm:$0xff]
    %v2505 = vld [vmem:[#allocation7 + $0x4e8] sm:$0xff]
    %v2506 = vld [vmem:[#allocation7 + $0x4f0] sm:$0xff]
    %v2507 = vld [vmem:[#allocation7 + $0x4f8] sm:$0xff]
    %v2508 = vld [vmem:[#allocation7 + $0x500] sm:$0xff]
    %v2509 = vld [vmem:[#allocation7 + $0x508] sm:$0xf]
    %v2510 = vld [vmem:[#allocation7 + $0x50c] sm:$0xff]
    %v2511 = vld [vmem:[#allocation7 + $0x514] sm:$0xff]
    %v2512 = vld [vmem:[#allocation7 + $0x51c] sm:$0xff]
    %v2513 = vld [vmem:[#allocation7 + $0x524] sm:$0xff]
    %v2514 = vld [vmem:[#allocation7 + $0x52c] sm:$0xff]
    %v2515 = vld [vmem:[#allocation7 + $0x534] sm:$0xff]
    %v2516 = vld [vmem:[#allocation7 + $0x53c] sm:$0xff]
    %v2517 = vld [vmem:[#allocation7 + $0x544] sm:$0xff]
    %v2518 = vld [vmem:[#allocation7 + $0x54c] sm:$0xff]
    %v2519 = vld [vmem:[#allocation7 + $0x554] sm:$0xf]
    %v2520 = vld [vmem:[#allocation7 + $0x558] sm:$0xff]
    %v2521 = vld [vmem:[#allocation7 + $0x560] sm:$0xff]
    %v2522 = vld [vmem:[#allocation7 + $0x568] sm:$0xff]
    %v2523 = vld [vmem:[#allocation7 + $0x570] sm:$0xff]
    %v2524 = vld [vmem:[#allocation7 + $0x578] sm:$0xff]
    %v2525 = vld [vmem:[#allocation7 + $0x580] sm:$0xff]
    %v2526 = vld [vmem:[#allocation7 + $0x588] sm:$0xff]
    %v2527 = vld [vmem:[#allocation7 + $0x590] sm:$0xff]
    %v2528 = vld [vmem:[#allocation7 + $0x598] sm:$0xff]
    %v2529 = vld [vmem:[#allocation7 + $0x5a0] sm:$0xf]
    %v2530 = vld [vmem:[#allocation7 + $0x5a4] sm:$0xff]
    %v2531 = vld [vmem:[#allocation7 + $0x5ac] sm:$0xff]
    %v2532 = vld [vmem:[#allocation7 + $0x5b4] sm:$0xff]
    %v2533 = vld [vmem:[#allocation7 + $0x5bc] sm:$0xff]
    %v2534 = vld [vmem:[#allocation7 + $0x5c4] sm:$0xff]
    %v2535 = vld [vmem:[#allocation7 + $0x5cc] sm:$0xff]
    %v2536 = vld [vmem:[#allocation7 + $0x5d4] sm:$0xff]
    %v2537 = vld [vmem:[#allocation7 + $0x5dc] sm:$0xff]
    %v2538 = vld [vmem:[#allocation7 + $0x5e4] sm:$0xff]
    %v2539 = vld [vmem:[#allocation7 + $0x5ec] sm:$0xf]
    %v2740 = vunpack.c.l.b16 %v2340
    %v2741 = vunpack.c.h.b16 %v2340
    %v2742 = vunpack.c.l.b16 %v2341
    %v2743 = vunpack.c.h.b16 %v2341
    %v2744 = vunpack.c.l.b16 %v2342
    %v2745 = vunpack.c.h.b16 %v2342
    %v2746 = vunpack.c.l.b16 %v2343
    %v2747 = vunpack.c.h.b16 %v2343
    %v2748 = vunpack.c.l.b16 %v2344
    %v2749 = vunpack.c.h.b16 %v2344
    %v2750 = vunpack.c.l.b16 %v2345
    %v2751 = vunpack.c.h.b16 %v2345
    %v2752 = vunpack.c.l.b16 %v2346
    %v2753 = vunpack.c.h.b16 %v2346
    %v2754 = vunpack.c.l.b16 %v2347
    %v2755 = vunpack.c.h.b16 %v2347
    %v2756 = vunpack.c.l.b16 %v2348
    %v2757 = vunpack.c.h.b16 %v2348
    %v2758 = vunpack.c.l.b16 %v2349
    %v2759 = vunpack.c.l.b16 %v2350
    %v2760 = vunpack.c.h.b16 %v2350
    %v2761 = vunpack.c.l.b16 %v2351
    %v2762 = vunpack.c.h.b16 %v2351
    %v2763 = vunpack.c.l.b16 %v2352
    %v2764 = vunpack.c.h.b16 %v2352
    %v2765 = vunpack.c.l.b16 %v2353
    %v2766 = vunpack.c.h.b16 %v2353
    %v2767 = vunpack.c.l.b16 %v2354
    %v2768 = vunpack.c.h.b16 %v2354
    %v2769 = vunpack.c.l.b16 %v2355
    %v2770 = vunpack.c.h.b16 %v2355
    %v2771 = vunpack.c.l.b16 %v2356
    %v2772 = vunpack.c.h.b16 %v2356
    %v2773 = vunpack.c.l.b16 %v2357
    %v2774 = vunpack.c.h.b16 %v2357
    %v2775 = vunpack.c.l.b16 %v2358
    %v2776 = vunpack.c.h.b16 %v2358
    %v2777 = vunpack.c.l.b16 %v2359
    %v2778 = vunpack.c.l.b16 %v2360
    %v2779 = vunpack.c.h.b16 %v2360
    %v2780 = vunpack.c.l.b16 %v2361
    %v2781 = vunpack.c.h.b16 %v2361
    %v2782 = vunpack.c.l.b16 %v2362
    %v2783 = vunpack.c.h.b16 %v2362
    %v2784 = vunpack.c.l.b16 %v2363
    %v2785 = vunpack.c.h.b16 %v2363
    %v2786 = vunpack.c.l.b16 %v2364
    %v2787 = vunpack.c.h.b16 %v2364
    %v2788 = vunpack.c.l.b16 %v2365
    %v2789 = vunpack.c.h.b16 %v2365
    %v2790 = vunpack.c.l.b16 %v2366
    %v2791 = vunpack.c.h.b16 %v2366
    %v2792 = vunpack.c.l.b16 %v2367
    %v2793 = vunpack.c.h.b16 %v2367
    %v2794 = vunpack.c.l.b16 %v2368
    %v2795 = vunpack.c.h.b16 %v2368
    %v2796 = vunpack.c.l.b16 %v2369
    %v2797 = vunpack.c.l.b16 %v2370
    %v2798 = vunpack.c.h.b16 %v2370
    %v2799 = vunpack.c.l.b16 %v2371
    %v2800 = vunpack.c.h.b16 %v2371
    %v2801 = vunpack.c.l.b16 %v2372
    %v2802 = vunpack.c.h.b16 %v2372
    %v2803 = vunpack.c.l.b16 %v2373
    %v2804 = vunpack.c.h.b16 %v2373
    %v2805 = vunpack.c.l.b16 %v2374
    %v2806 = vunpack.c.h.b16 %v2374
    %v2807 = vunpack.c.l.b16 %v2375
    %v2808 = vunpack.c.h.b16 %v2375
    %v2809 = vunpack.c.l.b16 %v2376
    %v2810 = vunpack.c.h.b16 %v2376
    %v2811 = vunpack.c.l.b16 %v2377
    %v2812 = vunpack.c.h.b16 %v2377
    %v2813 = vunpack.c.l.b16 %v2378
    %v2814 = vunpack.c.h.b16 %v2378
    %v2815 = vunpack.c.l.b16 %v2379
    %v2816 = vunpack.c.l.b16 %v2380
    %v2817 = vunpack.c.h.b16 %v2380
    %v2818 = vunpack.c.l.b16 %v2381
    %v2819 = vunpack.c.h.b16 %v2381
    %v2820 = vunpack.c.l.b16 %v2382
    %v2821 = vunpack.c.h.b16 %v2382
    %v2822 = vunpack.c.l.b16 %v2383
    %v2823 = vunpack.c.h.b16 %v2383
    %v2824 = vunpack.c.l.b16 %v2384
    %v2825 = vunpack.c.h.b16 %v2384
    %v2826 = vunpack.c.l.b16 %v2385
    %v2827 = vunpack.c.h.b16 %v2385
    %v2828 = vunpack.c.l.b16 %v2386
    %v2829 = vunpack.c.h.b16 %v2386
    %v2830 = vunpack.c.l.b16 %v2387
    %v2831 = vunpack.c.h.b16 %v2387
    %v2832 = vunpack.c.l.b16 %v2388
    %v2833 = vunpack.c.h.b16 %v2388
    %v2834 = vunpack.c.l.b16 %v2389
    %v2835 = vunpack.c.l.b16 %v2390
    %v2836 = vunpack.c.h.b16 %v2390
    %v2837 = vunpack.c.l.b16 %v2391
    %v2838 = vunpack.c.h.b16 %v2391
    %v2839 = vunpack.c.l.b16 %v2392
    %v2840 = vunpack.c.h.b16 %v2392
    %v2841 = vunpack.c.l.b16 %v2393
    %v2842 = vunpack.c.h.b16 %v2393
    %v2843 = vunpack.c.l.b16 %v2394
    %v2844 = vunpack.c.h.b16 %v2394
    %v2845 = vunpack.c.l.b16 %v2395
    %v2846 = vunpack.c.h.b16 %v2395
    %v2847 = vunpack.c.l.b16 %v2396
    %v2848 = vunpack.c.h.b16 %v2396
    %v2849 = vunpack.c.l.b16 %v2397
    %v2850 = vunpack.c.h.b16 %v2397
    %v2851 = vunpack.c.l.b16 %v2398
    %v2852 = vunpack.c.h.b16 %v2398
    %v2853 = vunpack.c.l.b16 %v2399
    %v2854 = vunpack.c.l.b16 %v2400
    %v2855 = vunpack.c.h.b16 %v2400
    %v2856 = vunpack.c.l.b16 %v2401
    %v2857 = vunpack.c.h.b16 %v2401
    %v2858 = vunpack.c.l.b16 %v2402
    %v2859 = vunpack.c.h.b16 %v2402
    %v2860 = vunpack.c.l.b16 %v2403
    %v2861 = vunpack.c.h.b16 %v2403
    %v2862 = vunpack.c.l.b16 %v2404
    %v2863 = vunpack.c.h.b16 %v2404
    %v2864 = vunpack.c.l.b16 %v2405
    %v2865 = vunpack.c.h.b16 %v2405
    %v2866 = vunpack.c.l.b16 %v2406
    %v2867 = vunpack.c.h.b16 %v2406
    %v2868 = vunpack.c.l.b16 %v2407
    %v2869 = vunpack.c.h.b16 %v2407
    %v2870 = vunpack.c.l.b16 %v2408
    %v2871 = vunpack.c.h.b16 %v2408
    %v2872 = vunpack.c.l.b16 %v2409
    %v2873 = vunpack.c.l.b16 %v2410
    %v2874 = vunpack.c.h.b16 %v2410
    %v2875 = vunpack.c.l.b16 %v2411
    %v2876 = vunpack.c.h.b16 %v2411
    %v2877 = vunpack.c.l.b16 %v2412
    %v2878 = vunpack.c.h.b16 %v2412
    %v2879 = vunpack.c.l.b16 %v2413
    %v2880 = vunpack.c.h.b16 %v2413
    %v2881 = vunpack.c.l.b16 %v2414
    %v2882 = vunpack.c.h.b16 %v2414
    %v2883 = vunpack.c.l.b16 %v2415
    %v2884 = vunpack.c.h.b16 %v2415
    %v2885 = vunpack.c.l.b16 %v2416
    %v2886 = vunpack.c.h.b16 %v2416
    %v2887 = vunpack.c.l.b16 %v2417
    %v2888 = vunpack.c.h.b16 %v2417
    %v2889 = vunpack.c.l.b16 %v2418
    %v2890 = vunpack.c.h.b16 %v2418
    %v2891 = vunpack.c.l.b16 %v2419
    %v2892 = vunpack.c.l.b16 %v2420
    %v2893 = vunpack.c.h.b16 %v2420
    %v2894 = vunpack.c.l.b16 %v2421
    %v2895 = vunpack.c.h.b16 %v2421
    %v2896 = vunpack.c.l.b16 %v2422
    %v2897 = vunpack.c.h.b16 %v2422
    %v2898 = vunpack.c.l.b16 %v2423
    %v2899 = vunpack.c.h.b16 %v2423
    %v2900 = vunpack.c.l.b16 %v2424
    %v2901 = vunpack.c.h.b16 %v2424
    %v2902 = vunpack.c.l.b16 %v2425
    %v2903 = vunpack.c.h.b16 %v2425
    %v2904 = vunpack.c.l.b16 %v2426
    %v2905 = vunpack.c.h.b16 %v2426
    %v2906 = vunpack.c.l.b16 %v2427
    %v2907 = vunpack.c.h.b16 %v2427
    %v2908 = vunpack.c.l.b16 %v2428
    %v2909 = vunpack.c.h.b16 %v2428
    %v2910 = vunpack.c.l.b16 %v2429
    %v2911 = vunpack.c.l.b16 %v2430
    %v2912 = vunpack.c.h.b16 %v2430
    %v2913 = vunpack.c.l.b16 %v2431
    %v2914 = vunpack.c.h.b16 %v2431
    %v2915 = vunpack.c.l.b16 %v2432
    %v2916 = vunpack.c.h.b16 %v2432
    %v2917 = vunpack.c.l.b16 %v2433
    %v2918 = vunpack.c.h.b16 %v2433
    %v2919 = vunpack.c.l.b16 %v2434
    %v2920 = vunpack.c.h.b16 %v2434
    %v2921 = vunpack.c.l.b16 %v2435
    %v2922 = vunpack.c.h.b16 %v2435
    %v2923 = vunpack.c.l.b16 %v2436
    %v2924 = vunpack.c.h.b16 %v2436
    %v2925 = vunpack.c.l.b16 %v2437
    %v2926 = vunpack.c.h.b16 %v2437
    %v2927 = vunpack.c.l.b16 %v2438
    %v2928 = vunpack.c.h.b16 %v2438
    %v2929 = vunpack.c.l.b16 %v2439
    %v2930 = vunpack.c.l.b16 %v2440
    %v2931 = vunpack.c.h.b16 %v2440
    %v2932 = vunpack.c.l.b16 %v2441
    %v2933 = vunpack.c.h.b16 %v2441
    %v2934 = vunpack.c.l.b16 %v2442
    %v2935 = vunpack.c.h.b16 %v2442
    %v2936 = vunpack.c.l.b16 %v2443
    %v2937 = vunpack.c.h.b16 %v2443
    %v2938 = vunpack.c.l.b16 %v2444
    %v2939 = vunpack.c.h.b16 %v2444
    %v2940 = vunpack.c.l.b16 %v2445
    %v2941 = vunpack.c.h.b16 %v2445
    %v2942 = vunpack.c.l.b16 %v2446
    %v2943 = vunpack.c.h.b16 %v2446
    %v2944 = vunpack.c.l.b16 %v2447
    %v2945 = vunpack.c.h.b16 %v2447
    %v2946 = vunpack.c.l.b16 %v2448
    %v2947 = vunpack.c.h.b16 %v2448
    %v2948 = vunpack.c.l.b16 %v2449
    %v2949 = vunpack.c.l.b16 %v2450
    %v2950 = vunpack.c.h.b16 %v2450
    %v2951 = vunpack.c.l.b16 %v2451
    %v2952 = vunpack.c.h.b16 %v2451
    %v2953 = vunpack.c.l.b16 %v2452
    %v2954 = vunpack.c.h.b16 %v2452
    %v2955 = vunpack.c.l.b16 %v2453
    %v2956 = vunpack.c.h.b16 %v2453
    %v2957 = vunpack.c.l.b16 %v2454
    %v2958 = vunpack.c.h.b16 %v2454
    %v2959 = vunpack.c.l.b16 %v2455
    %v2960 = vunpack.c.h.b16 %v2455
    %v2961 = vunpack.c.l.b16 %v2456
    %v2962 = vunpack.c.h.b16 %v2456
    %v2963 = vunpack.c.l.b16 %v2457
    %v2964 = vunpack.c.h.b16 %v2457
    %v2965 = vunpack.c.l.b16 %v2458
    %v2966 = vunpack.c.h.b16 %v2458
    %v2967 = vunpack.c.l.b16 %v2459
    %v2968 = vunpack.c.l.b16 %v2460
    %v2969 = vunpack.c.h.b16 %v2460
    %v2970 = vunpack.c.l.b16 %v2461
    %v2971 = vunpack.c.h.b16 %v2461
    %v2972 = vunpack.c.l.b16 %v2462
    %v2973 = vunpack.c.h.b16 %v2462
    %v2974 = vunpack.c.l.b16 %v2463
    %v2975 = vunpack.c.h.b16 %v2463
    %v2976 = vunpack.c.l.b16 %v2464
    %v2977 = vunpack.c.h.b16 %v2464
    %v2978 = vunpack.c.l.b16 %v2465
    %v2979 = vunpack.c.h.b16 %v2465
    %v2980 = vunpack.c.l.b16 %v2466
    %v2981 = vunpack.c.h.b16 %v2466
    %v2982 = vunpack.c.l.b16 %v2467
    %v2983 = vunpack.c.h.b16 %v2467
    %v2984 = vunpack.c.l.b16 %v2468
    %v2985 = vunpack.c.h.b16 %v2468
    %v2986 = vunpack.c.l.b16 %v2469
    %v2987 = vunpack.c.l.b16 %v2470
    %v2988 = vunpack.c.h.b16 %v2470
    %v2989 = vunpack.c.l.b16 %v2471
    %v2990 = vunpack.c.h.b16 %v2471
    %v2991 = vunpack.c.l.b16 %v2472
    %v2992 = vunpack.c.h.b16 %v2472
    %v2993 = vunpack.c.l.b16 %v2473
    %v2994 = vunpack.c.h.b16 %v2473
    %v2995 = vunpack.c.l.b16 %v2474
    %v2996 = vunpack.c.h.b16 %v2474
    %v2997 = vunpack.c.l.b16 %v2475
    %v2998 = vunpack.c.h.b16 %v2475
    %v2999 = vunpack.c.l.b16 %v2476
    %v3000 = vunpack.c.h.b16 %v2476
    %v3001 = vunpack.c.l.b16 %v2477
    %v3002 = vunpack.c.h.b16 %v2477
    %v3003 = vunpack.c.l.b16 %v2478
    %v3004 = vunpack.c.h.b16 %v2478
    %v3005 = vunpack.c.l.b16 %v2479
    %v3006 = vunpack.c.l.b16 %v2480
    %v3007 = vunpack.c.h.b16 %v2480
    %v3008 = vunpack.c.l.b16 %v2481
    %v3009 = vunpack.c.h.b16 %v2481
    %v3010 = vunpack.c.l.b16 %v2482
    %v3011 = vunpack.c.h.b16 %v2482
    %v3012 = vunpack.c.l.b16 %v2483
    %v3013 = vunpack.c.h.b16 %v2483
    %v3014 = vunpack.c.l.b16 %v2484
    %v3015 = vunpack.c.h.b16 %v2484
    %v3016 = vunpack.c.l.b16 %v2485
    %v3017 = vunpack.c.h.b16 %v2485
    %v3018 = vunpack.c.l.b16 %v2486
    %v3019 = vunpack.c.h.b16 %v2486
    %v3020 = vunpack.c.l.b16 %v2487
    %v3021 = vunpack.c.h.b16 %v2487
    %v3022 = vunpack.c.l.b16 %v2488
    %v3023 = vunpack.c.h.b16 %v2488
    %v3024 = vunpack.c.l.b16 %v2489
    %v3025 = vunpack.c.l.b16 %v2490
    %v3026 = vunpack.c.h.b16 %v2490
    %v3027 = vunpack.c.l.b16 %v2491
    %v3028 = vunpack.c.h.b16 %v2491
    %v3029 = vunpack.c.l.b16 %v2492
    %v3030 = vunpack.c.h.b16 %v2492
    %v3031 = vunpack.c.l.b16 %v2493
    %v3032 = vunpack.c.h.b16 %v2493
    %v3033 = vunpack.c.l.b16 %v2494
    %v3034 = vunpack.c.h.b16 %v2494
    %v3035 = vunpack.c.l.b16 %v2495
    %v3036 = vunpack.c.h.b16 %v2495
    %v3037 = vunpack.c.l.b16 %v2496
    %v3038 = vunpack.c.h.b16 %v2496
    %v3039 = vunpack.c.l.b16 %v2497
    %v3040 = vunpack.c.h.b16 %v2497
    %v3041 = vunpack.c.l.b16 %v2498
    %v3042 = vunpack.c.h.b16 %v2498
    %v3043 = vunpack.c.l.b16 %v2499
    %v3044 = vunpack.c.l.b16 %v2500
    %v3045 = vunpack.c.h.b16 %v2500
    %v3046 = vunpack.c.l.b16 %v2501
    %v3047 = vunpack.c.h.b16 %v2501
    %v3048 = vunpack.c.l.b16 %v2502
    %v3049 = vunpack.c.h.b16 %v2502
    %v3050 = vunpack.c.l.b16 %v2503
    %v3051 = vunpack.c.h.b16 %v2503
    %v3052 = vunpack.c.l.b16 %v2504
    %v3053 = vunpack.c.h.b16 %v2504
    %v3054 = vunpack.c.l.b16 %v2505
    %v3055 = vunpack.c.h.b16 %v2505
    %v3056 = vunpack.c.l.b16 %v2506
    %v3057 = vunpack.c.h.b16 %v2506
    %v3058 = vunpack.c.l.b16 %v2507
    %v3059 = vunpack.c.h.b16 %v2507
    %v3060 = vunpack.c.l.b16 %v2508
    %v3061 = vunpack.c.h.b16 %v2508
    %v3062 = vunpack.c.l.b16 %v2509
    %v3063 = vunpack.c.l.b16 %v2510
    %v3064 = vunpack.c.h.b16 %v2510
    %v3065 = vunpack.c.l.b16 %v2511
    %v3066 = vunpack.c.h.b16 %v2511
    %v3067 = vunpack.c.l.b16 %v2512
    %v3068 = vunpack.c.h.b16 %v2512
    %v3069 = vunpack.c.l.b16 %v2513
    %v3070 = vunpack.c.h.b16 %v2513
    %v3071 = vunpack.c.l.b16 %v2514
    %v3072 = vunpack.c.h.b16 %v2514
    %v3073 = vunpack.c.l.b16 %v2515
    %v3074 = vunpack.c.h.b16 %v2515
    %v3075 = vunpack.c.l.b16 %v2516
    %v3076 = vunpack.c.h.b16 %v2516
    %v3077 = vunpack.c.l.b16 %v2517
    %v3078 = vunpack.c.h.b16 %v2517
    %v3079 = vunpack.c.l.b16 %v2518
    %v3080 = vunpack.c.h.b16 %v2518
    %v3081 = vunpack.c.l.b16 %v2519
    %v3082 = vunpack.c.l.b16 %v2520
    %v3083 = vunpack.c.h.b16 %v2520
    %v3084 = vunpack.c.l.b16 %v2521
    %v3085 = vunpack.c.h.b16 %v2521
    %v3086 = vunpack.c.l.b16 %v2522
    %v3087 = vunpack.c.h.b16 %v2522
    %v3088 = vunpack.c.l.b16 %v2523
    %v3089 = vunpack.c.h.b16 %v2523
    %v3090 = vunpack.c.l.b16 %v2524
    %v3091 = vunpack.c.h.b16 %v2524
    %v3092 = vunpack.c.l.b16 %v2525
    %v3093 = vunpack.c.h.b16 %v2525
    %v3094 = vunpack.c.l.b16 %v2526
    %v3095 = vunpack.c.h.b16 %v2526
    %v3096 = vunpack.c.l.b16 %v2527
    %v3097 = vunpack.c.h.b16 %v2527
    %v3098 = vunpack.c.l.b16 %v2528
    %v3099 = vunpack.c.h.b16 %v2528
    %v3100 = vunpack.c.l.b16 %v2529
    %v3101 = vunpack.c.l.b16 %v2530
    %v3102 = vunpack.c.h.b16 %v2530
    %v3103 = vunpack.c.l.b16 %v2531
    %v3104 = vunpack.c.h.b16 %v2531
    %v3105 = vunpack.c.l.b16 %v2532
    %v3106 = vunpack.c.h.b16 %v2532
    %v3107 = vunpack.c.l.b16 %v2533
    %v3108 = vunpack.c.h.b16 %v2533
    %v3109 = vunpack.c.l.b16 %v2534
    %v3110 = vunpack.c.h.b16 %v2534
    %v3111 = vunpack.c.l.b16 %v2535
    %v3112 = vunpack.c.h.b16 %v2535
    %v3113 = vunpack.c.l.b16 %v2536
    %v3114 = vunpack.c.h.b16 %v2536
    %v3115 = vunpack.c.l.b16 %v2537
    %v3116 = vunpack.c.h.b16 %v2537
    %v3117 = vunpack.c.l.b16 %v2538
    %v3118 = vunpack.c.h.b16 %v2538
    %v3119 = vunpack.c.l.b16 %v2539
    %v3120 = vpack.c.b16 %v2759, %v2740
    %v3121 = vpack.c.b16 %v2760, %v2741
    %v3122 = vpack.c.b16 %v2761, %v2742
    %v3123 = vpack.c.b16 %v2762, %v2743
    %v3124 = vpack.c.b16 %v2763, %v2744
    %v3125 = vpack.c.b16 %v2764, %v2745
    %v3126 = vpack.c.b16 %v2765, %v2746
    %v3127 = vpack.c.b16 %v2766, %v2747
    %v3128 = vpack.c.b16 %v2767, %v2748
    %v3129 = vpack.c.b16 %v2768, %v2749
    %v3130 = vpack.c.b16 %v2769, %v2750
    %v3131 = vpack.c.b16 %v2770, %v2751
    %v3132 = vpack.c.b16 %v2771, %v2752
    %v3133 = vpack.c.b16 %v2772, %v2753
    %v3134 = vpack.c.b16 %v2773, %v2754
    %v3135 = vpack.c.b16 %v2774, %v2755
    %v3136 = vpack.c.b16 %v2775, %v2756
    %v3137 = vpack.c.b16 %v2776, %v2757
    %v3138 = vpack.c.b16 %v2777, %v2758
    %v3139 = vpack.c.b16 %v2797, %v2778
    %v3140 = vpack.c.b16 %v2798, %v2779
    %v3141 = vpack.c.b16 %v2799, %v2780
    %v3142 = vpack.c.b16 %v2800, %v2781
    %v3143 = vpack.c.b16 %v2801, %v2782
    %v3144 = vpack.c.b16 %v2802, %v2783
    %v3145 = vpack.c.b16 %v2803, %v2784
    %v3146 = vpack.c.b16 %v2804, %v2785
    %v3147 = vpack.c.b16 %v2805, %v2786
    %v3148 = vpack.c.b16 %v2806, %v2787
    %v3149 = vpack.c.b16 %v2807, %v2788
    %v3150 = vpack.c.b16 %v2808, %v2789
    %v3151 = vpack.c.b16 %v2809, %v2790
    %v3152 = vpack.c.b16 %v2810, %v2791
    %v3153 = vpack.c.b16 %v2811, %v2792
    %v3154 = vpack.c.b16 %v2812, %v2793
    %v3155 = vpack.c.b16 %v2813, %v2794
    %v3156 = vpack.c.b16 %v2814, %v2795
    %v3157 = vpack.c.b16 %v2815, %v2796
    %v3158 = vpack.c.b16 %v2835, %v2816
    %v3159 = vpack.c.b16 %v2836, %v2817
    %v3160 = vpack.c.b16 %v2837, %v2818
    %v3161 = vpack.c.b16 %v2838, %v2819
    %v3162 = vpack.c.b16 %v2839, %v2820
    %v3163 = vpack.c.b16 %v2840, %v2821
    %v3164 = vpack.c.b16 %v2841, %v2822
    %v3165 = vpack.c.b16 %v2842, %v2823
    %v3166 = vpack.c.b16 %v2843, %v2824
    %v3167 = vpack.c.b16 %v2844, %v2825
    %v3168 = vpack.c.b16 %v2845, %v2826
    %v3169 = vpack.c.b16 %v2846, %v2827
    %v3170 = vpack.c.b16 %v2847, %v2828
    %v3171 = vpack.c.b16 %v2848, %v2829
    %v3172 = vpack.c.b16 %v2849, %v2830
    %v3173 = vpack.c.b16 %v2850, %v2831
    %v3174 = vpack.c.b16 %v2851, %v2832
    %v3175 = vpack.c.b16 %v2852, %v2833
    %v3176 = vpack.c.b16 %v2853, %v2834
    %v3177 = vpack.c.b16 %v2873, %v2854
    %v3178 = vpack.c.b16 %v2874, %v2855
    %v3179 = vpack.c.b16 %v2875, %v2856
    %v3180 = vpack.c.b16 %v2876, %v2857
    %v3181 = vpack.c.b16 %v2877, %v2858
    %v3182 = vpack.c.b16 %v2878, %v2859
    %v3183 = vpack.c.b16 %v2879, %v2860
    %v3184 = vpack.c.b16 %v2880, %v2861
    %v3185 = vpack.c.b16 %v2881, %v2862
    %v3186 = vpack.c.b16 %v2882, %v2863
    %v3187 = vpack.c.b16 %v2883, %v2864
    %v3188 = vpack.c.b16 %v2884, %v2865
    %v3189 = vpack.c.b16 %v2885, %v2866
    %v3190 = vpack.c.b16 %v2886, %v2867
    %v3191 = vpack.c.b16 %v2887, %v2868
    %v3192 = vpack.c.b16 %v2888, %v2869
    %v3193 = vpack.c.b16 %v2889, %v2870
    %v3194 = vpack.c.b16 %v2890, %v2871
    %v3195 = vpack.c.b16 %v2891, %v2872
    %v3196 = vpack.c.b16 %v2911, %v2892
    %v3197 = vpack.c.b16 %v2912, %v2893
    %v3198 = vpack.c.b16 %v2913, %v2894
    %v3199 = vpack.c.b16 %v2914, %v2895
    %v3200 = vpack.c.b16 %v2915, %v2896
    %v3201 = vpack.c.b16 %v2916, %v2897
    %v3202 = vpack.c.b16 %v2917, %v2898
    %v3203 = vpack.c.b16 %v2918, %v2899
    %v3204 = vpack.c.b16 %v2919, %v2900
    %v3205 = vpack.c.b16 %v2920, %v2901
    %v3206 = vpack.c.b16 %v2921, %v2902
    %v3207 = vpack.c.b16 %v2922, %v2903
    %v3208 = vpack.c.b16 %v2923, %v2904
    %v3209 = vpack.c.b16 %v2924, %v2905
    %v3210 = vpack.c.b16 %v2925, %v2906
    %v3211 = vpack.c.b16 %v2926, %v2907
    %v3212 = vpack.c.b16 %v2927, %v2908
    %v3213 = vpack.c.b16 %v2928, %v2909
    %v3214 = vpack.c.b16 %v2929, %v2910
    %v3215 = vpack.c.b16 %v2949, %v2930
    %v3216 = vpack.c.b16 %v2950, %v2931
    %v3217 = vpack.c.b16 %v2951, %v2932
    %v3218 = vpack.c.b16 %v2952, %v2933
    %v3219 = vpack.c.b16 %v2953, %v2934
    %v3220 = vpack.c.b16 %v2954, %v2935
    %v3221 = vpack.c.b16 %v2955, %v2936
    %v3222 = vpack.c.b16 %v2956, %v2937
    %v3223 = vpack.c.b16 %v2957, %v2938
    %v3224 = vpack.c.b16 %v2958, %v2939
    %v3225 = vpack.c.b16 %v2959, %v2940
    %v3226 = vpack.c.b16 %v2960, %v2941
    %v3227 = vpack.c.b16 %v2961, %v2942
    %v3228 = vpack.c.b16 %v2962, %v2943
    %v3229 = vpack.c.b16 %v2963, %v2944
    %v3230 = vpack.c.b16 %v2964, %v2945
    %v3231 = vpack.c.b16 %v2965, %v2946
    %v3232 = vpack.c.b16 %v2966, %v2947
    %v3233 = vpack.c.b16 %v2967, %v2948
    %v3234 = vpack.c.b16 %v2987, %v2968
    %v3235 = vpack.c.b16 %v2988, %v2969
    %v3236 = vpack.c.b16 %v2989, %v2970
    %v3237 = vpack.c.b16 %v2990, %v2971
    %v3238 = vpack.c.b16 %v2991, %v2972
    %v3239 = vpack.c.b16 %v2992, %v2973
    %v3240 = vpack.c.b16 %v2993, %v2974
    %v3241 = vpack.c.b16 %v2994, %v2975
    %v3242 = vpack.c.b16 %v2995, %v2976
    %v3243 = vpack.c.b16 %v2996, %v2977
    %v3244 = vpack.c.b16 %v2997, %v2978
    %v3245 = vpack.c.b16 %v2998, %v2979
    %v3246 = vpack.c.b16 %v2999, %v2980
    %v3247 = vpack.c.b16 %v3000, %v2981
    %v3248 = vpack.c.b16 %v3001, %v2982
    %v3249 = vpack.c.b16 %v3002, %v2983
    %v3250 = vpack.c.b16 %v3003, %v2984
    %v3251 = vpack.c.b16 %v3004, %v2985
    %v3252 = vpack.c.b16 %v3005, %v2986
    %v3253 = vpack.c.b16 %v3025, %v3006
    %v3254 = vpack.c.b16 %v3026, %v3007
    %v3255 = vpack.c.b16 %v3027, %v3008
    %v3256 = vpack.c.b16 %v3028, %v3009
    %v3257 = vpack.c.b16 %v3029, %v3010
    %v3258 = vpack.c.b16 %v3030, %v3011
    %v3259 = vpack.c.b16 %v3031, %v3012
    %v3260 = vpack.c.b16 %v3032, %v3013
    %v3261 = vpack.c.b16 %v3033, %v3014
    %v3262 = vpack.c.b16 %v3034, %v3015
    %v3263 = vpack.c.b16 %v3035, %v3016
    %v3264 = vpack.c.b16 %v3036, %v3017
    %v3265 = vpack.c.b16 %v3037, %v3018
    %v3266 = vpack.c.b16 %v3038, %v3019
    %v3267 = vpack.c.b16 %v3039, %v3020
    %v3268 = vpack.c.b16 %v3040, %v3021
    %v3269 = vpack.c.b16 %v3041, %v3022
    %v3270 = vpack.c.b16 %v3042, %v3023
    %v3271 = vpack.c.b16 %v3043, %v3024
    %v3272 = vpack.c.b16 %v3063, %v3044
    %v3273 = vpack.c.b16 %v3064, %v3045
    %v3274 = vpack.c.b16 %v3065, %v3046
    %v3275 = vpack.c.b16 %v3066, %v3047
    %v3276 = vpack.c.b16 %v3067, %v3048
    %v3277 = vpack.c.b16 %v3068, %v3049
    %v3278 = vpack.c.b16 %v3069, %v3050
    %v3279 = vpack.c.b16 %v3070, %v3051
    %v3280 = vpack.c.b16 %v3071, %v3052
    %v3281 = vpack.c.b16 %v3072, %v3053
    %v3282 = vpack.c.b16 %v3073, %v3054
    %v3283 = vpack.c.b16 %v3074, %v3055
    %v3284 = vpack.c.b16 %v3075, %v3056
    %v3285 = vpack.c.b16 %v3076, %v3057
    %v3286 = vpack.c.b16 %v3077, %v3058
    %v3287 = vpack.c.b16 %v3078, %v3059
    %v3288 = vpack.c.b16 %v3079, %v3060
    %v3289 = vpack.c.b16 %v3080, %v3061
    %v3290 = vpack.c.b16 %v3081, %v3062
    %v3291 = vpack.c.b16 %v3101, %v3082
    %v3292 = vpack.c.b16 %v3102, %v3083
    %v3293 = vpack.c.b16 %v3103, %v3084
    %v3294 = vpack.c.b16 %v3104, %v3085
    %v3295 = vpack.c.b16 %v3105, %v3086
    %v3296 = vpack.c.b16 %v3106, %v3087
    %v3297 = vpack.c.b16 %v3107, %v3088
    %v3298 = vpack.c.b16 %v3108, %v3089
    %v3299 = vpack.c.b16 %v3109, %v3090
    %v3300 = vpack.c.b16 %v3110, %v3091
    %v3301 = vpack.c.b16 %v3111, %v3092
    %v3302 = vpack.c.b16 %v3112, %v3093
    %v3303 = vpack.c.b16 %v3113, %v3094
    %v3304 = vpack.c.b16 %v3114, %v3095
    %v3305 = vpack.c.b16 %v3115, %v3096
    %v3306 = vpack.c.b16 %v3116, %v3097
    %v3307 = vpack.c.b16 %v3117, %v3098
    %v3308 = vpack.c.b16 %v3118, %v3099
    %v3309 = vpack.c.b16 %v3119, %v3100
    %3500 = vmatpush.bf16.msra.mxu0 %v3253
    %3501 = vmatpush.bf16.msra.mxu0 %v3234
    %3502 = vmatpush.bf16.msra.mxu0 %v3215
    %3503 = vmatpush.bf16.msra.mxu0 %v3196
    %3504 = vmatpush.bf16.msra.mxu0 %v3177
    %3505 = vmatpush.bf16.msra.mxu0 %v3158
    %3506 = vmatpush.bf16.msra.mxu0 %v3139
    %3507 = vmatpush.bf16.msra.mxu0 %v3120
    %3508 = vmatmul.bf16.gmra.mxu0 %v109
    %v3509 = vpop.f32.mrf.mxu0
    %v3510 = vadd.f32 0.0, %v3509
    %v3511 = vpop.f32.mrf.mxu0
    %3512 = vdwg.mxu0
    %3513 = vmatpush.bf16.msra.mxu0 0
    %3514 = vmatpush.bf16.msra.mxu0 0
    %3515 = vmatpush.bf16.msra.mxu0 0
    %3516 = vmatpush.bf16.msra.mxu0 0
    %3517 = vmatpush.bf16.msra.mxu0 0
    %3518 = vmatpush.bf16.msra.mxu0 0
    %3519 = vmatpush.bf16.msra.mxu0 %v3291
    %3520 = vmatpush.bf16.msra.mxu0 %v3272
    %3521 = vmatmul.bf16.gmra.mxu0 %v233
    %v3522 = vpop.f32.mrf.mxu0
    %v3523 = vadd.f32 %v3510, %v3522
    %v3524 = vpop.f32.mrf.mxu0
    %3525 = vdwg.mxu0
    %3526 = vmatpush.bf16.msra.mxu0 %v3254
    %3527 = vmatpush.bf16.msra.mxu0 %v3235
    %3528 = vmatpush.bf16.msra.mxu0 %v3216
    %3529 = vmatpush.bf16.msra.mxu0 %v3197
    %3530 = vmatpush.bf16.msra.mxu0 %v3178
    %3531 = vmatpush.bf16.msra.mxu0 %v3159
    %3532 = vmatpush.bf16.msra.mxu0 %v3140
    %3533 = vmatpush.bf16.msra.mxu0 %v3121
    %3534 = vmatmul.bf16.gmra.mxu0 %v109
    %v3535 = vpop.f32.mrf.mxu0
    %v3536 = vadd.f32 0.0, %v3535
    %v3537 = vpop.f32.mrf.mxu0
    %3538 = vdwg.mxu0
    %3539 = vmatpush.bf16.msra.mxu0 0
    %3540 = vmatpush.bf16.msra.mxu0 0
    %3541 = vmatpush.bf16.msra.mxu0 0
    %3542 = vmatpush.bf16.msra.mxu0 0
    %3543 = vmatpush.bf16.msra.mxu0 0
    %3544 = vmatpush.bf16.msra.mxu0 0
    %3545 = vmatpush.bf16.msra.mxu0 %v3292
    %3546 = vmatpush.bf16.msra.mxu0 %v3273
    %3547 = vmatmul.bf16.gmra.mxu0 %v233
    %v3548 = vpop.f32.mrf.mxu0
    %v3549 = vadd.f32 %v3536, %v3548
    %v3550 = vpop.f32.mrf.mxu0
    %3551 = vdwg.mxu0
    %3552 = vmatpush.bf16.msra.mxu0 %v3255
    %3553 = vmatpush.bf16.msra.mxu0 %v3236
    %3554 = vmatpush.bf16.msra.mxu0 %v3217
    %3555 = vmatpush.bf16.msra.mxu0 %v3198
    %3556 = vmatpush.bf16.msra.mxu0 %v3179
    %3557 = vmatpush.bf16.msra.mxu0 %v3160
    %3558 = vmatpush.bf16.msra.mxu0 %v3141
    %3559 = vmatpush.bf16.msra.mxu0 %v3122
    %3560 = vmatmul.bf16.gmra.mxu0 %v109
    %v3561 = vpop.f32.mrf.mxu0
    %v3562 = vadd.f32 0.0, %v3561
    %v3563 = vpop.f32.mrf.mxu0
    %3564 = vdwg.mxu0
    %3565 = vmatpush.bf16.msra.mxu0 0
    %3566 = vmatpush.bf16.msra.mxu0 0
    %3567 = vmatpush.bf16.msra.mxu0 0
    %3568 = vmatpush.bf16.msra.mxu0 0
    %3569 = vmatpush.bf16.msra.mxu0 0
    %3570 = vmatpush.bf16.msra.mxu0 0
    %3571 = vmatpush.bf16.msra.mxu0 %v3293
    %3572 = vmatpush.bf16.msra.mxu0 %v3274
    %3573 = vmatmul.bf16.gmra.mxu0 %v233
    %v3574 = vpop.f32.mrf.mxu0
    %v3575 = vadd.f32 %v3562, %v3574
    %v3576 = vpop.f32.mrf.mxu0
    %3577 = vdwg.mxu0
    %3578 = vmatpush.bf16.msra.mxu0 %v3256
    %3579 = vmatpush.bf16.msra.mxu0 %v3237
    %3580 = vmatpush.bf16.msra.mxu0 %v3218
    %3581 = vmatpush.bf16.msra.mxu0 %v3199
    %3582 = vmatpush.bf16.msra.mxu0 %v3180
    %3583 = vmatpush.bf16.msra.mxu0 %v3161
    %3584 = vmatpush.bf16.msra.mxu0 %v3142
    %3585 = vmatpush.bf16.msra.mxu0 %v3123
    %3586 = vmatmul.bf16.gmra.mxu0 %v109
    %v3587 = vpop.f32.mrf.mxu0
    %v3588 = vadd.f32 0.0, %v3587
    %v3589 = vpop.f32.mrf.mxu0
    %3590 = vdwg.mxu0
    %3591 = vmatpush.bf16.msra.mxu0 0
    %3592 = vmatpush.bf16.msra.mxu0 0
    %3593 = vmatpush.bf16.msra.mxu0 0
    %3594 = vmatpush.bf16.msra.mxu0 0
    %3595 = vmatpush.bf16.msra.mxu0 0
    %3596 = vmatpush.bf16.msra.mxu0 0
    %3597 = vmatpush.bf16.msra.mxu0 %v3294
    %3598 = vmatpush.bf16.msra.mxu0 %v3275
    %3599 = vmatmul.bf16.gmra.mxu0 %v233
    %v3600 = vpop.f32.mrf.mxu0
    %v3601 = vadd.f32 %v3588, %v3600
    %v3602 = vpop.f32.mrf.mxu0
    %3603 = vdwg.mxu0
    %3604 = vmatpush.bf16.msra.mxu0 %v3257
    %3605 = vmatpush.bf16.msra.mxu0 %v3238
    %3606 = vmatpush.bf16.msra.mxu0 %v3219
    %3607 = vmatpush.bf16.msra.mxu0 %v3200
    %3608 = vmatpush.bf16.msra.mxu0 %v3181
    %3609 = vmatpush.bf16.msra.mxu0 %v3162
    %3610 = vmatpush.bf16.msra.mxu0 %v3143
    %3611 = vmatpush.bf16.msra.mxu0 %v3124
    %3612 = vmatmul.bf16.gmra.mxu0 %v109
    %v3613 = vpop.f32.mrf.mxu0
    %v3614 = vadd.f32 0.0, %v3613
    %v3615 = vpop.f32.mrf.mxu0
    %3616 = vdwg.mxu0
    %3617 = vmatpush.bf16.msra.mxu0 0
    %3618 = vmatpush.bf16.msra.mxu0 0
    %3619 = vmatpush.bf16.msra.mxu0 0
    %3620 = vmatpush.bf16.msra.mxu0 0
    %3621 = vmatpush.bf16.msra.mxu0 0
    %3622 = vmatpush.bf16.msra.mxu0 0
    %3623 = vmatpush.bf16.msra.mxu0 %v3295
    %3624 = vmatpush.bf16.msra.mxu0 %v3276
    %3625 = vmatmul.bf16.gmra.mxu0 %v233
    %v3626 = vpop.f32.mrf.mxu0
    %v3627 = vadd.f32 %v3614, %v3626
    %v3628 = vpop.f32.mrf.mxu0
    %3629 = vdwg.mxu0
    %3630 = vmatpush.bf16.msra.mxu0 %v3258
    %3631 = vmatpush.bf16.msra.mxu0 %v3239
    %3632 = vmatpush.bf16.msra.mxu0 %v3220
    %3633 = vmatpush.bf16.msra.mxu0 %v3201
    %3634 = vmatpush.bf16.msra.mxu0 %v3182
    %3635 = vmatpush.bf16.msra.mxu0 %v3163
    %3636 = vmatpush.bf16.msra.mxu0 %v3144
    %3637 = vmatpush.bf16.msra.mxu0 %v3125
    %3638 = vmatmul.bf16.gmra.mxu0 %v109
    %v3639 = vpop.f32.mrf.mxu0
    %v3640 = vadd.f32 0.0, %v3639
    %v3641 = vpop.f32.mrf.mxu0
    %3642 = vdwg.mxu0
    %3643 = vmatpush.bf16.msra.mxu0 0
    %3644 = vmatpush.bf16.msra.mxu0 0
    %3645 = vmatpush.bf16.msra.mxu0 0
    %3646 = vmatpush.bf16.msra.mxu0 0
    %3647 = vmatpush.bf16.msra.mxu0 0
    %3648 = vmatpush.bf16.msra.mxu0 0
    %3649 = vmatpush.bf16.msra.mxu0 %v3296
    %3650 = vmatpush.bf16.msra.mxu0 %v3277
    %3651 = vmatmul.bf16.gmra.mxu0 %v233
    %v3652 = vpop.f32.mrf.mxu0
    %v3653 = vadd.f32 %v3640, %v3652
    %v3654 = vpop.f32.mrf.mxu0
    %3655 = vdwg.mxu0
    %3656 = vmatpush.bf16.msra.mxu0 %v3259
    %3657 = vmatpush.bf16.msra.mxu0 %v3240
    %3658 = vmatpush.bf16.msra.mxu0 %v3221
    %3659 = vmatpush.bf16.msra.mxu0 %v3202
    %3660 = vmatpush.bf16.msra.mxu0 %v3183
    %3661 = vmatpush.bf16.msra.mxu0 %v3164
    %3662 = vmatpush.bf16.msra.mxu0 %v3145
    %3663 = vmatpush.bf16.msra.mxu0 %v3126
    %3664 = vmatmul.bf16.gmra.mxu0 %v109
    %v3665 = vpop.f32.mrf.mxu0
    %v3666 = vadd.f32 0.0, %v3665
    %v3667 = vpop.f32.mrf.mxu0
    %3668 = vdwg.mxu0
    %3669 = vmatpush.bf16.msra.mxu0 0
    %3670 = vmatpush.bf16.msra.mxu0 0
    %3671 = vmatpush.bf16.msra.mxu0 0
    %3672 = vmatpush.bf16.msra.mxu0 0
    %3673 = vmatpush.bf16.msra.mxu0 0
    %3674 = vmatpush.bf16.msra.mxu0 0
    %3675 = vmatpush.bf16.msra.mxu0 %v3297
    %3676 = vmatpush.bf16.msra.mxu0 %v3278
    %3677 = vmatmul.bf16.gmra.mxu0 %v233
    %v3678 = vpop.f32.mrf.mxu0
    %v3679 = vadd.f32 %v3666, %v3678
    %v3680 = vpop.f32.mrf.mxu0
    %3681 = vdwg.mxu0
    %3682 = vmatpush.bf16.msra.mxu0 %v3260
    %3683 = vmatpush.bf16.msra.mxu0 %v3241
    %3684 = vmatpush.bf16.msra.mxu0 %v3222
    %3685 = vmatpush.bf16.msra.mxu0 %v3203
    %3686 = vmatpush.bf16.msra.mxu0 %v3184
    %3687 = vmatpush.bf16.msra.mxu0 %v3165
    %3688 = vmatpush.bf16.msra.mxu0 %v3146
    %3689 = vmatpush.bf16.msra.mxu0 %v3127
    %3690 = vmatmul.bf16.gmra.mxu0 %v109
    %v3691 = vpop.f32.mrf.mxu0
    %v3692 = vadd.f32 0.0, %v3691
    %v3693 = vpop.f32.mrf.mxu0
    %3694 = vdwg.mxu0
    %3695 = vmatpush.bf16.msra.mxu0 0
    %3696 = vmatpush.bf16.msra.mxu0 0
    %3697 = vmatpush.bf16.msra.mxu0 0
    %3698 = vmatpush.bf16.msra.mxu0 0
    %3699 = vmatpush.bf16.msra.mxu0 0
    %3700 = vmatpush.bf16.msra.mxu0 0
    %3701 = vmatpush.bf16.msra.mxu0 %v3298
    %3702 = vmatpush.bf16.msra.mxu0 %v3279
    %3703 = vmatmul.bf16.gmra.mxu0 %v233
    %v3704 = vpop.f32.mrf.mxu0
    %v3705 = vadd.f32 %v3692, %v3704
    %v3706 = vpop.f32.mrf.mxu0
    %3707 = vdwg.mxu0
    %3708 = vmatpush.bf16.msra.mxu0 %v3261
    %3709 = vmatpush.bf16.msra.mxu0 %v3242
    %3710 = vmatpush.bf16.msra.mxu0 %v3223
    %3711 = vmatpush.bf16.msra.mxu0 %v3204
    %3712 = vmatpush.bf16.msra.mxu0 %v3185
    %3713 = vmatpush.bf16.msra.mxu0 %v3166
    %3714 = vmatpush.bf16.msra.mxu0 %v3147
    %3715 = vmatpush.bf16.msra.mxu0 %v3128
    %3716 = vmatmul.bf16.gmra.mxu0 %v109
    %v3717 = vpop.f32.mrf.mxu0
    %v3718 = vadd.f32 0.0, %v3717
    %v3719 = vpop.f32.mrf.mxu0
    %3720 = vdwg.mxu0
    %3721 = vmatpush.bf16.msra.mxu0 0
    %3722 = vmatpush.bf16.msra.mxu0 0
    %3723 = vmatpush.bf16.msra.mxu0 0
    %3724 = vmatpush.bf16.msra.mxu0 0
    %3725 = vmatpush.bf16.msra.mxu0 0
    %3726 = vmatpush.bf16.msra.mxu0 0
    %3727 = vmatpush.bf16.msra.mxu0 %v3299
    %3728 = vmatpush.bf16.msra.mxu0 %v3280
    %3729 = vmatmul.bf16.gmra.mxu0 %v233
    %v3730 = vpop.f32.mrf.mxu0
    %v3731 = vadd.f32 %v3718, %v3730
    %v3732 = vpop.f32.mrf.mxu0
    %3733 = vdwg.mxu0
    %3734 = vmatpush.bf16.msra.mxu0 %v3262
    %3735 = vmatpush.bf16.msra.mxu0 %v3243
    %3736 = vmatpush.bf16.msra.mxu0 %v3224
    %3737 = vmatpush.bf16.msra.mxu0 %v3205
    %3738 = vmatpush.bf16.msra.mxu0 %v3186
    %3739 = vmatpush.bf16.msra.mxu0 %v3167
    %3740 = vmatpush.bf16.msra.mxu0 %v3148
    %3741 = vmatpush.bf16.msra.mxu0 %v3129
    %3742 = vmatmul.bf16.gmra.mxu0 %v109
    %v3743 = vpop.f32.mrf.mxu0
    %v3744 = vadd.f32 0.0, %v3743
    %v3745 = vpop.f32.mrf.mxu0
    %3746 = vdwg.mxu0
    %3747 = vmatpush.bf16.msra.mxu0 0
    %3748 = vmatpush.bf16.msra.mxu0 0
    %3749 = vmatpush.bf16.msra.mxu0 0
    %3750 = vmatpush.bf16.msra.mxu0 0
    %3751 = vmatpush.bf16.msra.mxu0 0
    %3752 = vmatpush.bf16.msra.mxu0 0
    %3753 = vmatpush.bf16.msra.mxu0 %v3300
    %3754 = vmatpush.bf16.msra.mxu0 %v3281
    %3755 = vmatmul.bf16.gmra.mxu0 %v233
    %v3756 = vpop.f32.mrf.mxu0
    %v3757 = vadd.f32 %v3744, %v3756
    %v3758 = vpop.f32.mrf.mxu0
    %3759 = vdwg.mxu0
    %3760 = vmatpush.bf16.msra.mxu0 %v3263
    %3761 = vmatpush.bf16.msra.mxu0 %v3244
    %3762 = vmatpush.bf16.msra.mxu0 %v3225
    %3763 = vmatpush.bf16.msra.mxu0 %v3206
    %3764 = vmatpush.bf16.msra.mxu0 %v3187
    %3765 = vmatpush.bf16.msra.mxu0 %v3168
    %3766 = vmatpush.bf16.msra.mxu0 %v3149
    %3767 = vmatpush.bf16.msra.mxu0 %v3130
    %3768 = vmatmul.bf16.gmra.mxu0 %v109
    %v3769 = vpop.f32.mrf.mxu0
    %v3770 = vadd.f32 0.0, %v3769
    %v3771 = vpop.f32.mrf.mxu0
    %3772 = vdwg.mxu0
    %3773 = vmatpush.bf16.msra.mxu0 0
    %3774 = vmatpush.bf16.msra.mxu0 0
    %3775 = vmatpush.bf16.msra.mxu0 0
    %3776 = vmatpush.bf16.msra.mxu0 0
    %3777 = vmatpush.bf16.msra.mxu0 0
    %3778 = vmatpush.bf16.msra.mxu0 0
    %3779 = vmatpush.bf16.msra.mxu0 %v3301
    %3780 = vmatpush.bf16.msra.mxu0 %v3282
    %3781 = vmatmul.bf16.gmra.mxu0 %v233
    %v3782 = vpop.f32.mrf.mxu0
    %v3783 = vadd.f32 %v3770, %v3782
    %v3784 = vpop.f32.mrf.mxu0
    %3785 = vdwg.mxu0
    %3786 = vmatpush.bf16.msra.mxu0 %v3264
    %3787 = vmatpush.bf16.msra.mxu0 %v3245
    %3788 = vmatpush.bf16.msra.mxu0 %v3226
    %3789 = vmatpush.bf16.msra.mxu0 %v3207
    %3790 = vmatpush.bf16.msra.mxu0 %v3188
    %3791 = vmatpush.bf16.msra.mxu0 %v3169
    %3792 = vmatpush.bf16.msra.mxu0 %v3150
    %3793 = vmatpush.bf16.msra.mxu0 %v3131
    %3794 = vmatmul.bf16.gmra.mxu0 %v109
    %v3795 = vpop.f32.mrf.mxu0
    %v3796 = vadd.f32 0.0, %v3795
    %v3797 = vpop.f32.mrf.mxu0
    %3798 = vdwg.mxu0
    %3799 = vmatpush.bf16.msra.mxu0 0
    %3800 = vmatpush.bf16.msra.mxu0 0
    %3801 = vmatpush.bf16.msra.mxu0 0
    %3802 = vmatpush.bf16.msra.mxu0 0
    %3803 = vmatpush.bf16.msra.mxu0 0
    %3804 = vmatpush.bf16.msra.mxu0 0
    %3805 = vmatpush.bf16.msra.mxu0 %v3302
    %3806 = vmatpush.bf16.msra.mxu0 %v3283
    %3807 = vmatmul.bf16.gmra.mxu0 %v233
    %v3808 = vpop.f32.mrf.mxu0
    %v3809 = vadd.f32 %v3796, %v3808
    %v3810 = vpop.f32.mrf.mxu0
    %3811 = vdwg.mxu0
    %3812 = vmatpush.bf16.msra.mxu0 %v3265
    %3813 = vmatpush.bf16.msra.mxu0 %v3246
    %3814 = vmatpush.bf16.msra.mxu0 %v3227
    %3815 = vmatpush.bf16.msra.mxu0 %v3208
    %3816 = vmatpush.bf16.msra.mxu0 %v3189
    %3817 = vmatpush.bf16.msra.mxu0 %v3170
    %3818 = vmatpush.bf16.msra.mxu0 %v3151
    %3819 = vmatpush.bf16.msra.mxu0 %v3132
    %3820 = vmatmul.bf16.gmra.mxu0 %v109
    %v3821 = vpop.f32.mrf.mxu0
    %v3822 = vadd.f32 0.0, %v3821
    %v3823 = vpop.f32.mrf.mxu0
    %3824 = vdwg.mxu0
    %3825 = vmatpush.bf16.msra.mxu0 0
    %3826 = vmatpush.bf16.msra.mxu0 0
    %3827 = vmatpush.bf16.msra.mxu0 0
    %3828 = vmatpush.bf16.msra.mxu0 0
    %3829 = vmatpush.bf16.msra.mxu0 0
    %3830 = vmatpush.bf16.msra.mxu0 0
    %3831 = vmatpush.bf16.msra.mxu0 %v3303
    %3832 = vmatpush.bf16.msra.mxu0 %v3284
    %3833 = vmatmul.bf16.gmra.mxu0 %v233
    %v3834 = vpop.f32.mrf.mxu0
    %v3835 = vadd.f32 %v3822, %v3834
    %v3836 = vpop.f32.mrf.mxu0
    %3837 = vdwg.mxu0
    %3838 = vmatpush.bf16.msra.mxu0 %v3266
    %3839 = vmatpush.bf16.msra.mxu0 %v3247
    %3840 = vmatpush.bf16.msra.mxu0 %v3228
    %3841 = vmatpush.bf16.msra.mxu0 %v3209
    %3842 = vmatpush.bf16.msra.mxu0 %v3190
    %3843 = vmatpush.bf16.msra.mxu0 %v3171
    %3844 = vmatpush.bf16.msra.mxu0 %v3152
    %3845 = vmatpush.bf16.msra.mxu0 %v3133
    %3846 = vmatmul.bf16.gmra.mxu0 %v109
    %v3847 = vpop.f32.mrf.mxu0
    %v3848 = vadd.f32 0.0, %v3847
    %v3849 = vpop.f32.mrf.mxu0
    %3850 = vdwg.mxu0
    %3851 = vmatpush.bf16.msra.mxu0 0
    %3852 = vmatpush.bf16.msra.mxu0 0
    %3853 = vmatpush.bf16.msra.mxu0 0
    %3854 = vmatpush.bf16.msra.mxu0 0
    %3855 = vmatpush.bf16.msra.mxu0 0
    %3856 = vmatpush.bf16.msra.mxu0 0
    %3857 = vmatpush.bf16.msra.mxu0 %v3304
    %3858 = vmatpush.bf16.msra.mxu0 %v3285
    %3859 = vmatmul.bf16.gmra.mxu0 %v233
    %v3860 = vpop.f32.mrf.mxu0
    %v3861 = vadd.f32 %v3848, %v3860
    %v3862 = vpop.f32.mrf.mxu0
    %3863 = vdwg.mxu0
    %3864 = vmatpush.bf16.msra.mxu0 %v3267
    %3865 = vmatpush.bf16.msra.mxu0 %v3248
    %3866 = vmatpush.bf16.msra.mxu0 %v3229
    %3867 = vmatpush.bf16.msra.mxu0 %v3210
    %3868 = vmatpush.bf16.msra.mxu0 %v3191
    %3869 = vmatpush.bf16.msra.mxu0 %v3172
    %3870 = vmatpush.bf16.msra.mxu0 %v3153
    %3871 = vmatpush.bf16.msra.mxu0 %v3134
    %3872 = vmatmul.bf16.gmra.mxu0 %v109
    %v3873 = vpop.f32.mrf.mxu0
    %v3874 = vadd.f32 0.0, %v3873
    %v3875 = vpop.f32.mrf.mxu0
    %3876 = vdwg.mxu0
    %3877 = vmatpush.bf16.msra.mxu0 0
    %3878 = vmatpush.bf16.msra.mxu0 0
    %3879 = vmatpush.bf16.msra.mxu0 0
    %3880 = vmatpush.bf16.msra.mxu0 0
    %3881 = vmatpush.bf16.msra.mxu0 0
    %3882 = vmatpush.bf16.msra.mxu0 0
    %3883 = vmatpush.bf16.msra.mxu0 %v3305
    %3884 = vmatpush.bf16.msra.mxu0 %v3286
    %3885 = vmatmul.bf16.gmra.mxu0 %v233
    %v3886 = vpop.f32.mrf.mxu0
    %v3887 = vadd.f32 %v3874, %v3886
    %v3888 = vpop.f32.mrf.mxu0
    %3889 = vdwg.mxu0
    %3890 = vmatpush.bf16.msra.mxu0 %v3268
    %3891 = vmatpush.bf16.msra.mxu0 %v3249
    %3892 = vmatpush.bf16.msra.mxu0 %v3230
    %3893 = vmatpush.bf16.msra.mxu0 %v3211
    %3894 = vmatpush.bf16.msra.mxu0 %v3192
    %3895 = vmatpush.bf16.msra.mxu0 %v3173
    %3896 = vmatpush.bf16.msra.mxu0 %v3154
    %3897 = vmatpush.bf16.msra.mxu0 %v3135
    %3898 = vmatmul.bf16.gmra.mxu0 %v109
    %v3899 = vpop.f32.mrf.mxu0
    %v3900 = vadd.f32 0.0, %v3899
    %v3901 = vpop.f32.mrf.mxu0
    %3902 = vdwg.mxu0
    %3903 = vmatpush.bf16.msra.mxu0 0
    %3904 = vmatpush.bf16.msra.mxu0 0
    %3905 = vmatpush.bf16.msra.mxu0 0
    %3906 = vmatpush.bf16.msra.mxu0 0
    %3907 = vmatpush.bf16.msra.mxu0 0
    %3908 = vmatpush.bf16.msra.mxu0 0
    %3909 = vmatpush.bf16.msra.mxu0 %v3306
    %3910 = vmatpush.bf16.msra.mxu0 %v3287
    %3911 = vmatmul.bf16.gmra.mxu0 %v233
    %v3912 = vpop.f32.mrf.mxu0
    %v3913 = vadd.f32 %v3900, %v3912
    %v3914 = vpop.f32.mrf.mxu0
    %3915 = vdwg.mxu0
    %3916 = vmatpush.bf16.msra.mxu0 %v3269
    %3917 = vmatpush.bf16.msra.mxu0 %v3250
    %3918 = vmatpush.bf16.msra.mxu0 %v3231
    %3919 = vmatpush.bf16.msra.mxu0 %v3212
    %3920 = vmatpush.bf16.msra.mxu0 %v3193
    %3921 = vmatpush.bf16.msra.mxu0 %v3174
    %3922 = vmatpush.bf16.msra.mxu0 %v3155
    %3923 = vmatpush.bf16.msra.mxu0 %v3136
    %3924 = vmatmul.bf16.gmra.mxu0 %v109
    %v3925 = vpop.f32.mrf.mxu0
    %v3926 = vadd.f32 0.0, %v3925
    %v3927 = vpop.f32.mrf.mxu0
    %3928 = vdwg.mxu0
    %3929 = vmatpush.bf16.msra.mxu0 0
    %3930 = vmatpush.bf16.msra.mxu0 0
    %3931 = vmatpush.bf16.msra.mxu0 0
    %3932 = vmatpush.bf16.msra.mxu0 0
    %3933 = vmatpush.bf16.msra.mxu0 0
    %3934 = vmatpush.bf16.msra.mxu0 0
    %3935 = vmatpush.bf16.msra.mxu0 %v3307
    %3936 = vmatpush.bf16.msra.mxu0 %v3288
    %3937 = vmatmul.bf16.gmra.mxu0 %v233
    %v3938 = vpop.f32.mrf.mxu0
    %v3939 = vadd.f32 %v3926, %v3938
    %v3940 = vpop.f32.mrf.mxu0
    %3941 = vdwg.mxu0
    %3942 = vmatpush.bf16.msra.mxu0 %v3270
    %3943 = vmatpush.bf16.msra.mxu0 %v3251
    %3944 = vmatpush.bf16.msra.mxu0 %v3232
    %3945 = vmatpush.bf16.msra.mxu0 %v3213
    %3946 = vmatpush.bf16.msra.mxu0 %v3194
    %3947 = vmatpush.bf16.msra.mxu0 %v3175
    %3948 = vmatpush.bf16.msra.mxu0 %v3156
    %3949 = vmatpush.bf16.msra.mxu0 %v3137
    %3950 = vmatmul.bf16.gmra.mxu0 %v109
    %v3951 = vpop.f32.mrf.mxu0
    %v3952 = vadd.f32 0.0, %v3951
    %v3953 = vpop.f32.mrf.mxu0
    %3954 = vdwg.mxu0
    %3955 = vmatpush.bf16.msra.mxu0 0
    %3956 = vmatpush.bf16.msra.mxu0 0
    %3957 = vmatpush.bf16.msra.mxu0 0
    %3958 = vmatpush.bf16.msra.mxu0 0
    %3959 = vmatpush.bf16.msra.mxu0 0
    %3960 = vmatpush.bf16.msra.mxu0 0
    %3961 = vmatpush.bf16.msra.mxu0 %v3308
    %3962 = vmatpush.bf16.msra.mxu0 %v3289
    %3963 = vmatmul.bf16.gmra.mxu0 %v233
    %v3964 = vpop.f32.mrf.mxu0
    %v3965 = vadd.f32 %v3952, %v3964
    %v3966 = vpop.f32.mrf.mxu0
    %3967 = vdwg.mxu0
    %3968 = vmatpush.bf16.msra.mxu0 %v3271
    %3969 = vmatpush.bf16.msra.mxu0 %v3252
    %3970 = vmatpush.bf16.msra.mxu0 %v3233
    %3971 = vmatpush.bf16.msra.mxu0 %v3214
    %3972 = vmatpush.bf16.msra.mxu0 %v3195
    %3973 = vmatpush.bf16.msra.mxu0 %v3176
    %3974 = vmatpush.bf16.msra.mxu0 %v3157
    %3975 = vmatpush.bf16.msra.mxu0 %v3138
    %3976 = vmatmul.bf16.gmra.mxu0 %v109
    %v3977 = vpop.f32.mrf.mxu0
    %v3978 = vadd.f32 0.0, %v3977
    %v3979 = vpop.f32.mrf.mxu0
    %3980 = vdwg.mxu0
    %3981 = vmatpush.bf16.msra.mxu0 0
    %3982 = vmatpush.bf16.msra.mxu0 0
    %3983 = vmatpush.bf16.msra.mxu0 0
    %3984 = vmatpush.bf16.msra.mxu0 0
    %3985 = vmatpush.bf16.msra.mxu0 0
    %3986 = vmatpush.bf16.msra.mxu0 0
    %3987 = vmatpush.bf16.msra.mxu0 %v3309
    %3988 = vmatpush.bf16.msra.mxu0 %v3290
    %3989 = vmatmul.bf16.gmra.mxu0 %v233
    %v3990 = vpop.f32.mrf.mxu0
    %v3991 = vadd.f32 %v3978, %v3990
    %v3992 = vpop.f32.mrf.mxu0
    %3993 = vdwg.mxu0
    %v3994 = vmax.f32 %v3523, %v3549
    %v3995 = vmax.f32 %v3994, %v3575
    %v3996 = vmax.f32 %v3995, %v3601
    %v3997 = vmax.f32 %v3996, %v3627
    %v3998 = vmax.f32 %v3997, %v3653
    %v3999 = vmax.f32 %v3998, %v3679
    %v4000 = vmax.f32 %v3999, %v3705
    %v4001 = vmax.f32 %v4000, %v3731
    %v4002 = vmax.f32 %v4001, %v3757
    %v4003 = vmax.f32 %v4002, %v3783
    %v4004 = vmax.f32 %v4003, %v3809
    %v4005 = vmax.f32 %v4004, %v3835
    %v4006 = vmax.f32 %v4005, %v3861
    %v4007 = vmax.f32 %v4006, %v3887
    %v4008 = vmax.f32 %v4007, %v3913
    %v4009 = vmax.f32 %v4008, %v3939
    %v4010 = vmax.f32 %v4009, %v3965
    %v4011 = vmax.f32 %v4010, %v3991
    %4013 = vrot.lane.b32.xlu0 %v4011, 64
    %v4014 = vpop.permute.xlu0 %4013
    %v4016 = vmax.f32 %v4011, %v4014
    %4018 = vrot.lane.b32.xlu0 %v4016, 96
    %v4019 = vpop.permute.xlu0 %4018
    %v4021 = vmax.f32 %v4016, %v4019
    %4023 = vrot.lane.b32.xlu0 %v4021, 112
    %v4024 = vpop.permute.xlu0 %4023
    %v4026 = vmax.f32 %v4021, %v4024
    %v4027 = vld [vmem:[%s8] sm:$0x1]
    %v4029 = vperm.slane %v4027, 0
    %v4031 = vadd.f32 %v4026, %v4029
    %v4032 = vmax.f32 %v4031, 0.0
    %v4033 = vld [vmem:[%s9 + $0x30] sm:$0xff]
    %v4034 = vld [vmem:[%s9 + $0x38] sm:$0xff]
    %v4036 = vsel %vm1029, %v4032, 0
    %4038 = vmatpush.msra.mxu0 0.0
    %4039 = vmatpush.msra.mxu0 0.0
    %4040 = vmatpush.msra.mxu0 0.0
    %4041 = vmatpush.msra.mxu0 0.0
    %4042 = vmatpush.msra.mxu0 0.0
    %4043 = vmatpush.msra.mxu0 0.0
    %4044 = vmatpush.msra.mxu0 0.0
    %4045 = vmatpush.msra.mxu0 0.0
    %4046 = vmatpush.msra.mxu0 0.0
    %4047 = vmatpush.msra.mxu0 0.0
    %4048 = vmatpush.msra.mxu0 0.0
    %4049 = vmatpush.msra.mxu0 0.0
    %4050 = vmatpush.msra.mxu0 0.0
    %4051 = vmatpush.msra.mxu0 0.0
    %4052 = vmatpush.msra.mxu0 %v4034
    %4053 = vmatpush.msra.mxu0 %v4033
    %4054 = vmatmul.f32.gmra.mxu0 %v4036
    %v4055 = vpop.f32.mrf.mxu0
    %v4056 = vadd.f32 0.0, %v4055
    %4057 = vdwg.mxu0
    %v4058 = vadd.f32 %v2339, %v4056
    %v4059 = vld [vmem:[%s10] sm:$0x1]
    %v4061 = vperm.slane %v4059, 0
    %v4063 = vadd.f32 %v4058, %v4061
    %v4064 = vmul.f32 %v4063, %v4063
    %vm4065 = vcmask 254976
    %v4066 = vsel %vm4065, %v4064, 0.0
    %4067 = vadd.xlane.f32.xlu0 %v4066
    %v4068 = vpop.xlane.xlu0 %4067
    %v4069 = vmax.f32 %v4068, 1e-24
    %v4070 = vrsqrt.pop %v4069
    %v4071 = vmul.f32 %v4070, %v4069
    %v4072 = vmul.f32 %v4071, %v4070
    %v4073 = vmul.f32 0.5, %v4072
    %v4074 = vsub.f32 1.5, %v4073
    %v4075 = vmul.f32 %v4070, %v4074
    %vm4076 = vweird.f32 %v4069
    %vm4077 = vweird.f32 %v4070
    %vm4078 = vmor %vm4076, %vm4077
    %v4079 = vsel %vm4078, %v4070, %v4075
    %v4080 = vmul.f32 %v4063, %v4079
    %4081 = vst.msk [vmem:[%s11] sm:$0x3] %vm4065, %v4080
    // Predicated region
    $region62: #{ts_encoder_forward.1} parent=1 // pred_check
      _
    $region63: #{ts_encoder_forward.1} parent=1 // pred_check_branch
      %4083 = sbr.rel (0) target = $region65
    $region64: #{ts_encoder_forward.1} parent=1 // pred_region
      _
    $region65: #{ts_encoder_forward.1} parent=1 // pred_fallthru
      _
    // Predicated region
    $region66: #{ts_encoder_forward.1} parent=1 // pred_check
      _
    $region67: #{ts_encoder_forward.1} parent=1 // pred_check_branch
      %4085 = sbr.rel (0) target = $region69
    $region68: #{ts_encoder_forward.1} parent=1 // pred_region
      _
    $region69: #{ts_encoder_forward.1} parent=1 // pred_fallthru
      _
    %4086 = vsyncpa [#allocation3], 1
    %4087 = vsyncpa [#allocation5], 1
    %4088 = vsyncpa [#allocation8], 1

</llo_original>
